<compile_context>
chip_gen: v6e
topology: v6e:2x2x1
jax: 0.10.0
libtpu: 0.0.40
codegen_flags: <defaults>
</compile_context>

<pallas_src>
import functools
import math

import jax
import jax.numpy as jnp
from jax.experimental import pallas as pl
from jax.experimental.pallas import tpu as pltpu


def _round_up(x, m):
    return (x + m - 1) // m * m


def _siren_fused_kernel(*refs, num_layers, outermost_linear):
    # refs = (x_ref, w0, b0, w1, b1, ..., w_{L-1}, b_{L-1}, out_ref)
    x_ref = refs[0]
    out_ref = refs[-1]
    wb = refs[1:-1]

    h = x_ref[...]                                   # (in_f, tm)  feature-major
    for layer in range(num_layers):
        w = wb[2 * layer][...]                       # (out_l, in_l) nn.Linear layout
        b = wb[2 * layer + 1][...]                   # (out_l, 1)
        # omega is already folded into (w, b) for every sine layer.
        h = jnp.dot(w, h, preferred_element_type=jnp.float32,
                    precision=jax.lax.Precision.HIGHEST) + b
        if not (outermost_linear and layer == num_layers - 1):
            h = jnp.sin(h)
    out_ref[...] = h.astype(out_ref.dtype)


def siren_forward(x, params, *, omega=30.0, outermost_linear=False, tm=8192):
    """Fused SIREN forward. Returns {'model_out': (N, out_f), 'model_in': x}.

    x:      (N, in_features)
    params: list of (W, b) with W in PyTorch nn.Linear layout (out_f, in_f),
            b of shape (out_f,).
    """
    model_in = x
    n, in_f = x.shape
    num_layers = len(params)
    out_f = params[-1][0].shape[0]

    # Feature-major (in_f, N) input: lane-dense in VMEM (no 16x lane padding of
    # a (tm, 3) block) and the first layer becomes a plain W @ x with no
    # in-kernel XLU transpose.
    # TODO(synk): if the caller can produce coordinates feature-major upstream,
    # pass them directly and drop this (cheap) transpose.
    xf = x.astype(jnp.float32).T                     # (in_f, N)

    # Pad the batch only to a lane multiple (128); the grid uses a partial last
    # tile rather than padding up to a full tile's worth of wasted work.
    n_128 = _round_up(n, 128)
    if n_128 != n:
        xf = jnp.pad(xf, ((0, 0), (0, n_128 - n)))

    # Tile selection: as large as requested (amortizes the ~0.35us/grid-step
    # pipeline overhead), lane-aligned, but capped so the grid has >= 2 steps
    # whenever the batch allows it so v7x's two TensorCores both get work.
    tm_eff = _round_up(min(tm, n_128), 128)
    two_step_cap = _round_up(pl.cdiv(n_128, 2), 128)
    tm_eff = max(128, min(tm_eff, two_step_cap))
    grid = (pl.cdiv(n_128, tm_eff),)

    # Fold omega into W/b of every layer whose output passes through sin
    # (skip the final layer when outermost_linear=True) — removes the per-tile
    # `omega * h` VALU pass in the kernel.
    flat_wb = []
    in_specs = [pl.BlockSpec((in_f, tm_eff), lambda i: (0, i))]
    for li, (w, b) in enumerate(params):
        o, fi = w.shape
        scale = 1.0 if (outermost_linear and li == num_layers - 1) else float(omega)
        flat_wb.append(w.astype(jnp.float32) * scale)
        flat_wb.append((b.astype(jnp.float32) * scale).reshape(o, 1))
        # Constant index maps -> weight/bias tiles stay VMEM-resident across
        # batch tiles (no re-fetch).
        in_specs.append(pl.BlockSpec((o, fi), lambda i: (0, 0)))
        in_specs.append(pl.BlockSpec((o, 1), lambda i: (0, 0)))

    # Advisory cost estimate so XLA does not serialize around the tiny kernel.
    flops = 0
    transcendentals = 0
    weight_bytes = 0
    for li, (w, b) in enumerate(params):
        o, fi = w.shape
        flops += 2 * n_128 * o * fi + n_128 * o
        if not (outermost_linear and li == num_layers - 1):
            transcendentals += n_128 * o
        weight_bytes += 4 * (int(w.size) + int(b.size))
    cost = pl.CostEstimate(
        flops=int(flops),
        transcendentals=int(transcendentals),
        bytes_accessed=int(4 * n_128 * (in_f + out_f) + weight_bytes),
    )

    kernel = functools.partial(
        _siren_fused_kernel,
        num_layers=num_layers,
        outermost_linear=bool(outermost_linear),
    )

    out_t = pl.pallas_call(
        kernel,
        out_shape=jax.ShapeDtypeStruct((out_f, n_128), jnp.float32),
        grid_spec=pltpu.PrefetchScalarGridSpec(
            num_scalar_prefetch=0,
            grid=grid,
            in_specs=in_specs,
            out_specs=pl.BlockSpec((out_f, tm_eff), lambda i: (0, i)),
        ),
        compiler_params=pltpu.CompilerParams(
            dimension_semantics=("parallel",),
            # Feature-major footprint at tm=8192 is only a few MiB; 32 MiB is
            # safe on v5e (16 MiB default scope), v6e, and v7x (64 MiB physical).
            vmem_limit_bytes=32 * 1024 * 1024,
        ),
        cost_estimate=cost,
    )(xf, *flat_wb)

    # Lane-dense (out_f, n_128) result -> (N, out_f).
    out = out_t[:, :n].T
    return {"model_out": out, "model_in": model_in}


def init_siren_params(key, in_features, hidden_features, hidden_layers,
                      out_features, outermost_linear):
    """Parameters matching the PyTorch module's shapes/init.

    W in nn.Linear layout (out_f, in_f); uniform(-1/sqrt(fan_in), 1/sqrt(fan_in))
    (PyTorch default init) for both W and b.
    """
    del outermost_linear  # layer count/shapes are identical either way
    dims = ([in_features] + [hidden_features] * (hidden_layers + 1)
            + [out_features])
    params = []
    for fan_in, fan_out in zip(dims[:-1], dims[1:]):
        key, kw, kb = jax.random.split(key, 3)
        bound = 1.0 / math.sqrt(fan_in)
        w = jax.random.uniform(kw, (fan_out, fan_in), jnp.float32, -bound, bound)
        b = jax.random.uniform(kb, (fan_out,), jnp.float32, -bound, bound)
        params.append((w, b))
    return params


def siren_reference(x, params, *, omega, outermost_linear):
    """Direct transcription of the PyTorch module (x @ W.T + b, sin(omega * .))."""
    h = x.astype(jnp.float32)
    for li, (w, b) in enumerate(params):
        y = jnp.dot(h, w.T, precision=jax.lax.Precision.HIGHEST) + b
        if not (li == len(params) - 1 and outermost_linear):
            y = jnp.sin(omega * y)
        h = y
    return h


if __name__ == "__main__":
    in_f, hid, nhid = 3, 32, 2
    key = jax.random.PRNGKey(0)

    # --- Test 1: module-default omega=30, final layer linear, batch NOT a
    #     multiple of 128 (exercises pad + partial-last-tile path, 2-step grid). ---
    key, kx1, kp1 = jax.random.split(key, 3)
    batch1, out_f1, omega1 = 300, 1, 30.0
    x1 = jax.random.uniform(kx1, (batch1, in_f), jnp.float32, -1.0, 1.0)
    params1 = init_siren_params(kp1, in_f, hid, nhid, out_f1, True)
    out1 = siren_forward(x1, params1, omega=omega1, outermost_linear=True)
    jax.block_until_ready(out1["model_out"])
    ref1 = siren_reference(x1, params1, omega=omega1, outermost_linear=True)
    assert out1["model_out"].shape == (batch1, out_f1)
    assert out1["model_in"].shape == (batch1, in_f)
    # omega=30 SIREN amplifies any f32 rounding difference by ~omega*||W|| per
    # sine layer, so a few 1e-4..1e-3 of kernel-vs-XLA drift at the output is
    # expected even with both sides in faithful f32.  2e-2 still catches any
    # real wiring bug (wrong layer / bias / omega scaling gives O(1) errors).
    err1 = float(jnp.max(jnp.abs(out1["model_out"] - ref1)))
    assert err1 < 2e-2, err1

    # --- Test 2: multi-tile grid (5 steps), sine output layer, out_features=2,
    #     small omega (non-chaotic regime) so a tight tolerance exactly checks
    #     the wiring, including the omega folding into W/b. ---
    key, kx2, kp2 = jax.random.split(key, 3)
    batch2, out_f2, omega2 = 2560, 2, 0.5
    x2 = jax.random.uniform(kx2, (batch2, in_f), jnp.float32, -1.0, 1.0)
    params2 = init_siren_params(kp2, in_f, hid, nhid, out_f2, False)
    out2 = siren_forward(x2, params2, omega=omega2, outermost_linear=False,
                         tm=512)
    jax.block_until_ready(out2["model_out"])
    ref2 = siren_reference(x2, params2, omega=omega2, outermost_linear=False)
    assert out2["model_out"].shape == (batch2, out_f2)
    err2 = float(jnp.max(jnp.abs(out2["model_out"] - ref2)))
    assert err2 < 1e-4, err2

    print("KERNEL_OK")
</pallas_src>

<mosaic_0001>
module attributes {stable_mosaic.version = 11 : i64} {
  func.func @_siren_fused_kernel(%arg0: i32, %arg1: memref<3x256xf32, #tpu.memory_space<vmem>>, %arg2: memref<32x3xf32, #tpu.memory_space<vmem>>, %arg3: memref<32x1xf32, #tpu.memory_space<vmem>>, %arg4: memref<32x32xf32, #tpu.memory_space<vmem>>, %arg5: memref<32x1xf32, #tpu.memory_space<vmem>>, %arg6: memref<32x32xf32, #tpu.memory_space<vmem>>, %arg7: memref<32x1xf32, #tpu.memory_space<vmem>>, %arg8: memref<1x32xf32, #tpu.memory_space<vmem>>, %arg9: memref<1x1xf32, #tpu.memory_space<vmem>>, %arg10: memref<1x256xf32, #tpu.memory_space<vmem>>) attributes {dimension_semantics = [#tpu.dimension_semantics<parallel>], iteration_bounds = array<i64: 2>, scalar_prefetch = 0 : i64, scratch_operands = 0 : i64, tpu.core_type = #tpu.core_type<tc>, window_params = [{transform_indices = @transform_0, window_bounds = array<i64: 3, 256>}, {pipeline_mode = #tpu.pipeline_mode<synchronous>, transform_indices = @transform_1, window_bounds = array<i64: 32, 3>}, {pipeline_mode = #tpu.pipeline_mode<synchronous>, transform_indices = @transform_2, window_bounds = array<i64: 32, 1>}, {pipeline_mode = #tpu.pipeline_mode<synchronous>, transform_indices = @transform_3, window_bounds = array<i64: 32, 32>}, {pipeline_mode = #tpu.pipeline_mode<synchronous>, transform_indices = @transform_4, window_bounds = array<i64: 32, 1>}, {pipeline_mode = #tpu.pipeline_mode<synchronous>, transform_indices = @transform_5, window_bounds = array<i64: 32, 32>}, {pipeline_mode = #tpu.pipeline_mode<synchronous>, transform_indices = @transform_6, window_bounds = array<i64: 32, 1>}, {pipeline_mode = #tpu.pipeline_mode<synchronous>, transform_indices = @transform_7, window_bounds = array<i64: 1, 32>}, {pipeline_mode = #tpu.pipeline_mode<synchronous>, transform_indices = @transform_8, window_bounds = array<i64: 1, 1>}, {transform_indices = @transform_9, window_bounds = array<i64: 1, 256>}]} {
    %c0 = arith.constant 0 : index
    %c0_0 = arith.constant 0 : index
    %0 = vector.load %arg1[%c0, %c0_0] : memref<3x256xf32, #tpu.memory_space<vmem>>, vector<3x256xf32>
    %c0_1 = arith.constant 0 : index
    %c0_2 = arith.constant 0 : index
    %1 = vector.load %arg2[%c0_1, %c0_2] : memref<32x3xf32, #tpu.memory_space<vmem>>, vector<32x3xf32>
    %c0_3 = arith.constant 0 : index
    %c0_4 = arith.constant 0 : index
    %2 = vector.load %arg3[%c0_3, %c0_4] : memref<32x1xf32, #tpu.memory_space<vmem>>, vector<32x1xf32>
    %cst = arith.constant dense<0.000000e+00> : vector<32x256xf32>
    %3 = tpu.matmul %1, %0, %cst {dimension_numbers = #tpu.dot_dimension_numbers<[1], [0], [0], [1], [0, 0, 1, 1], [], []>, precision = #tpu.contract_precision<fp32>} : vector<32x3xf32>, vector<3x256xf32>, vector<32x256xf32> -> vector<32x256xf32>
    %4 = vector.broadcast %2 : vector<32x1xf32> to vector<32x256xf32>
    %5 = arith.addf %3, %4 : vector<32x256xf32>
    %6 = math.sin %5 : vector<32x256xf32>
    %c0_5 = arith.constant 0 : index
    %c0_6 = arith.constant 0 : index
    %7 = vector.load %arg4[%c0_5, %c0_6] : memref<32x32xf32, #tpu.memory_space<vmem>>, vector<32x32xf32>
    %c0_7 = arith.constant 0 : index
    %c0_8 = arith.constant 0 : index
    %8 = vector.load %arg5[%c0_7, %c0_8] : memref<32x1xf32, #tpu.memory_space<vmem>>, vector<32x1xf32>
    %cst_9 = arith.constant dense<0.000000e+00> : vector<32x256xf32>
    %9 = tpu.matmul %7, %6, %cst_9 {dimension_numbers = #tpu.dot_dimension_numbers<[1], [0], [0], [1], [0, 0, 1, 1], [], []>, precision = #tpu.contract_precision<fp32>} : vector<32x32xf32>, vector<32x256xf32>, vector<32x256xf32> -> vector<32x256xf32>
    %10 = vector.broadcast %8 : vector<32x1xf32> to vector<32x256xf32>
    %11 = arith.addf %9, %10 : vector<32x256xf32>
    %12 = math.sin %11 : vector<32x256xf32>
    %c0_10 = arith.constant 0 : index
    %c0_11 = arith.constant 0 : index
    %13 = vector.load %arg6[%c0_10, %c0_11] : memref<32x32xf32, #tpu.memory_space<vmem>>, vector<32x32xf32>
    %c0_12 = arith.constant 0 : index
    %c0_13 = arith.constant 0 : index
    %14 = vector.load %arg7[%c0_12, %c0_13] : memref<32x1xf32, #tpu.memory_space<vmem>>, vector<32x1xf32>
    %cst_14 = arith.constant dense<0.000000e+00> : vector<32x256xf32>
    %15 = tpu.matmul %13, %12, %cst_14 {dimension_numbers = #tpu.dot_dimension_numbers<[1], [0], [0], [1], [0, 0, 1, 1], [], []>, precision = #tpu.contract_precision<fp32>} : vector<32x32xf32>, vector<32x256xf32>, vector<32x256xf32> -> vector<32x256xf32>
    %16 = vector.broadcast %14 : vector<32x1xf32> to vector<32x256xf32>
    %17 = arith.addf %15, %16 : vector<32x256xf32>
    %18 = math.sin %17 : vector<32x256xf32>
    %c0_15 = arith.constant 0 : index
    %c0_16 = arith.constant 0 : index
    %19 = vector.load %arg8[%c0_15, %c0_16] : memref<1x32xf32, #tpu.memory_space<vmem>>, vector<1x32xf32>
    %c0_17 = arith.constant 0 : index
    %c0_18 = arith.constant 0 : index
    %20 = vector.load %arg9[%c0_17, %c0_18] : memref<1x1xf32, #tpu.memory_space<vmem>>, vector<1x1xf32>
    %cst_19 = arith.constant dense<0.000000e+00> : vector<1x256xf32>
    %21 = tpu.matmul %19, %18, %cst_19 {dimension_numbers = #tpu.dot_dimension_numbers<[1], [0], [0], [1], [0, 0, 1, 1], [], []>, precision = #tpu.contract_precision<fp32>} : vector<1x32xf32>, vector<32x256xf32>, vector<1x256xf32> -> vector<1x256xf32>
    %22 = vector.broadcast %20 : vector<1x1xf32> to vector<1x256xf32>
    %23 = arith.addf %21, %22 : vector<1x256xf32>
    %c0_20 = arith.constant 0 : index
    %c0_21 = arith.constant 0 : index
    %24 = vector.load %arg10[%c0_20, %c0_21] : memref<1x256xf32, #tpu.memory_space<vmem>>, vector<1x256xf32>
    tpu.vector_store %arg10[%c0_20, %c0_21], %23 {strides = array<i32>} : memref<1x256xf32, #tpu.memory_space<vmem>>, vector<1x256xf32>,
    return
  }
  func.func @transform_0(%arg0: i32) -> (i32, i32) {
    %c0_i32 = arith.constant 0 : i32
    %c0_i32_0 = arith.constant 0 : i32
    return %c0_i32, %arg0 : i32, i32
  }
  func.func @transform_1(%arg0: i32) -> (i32, i32) {
    %c0_i32 = arith.constant 0 : i32
    %c0_i32_0 = arith.constant 0 : i32
    %c0_i32_1 = arith.constant 0 : i32
    return %c0_i32, %c0_i32_0 : i32, i32
  }
  func.func @transform_2(%arg0: i32) -> (i32, i32) {
    %c0_i32 = arith.constant 0 : i32
    %c0_i32_0 = arith.constant 0 : i32
    %c0_i32_1 = arith.constant 0 : i32
    return %c0_i32, %c0_i32_0 : i32, i32
  }
  func.func @transform_3(%arg0: i32) -> (i32, i32) {
    %c0_i32 = arith.constant 0 : i32
    %c0_i32_0 = arith.constant 0 : i32
    %c0_i32_1 = arith.constant 0 : i32
    return %c0_i32, %c0_i32_0 : i32, i32
  }
  func.func @transform_4(%arg0: i32) -> (i32, i32) {
    %c0_i32 = arith.constant 0 : i32
    %c0_i32_0 = arith.constant 0 : i32
    %c0_i32_1 = arith.constant 0 : i32
    return %c0_i32, %c0_i32_0 : i32, i32
  }
  func.func @transform_5(%arg0: i32) -> (i32, i32) {
    %c0_i32 = arith.constant 0 : i32
    %c0_i32_0 = arith.constant 0 : i32
    %c0_i32_1 = arith.constant 0 : i32
    return %c0_i32, %c0_i32_0 : i32, i32
  }
  func.func @transform_6(%arg0: i32) -> (i32, i32) {
    %c0_i32 = arith.constant 0 : i32
    %c0_i32_0 = arith.constant 0 : i32
    %c0_i32_1 = arith.constant 0 : i32
    return %c0_i32, %c0_i32_0 : i32, i32
  }
  func.func @transform_7(%arg0: i32) -> (i32, i32) {
    %c0_i32 = arith.constant 0 : i32
    %c0_i32_0 = arith.constant 0 : i32
    %c0_i32_1 = arith.constant 0 : i32
    return %c0_i32, %c0_i32_0 : i32, i32
  }
  func.func @transform_8(%arg0: i32) -> (i32, i32) {
    %c0_i32 = arith.constant 0 : i32
    %c0_i32_0 = arith.constant 0 : i32
    %c0_i32_1 = arith.constant 0 : i32
    return %c0_i32, %c0_i32_0 : i32, i32
  }
  func.func @transform_9(%arg0: i32) -> (i32, i32) {
    %c0_i32 = arith.constant 0 : i32
    %c0_i32_0 = arith.constant 0 : i32
    return %c0_i32, %arg0 : i32, i32
  }
}

</mosaic_0001>

<llo_original>
// kernel: tpu_custom_call.1
$region0: #{tpu_custom_call.1}
  #allocation0 [shape = 'u32[]', space=smem, size = 0x4, offset = 0x4, fixed_abs, tag = 'smem constant byte address 0x4 - core index']
  #allocation1 [shape = 'u32[144,128]{1,0:T(1,128)}', space=vmem, size = 0x12000, scoped, tag = 'internal scratch']
  #allocation2 [shape = 'f32[1,1]{1,0:T(1,128)S(1)}', space=vmem, size = 0x200, scoped, tag = 'scoped memory for tpu_custom_call.1']
  %s0 = inlined_call_operand.vmem [shape: f32[3,384], index: 0, kind: input, shape index: {}]
  %s1 = inlined_call_operand.vmem [shape: f32[32,3], index: 1, kind: input, shape index: {}]
  %s2 = inlined_call_operand.vmem [shape: f32[32,1], index: 2, kind: input, shape index: {}]
  %s3 = inlined_call_operand.vmem [shape: f32[32,32], index: 3, kind: input, shape index: {}]
  %s4 = inlined_call_operand.vmem [shape: f32[32,1], index: 4, kind: input, shape index: {}]
  %s5 = inlined_call_operand.vmem [shape: f32[32,32], index: 5, kind: input, shape index: {}]
  %s6 = inlined_call_operand.vmem [shape: f32[32,1], index: 6, kind: input, shape index: {}]
  %s7 = inlined_call_operand.vmem [shape: f32[1,32], index: 7, kind: input, shape index: {}]
  %s8 = inlined_call_operand.<no memory space> [shape: f32[1,1], index: 8, kind: input, shape index: {}]
  %s9 = inlined_call_operand.hbm [shape: f32[1,384], index: 9, kind: output, shape index: {}]
  %s10 = sld [smem:[#allocation0]]
  $region69: #{tpu_custom_call.1} parent=0
    _
  %s12 = ssub.s32 1, %s10
  %s13 = scalar_select 0, %s12, %s10
  %v14 = vstv %s8
  %15 = vst [vmem:[#allocation2] sm:$0x1] %v14
  $region1: #{tpu_custom_call.1} parent=0
    #allocation3 [shape = 'u8[2048]{0}', space=vmem, size = 0x800, scoped, tag = 'output window, operand 0']
    #allocation4 [shape = 's32[2]{0}', space=sflag, size = 0x8, scoped, tag = 'scoped memory for tpu_custom_call.1']
    %16 = vsyncpa [#allocation4], 0
    %s17 = scalar_lea.sflag [#allocation4], 1
    %18 = vsyncpa %s17, 0
    loop: start=0, step=1, limit=4
    $region2: #{tpu_custom_call.1} parent=1 // loop_pre_header
      _
    $region3: #{tpu_custom_call.1} parent=1 // loop_header
      %s20 = sphi 0, %s24
      %p21 = scmp.ge.s32.totalorder %s20, 4
      %s30 = sphi 0, %s32
      %s33 = sphi 0, %s30
      %s34 = sphi 0, %s33
      %s50 = sphi 0, %s34
      %s54 = sphi 0, %s54
      %s56 = sphi 0, %s54
      %s57 = sphi 0, %s56
      %s71 = sphi 0, %s57
      %s75 = sphi 0, %s75
      %s77 = sphi 0, %s75
      %s78 = sphi 0, %s77
      %s92 = sphi 0, %s78
      %s96 = sphi 0, %s96
      %s98 = sphi 0, %s96
      %s99 = sphi 0, %s98
      %s113 = sphi 0, %s99
      %s117 = sphi 0, %s117
      %s119 = sphi 0, %s117
      %s120 = sphi 0, %s119
      %s134 = sphi 0, %s120
      %s138 = sphi 0, %s138
      %s140 = sphi 0, %s138
      %s141 = sphi 0, %s140
      %s155 = sphi 0, %s141
      %s159 = sphi 0, %s159
      %s161 = sphi 0, %s159
      %s162 = sphi 0, %s161
      %s176 = sphi 0, %s162
      %s180 = sphi 0, %s180
      %s182 = sphi 0, %s180
      %s183 = sphi 0, %s182
      %s197 = sphi 0, %s183
      %s201 = sphi 0, %s201
      %s203 = sphi 0, %s201
      %s204 = sphi 0, %s203
      %s218 = sphi 0, %s204
      %s224 = sphi 0, %s226
      %s227 = sphi 0, %s224
      %s228 = sphi 0, %s227
      %s244 = sphi 0, %s228
    $region4: #{tpu_custom_call.1} parent=1 // loop_header_branch
      %23 = sbr.rel (%p21) target = $region8
    $region5: #{tpu_custom_call.1} parent=1 // loop_body
      %s25 = ssub.s32 %s20, 1
      %s26 = ssub.s32 %s20, 2
      %s27 = sadd.s32 %s20, 1
      %s28 = ssub.s32 %s20, %s27
      %p29 = scmp.eq.s32.totalorder %s28, 0
      %s31 = sadd.s32 %s30, 1
      %s32 = scalar_select %p29, %s30, %s31
      %p35 = pneg %p29
      %p36 = scmp.eq.s32.totalorder %s20, 1
      %p37 = por %p35, %p36
      %p38 = scmp.ne.s32.totalorder %s30, %s33
      %p39 = scmp.eq.s32.totalorder %s20, 0
      %p40 = por %p38, %p39
      %p41 = scmp.ne.s32.totalorder %s30, %s33
      %p42 = scmp.eq.s32.totalorder %s25, 1
      %p43 = por %p41, %p42
      %p44 = scmp.ne.s32.totalorder %s33, %s34
      %p45 = scmp.eq.s32.totalorder %s25, 0
      %p46 = por %p44, %p45
      %p47 = scmp.ne.s32.totalorder %s33, %s34
      %p48 = scmp.eq.s32.totalorder %s26, 1
      %p49 = por %p47, %p48
      %p51 = scmp.ne.s32.totalorder %s34, %s50
      %p52 = scmp.eq.s32.totalorder %s26, 0
      %p53 = por %p51, %p52
      %s55 = sadd.s32 %s54, 1
      %p58 = scmp.eq.s32.totalorder %s20, 1
      %p59 = scmp.ne.s32.totalorder %s54, %s56
      %p60 = scmp.eq.s32.totalorder %s20, 0
      %p61 = por %p59, %p60
      %p62 = scmp.ne.s32.totalorder %s54, %s56
      %p63 = scmp.eq.s32.totalorder %s25, 1
      %p64 = por %p62, %p63
      %p65 = scmp.ne.s32.totalorder %s56, %s57
      %p66 = scmp.eq.s32.totalorder %s25, 0
      %p67 = por %p65, %p66
      %p68 = scmp.ne.s32.totalorder %s56, %s57
      %p69 = scmp.eq.s32.totalorder %s26, 1
      %p70 = por %p68, %p69
      %p72 = scmp.ne.s32.totalorder %s57, %s71
      %p73 = scmp.eq.s32.totalorder %s26, 0
      %p74 = por %p72, %p73
      %s76 = sadd.s32 %s75, 1
      %p79 = scmp.eq.s32.totalorder %s20, 1
      %p80 = scmp.ne.s32.totalorder %s75, %s77
      %p81 = scmp.eq.s32.totalorder %s20, 0
      %p82 = por %p80, %p81
      %p83 = scmp.ne.s32.totalorder %s75, %s77
      %p84 = scmp.eq.s32.totalorder %s25, 1
      %p85 = por %p83, %p84
      %p86 = scmp.ne.s32.totalorder %s77, %s78
      %p87 = scmp.eq.s32.totalorder %s25, 0
      %p88 = por %p86, %p87
      %p89 = scmp.ne.s32.totalorder %s77, %s78
      %p90 = scmp.eq.s32.totalorder %s26, 1
      %p91 = por %p89, %p90
      %p93 = scmp.ne.s32.totalorder %s78, %s92
      %p94 = scmp.eq.s32.totalorder %s26, 0
      %p95 = por %p93, %p94
      %s97 = sadd.s32 %s96, 1
      %p100 = scmp.eq.s32.totalorder %s20, 1
      %p101 = scmp.ne.s32.totalorder %s96, %s98
      %p102 = scmp.eq.s32.totalorder %s20, 0
      %p103 = por %p101, %p102
      %p104 = scmp.ne.s32.totalorder %s96, %s98
      %p105 = scmp.eq.s32.totalorder %s25, 1
      %p106 = por %p104, %p105
      %p107 = scmp.ne.s32.totalorder %s98, %s99
      %p108 = scmp.eq.s32.totalorder %s25, 0
      %p109 = por %p107, %p108
      %p110 = scmp.ne.s32.totalorder %s98, %s99
      %p111 = scmp.eq.s32.totalorder %s26, 1
      %p112 = por %p110, %p111
      %p114 = scmp.ne.s32.totalorder %s99, %s113
      %p115 = scmp.eq.s32.totalorder %s26, 0
      %p116 = por %p114, %p115
      %s118 = sadd.s32 %s117, 1
      %p121 = scmp.eq.s32.totalorder %s20, 1
      %p122 = scmp.ne.s32.totalorder %s117, %s119
      %p123 = scmp.eq.s32.totalorder %s20, 0
      %p124 = por %p122, %p123
      %p125 = scmp.ne.s32.totalorder %s117, %s119
      %p126 = scmp.eq.s32.totalorder %s25, 1
      %p127 = por %p125, %p126
      %p128 = scmp.ne.s32.totalorder %s119, %s120
      %p129 = scmp.eq.s32.totalorder %s25, 0
      %p130 = por %p128, %p129
      %p131 = scmp.ne.s32.totalorder %s119, %s120
      %p132 = scmp.eq.s32.totalorder %s26, 1
      %p133 = por %p131, %p132
      %p135 = scmp.ne.s32.totalorder %s120, %s134
      %p136 = scmp.eq.s32.totalorder %s26, 0
      %p137 = por %p135, %p136
      %s139 = sadd.s32 %s138, 1
      %p142 = scmp.eq.s32.totalorder %s20, 1
      %p143 = scmp.ne.s32.totalorder %s138, %s140
      %p144 = scmp.eq.s32.totalorder %s20, 0
      %p145 = por %p143, %p144
      %p146 = scmp.ne.s32.totalorder %s138, %s140
      %p147 = scmp.eq.s32.totalorder %s25, 1
      %p148 = por %p146, %p147
      %p149 = scmp.ne.s32.totalorder %s140, %s141
      %p150 = scmp.eq.s32.totalorder %s25, 0
      %p151 = por %p149, %p150
      %p152 = scmp.ne.s32.totalorder %s140, %s141
      %p153 = scmp.eq.s32.totalorder %s26, 1
      %p154 = por %p152, %p153
      %p156 = scmp.ne.s32.totalorder %s141, %s155
      %p157 = scmp.eq.s32.totalorder %s26, 0
      %p158 = por %p156, %p157
      %s160 = sadd.s32 %s159, 1
      %p163 = scmp.eq.s32.totalorder %s20, 1
      %p164 = scmp.ne.s32.totalorder %s159, %s161
      %p165 = scmp.eq.s32.totalorder %s20, 0
      %p166 = por %p164, %p165
      %p167 = scmp.ne.s32.totalorder %s159, %s161
      %p168 = scmp.eq.s32.totalorder %s25, 1
      %p169 = por %p167, %p168
      %p170 = scmp.ne.s32.totalorder %s161, %s162
      %p171 = scmp.eq.s32.totalorder %s25, 0
      %p172 = por %p170, %p171
      %p173 = scmp.ne.s32.totalorder %s161, %s162
      %p174 = scmp.eq.s32.totalorder %s26, 1
      %p175 = por %p173, %p174
      %p177 = scmp.ne.s32.totalorder %s162, %s176
      %p178 = scmp.eq.s32.totalorder %s26, 0
      %p179 = por %p177, %p178
      %s181 = sadd.s32 %s180, 1
      %p184 = scmp.eq.s32.totalorder %s20, 1
      %p185 = scmp.ne.s32.totalorder %s180, %s182
      %p186 = scmp.eq.s32.totalorder %s20, 0
      %p187 = por %p185, %p186
      %p188 = scmp.ne.s32.totalorder %s180, %s182
      %p189 = scmp.eq.s32.totalorder %s25, 1
      %p190 = por %p188, %p189
      %p191 = scmp.ne.s32.totalorder %s182, %s183
      %p192 = scmp.eq.s32.totalorder %s25, 0
      %p193 = por %p191, %p192
      %p194 = scmp.ne.s32.totalorder %s182, %s183
      %p195 = scmp.eq.s32.totalorder %s26, 1
      %p196 = por %p194, %p195
      %p198 = scmp.ne.s32.totalorder %s183, %s197
      %p199 = scmp.eq.s32.totalorder %s26, 0
      %p200 = por %p198, %p199
      %s202 = sadd.s32 %s201, 1
      %p205 = scmp.eq.s32.totalorder %s20, 1
      %p206 = scmp.ne.s32.totalorder %s201, %s203
      %p207 = scmp.eq.s32.totalorder %s20, 0
      %p208 = por %p206, %p207
      %p209 = scmp.ne.s32.totalorder %s201, %s203
      %p210 = scmp.eq.s32.totalorder %s25, 1
      %p211 = por %p209, %p210
      %p212 = scmp.ne.s32.totalorder %s203, %s204
      %p213 = scmp.eq.s32.totalorder %s25, 0
      %p214 = por %p212, %p213
      %p215 = scmp.ne.s32.totalorder %s203, %s204
      %p216 = scmp.eq.s32.totalorder %s26, 1
      %p217 = por %p215, %p216
      %p219 = scmp.ne.s32.totalorder %s204, %s218
      %p220 = scmp.eq.s32.totalorder %s26, 0
      %p221 = por %p219, %p220
      %s222 = ssub.s32 %s20, %s27
      %p223 = scmp.eq.s32.totalorder %s222, 0
      %s225 = sadd.s32 %s224, 1
      %s226 = scalar_select %p223, %s224, %s225
      %p229 = pneg %p223
      %p230 = scmp.eq.s32.totalorder %s20, 1
      %p231 = por %p229, %p230
      %p232 = scmp.ne.s32.totalorder %s224, %s227
      %p233 = scmp.eq.s32.totalorder %s20, 0
      %p234 = por %p232, %p233
      %p235 = scmp.ne.s32.totalorder %s224, %s227
      %p236 = scmp.eq.s32.totalorder %s25, 1
      %p237 = por %p235, %p236
      %p238 = scmp.ne.s32.totalorder %s227, %s228
      %p239 = scmp.eq.s32.totalorder %s25, 0
      %p240 = por %p238, %p239
      %p241 = scmp.ne.s32.totalorder %s227, %s228
      %p242 = scmp.eq.s32.totalorder %s26, 1
      %p243 = por %p241, %p242
      %p245 = scmp.ne.s32.totalorder %s228, %s244
      %p246 = scmp.eq.s32.totalorder %s26, 0
      %p247 = por %p245, %p246
      %p248 = scmp.le.s32.totalorder 1, %s20
      %p249 = scmp.lt.s32.totalorder %s20, 3
      %p250 = pnand %p248, %p249
      %p251 = pneg %p250
      // Predicated region
      $region9: #{tpu_custom_call.1} parent=5 // pred_check
        _
      $region10: #{tpu_custom_call.1} parent=5 // pred_check_branch
        %253 = sbr.rel (%p250) target = $region12
      $region11: #{tpu_custom_call.1} parent=5 // pred_region
        %s254 = ssub.s32 %s20, 1
        // Predicated region
        $region13: #{tpu_custom_call.1} parent=11 // pred_check
          %p255 = pneg %p67
        $region14: #{tpu_custom_call.1} parent=11 // pred_check_branch
          %257 = sbr.rel (%p255) target = $region16
        $region15: #{tpu_custom_call.1} parent=11 // pred_region
          _
        $region16: #{tpu_custom_call.1} parent=11 // pred_fallthru
          _
        // Predicated region
        $region17: #{tpu_custom_call.1} parent=11 // pred_check
          %p258 = pneg %p88
        $region18: #{tpu_custom_call.1} parent=11 // pred_check_branch
          %260 = sbr.rel (%p258) target = $region20
        $region19: #{tpu_custom_call.1} parent=11 // pred_region
          _
        $region20: #{tpu_custom_call.1} parent=11 // pred_fallthru
          _
        // Predicated region
        $region21: #{tpu_custom_call.1} parent=11 // pred_check
          %p261 = pneg %p109
        $region22: #{tpu_custom_call.1} parent=11 // pred_check_branch
          %263 = sbr.rel (%p261) target = $region24
        $region23: #{tpu_custom_call.1} parent=11 // pred_region
          _
        $region24: #{tpu_custom_call.1} parent=11 // pred_fallthru
          _
        // Predicated region
        $region25: #{tpu_custom_call.1} parent=11 // pred_check
          %p264 = pneg %p130
        $region26: #{tpu_custom_call.1} parent=11 // pred_check_branch
          %266 = sbr.rel (%p264) target = $region28
        $region27: #{tpu_custom_call.1} parent=11 // pred_region
          _
        $region28: #{tpu_custom_call.1} parent=11 // pred_fallthru
          _
        // Predicated region
        $region29: #{tpu_custom_call.1} parent=11 // pred_check
          %p267 = pneg %p151
        $region30: #{tpu_custom_call.1} parent=11 // pred_check_branch
          %269 = sbr.rel (%p267) target = $region32
        $region31: #{tpu_custom_call.1} parent=11 // pred_region
          _
        $region32: #{tpu_custom_call.1} parent=11 // pred_fallthru
          _
        // Predicated region
        $region33: #{tpu_custom_call.1} parent=11 // pred_check
          %p270 = pneg %p172
        $region34: #{tpu_custom_call.1} parent=11 // pred_check_branch
          %272 = sbr.rel (%p270) target = $region36
        $region35: #{tpu_custom_call.1} parent=11 // pred_region
          _
        $region36: #{tpu_custom_call.1} parent=11 // pred_fallthru
          _
        // Predicated region
        $region37: #{tpu_custom_call.1} parent=11 // pred_check
          %p273 = pneg %p193
        $region38: #{tpu_custom_call.1} parent=11 // pred_check_branch
          %275 = sbr.rel (%p273) target = $region40
        $region39: #{tpu_custom_call.1} parent=11 // pred_region
          _
        $region40: #{tpu_custom_call.1} parent=11 // pred_fallthru
          _
        // Predicated region
        $region41: #{tpu_custom_call.1} parent=11 // pred_check
          %p276 = pneg %p214
        $region42: #{tpu_custom_call.1} parent=11 // pred_check_branch
          %278 = sbr.rel (%p276) target = $region44
        $region43: #{tpu_custom_call.1} parent=11 // pred_region
          _
        $region44: #{tpu_custom_call.1} parent=11 // pred_fallthru
          _
      $region12: #{tpu_custom_call.1} parent=5 // pred_fallthru
        _
      %p279 = scmp.lt.s32.totalorder %s20, 2
      // Predicated region
      $region45: #{tpu_custom_call.1} parent=5 // pred_check
        %p280 = pneg %p279
      $region46: #{tpu_custom_call.1} parent=5 // pred_check_branch
        %282 = sbr.rel (%p280) target = $region48
      $region47: #{tpu_custom_call.1} parent=5 // pred_region
        // Predicated region
        $region49: #{tpu_custom_call.1} parent=47 // pred_check
          %p283 = pneg %p40
        $region50: #{tpu_custom_call.1} parent=47 // pred_check_branch
          %285 = sbr.rel (%p283) target = $region52
        $region51: #{tpu_custom_call.1} parent=47 // pred_region
          %s286 = smul.u32 2, %s20
          %s287 = ssub.s32 3, %s286
          %p288 = scmp.lt.s32.totalorder %s287, 2
          %s289 = scalar_select %p288, %s287, 2
          %s290 = smul.u32 64, %s289
          %p291 = scmp.lt.s32.totalorder %s286, 2
          %s292 = scalar_select %p291, %s286, 2
          %s293 = smul.addr %s292, 4
          %s294 = scalar_lea.vmem %s0, %s293
          %s295 = smul.u32 2, %s20
          %s296 = ssub.s32 3, %s295
          %p297 = scmp.lt.s32.totalorder %s296, 2
          %s298 = scalar_select %p297, %s296, 2
          %s299 = smul.u32 64, %s298
        $region52: #{tpu_custom_call.1} parent=47 // pred_fallthru
          _
      $region48: #{tpu_custom_call.1} parent=5 // pred_fallthru
        _
      %p300 = scmp.le.s32.totalorder 1, %s20
      %p301 = scmp.lt.s32.totalorder %s20, 3
      %p302 = pnand %p300, %p301
      %p303 = pneg %p302
      // Predicated region
      $region53: #{tpu_custom_call.1} parent=5 // pred_check
        _
      $region54: #{tpu_custom_call.1} parent=5 // pred_check_branch
        %305 = sbr.rel (%p302) target = $region56
      $region55: #{tpu_custom_call.1} parent=5 // pred_region
        %s306 = ssub.s32 %s20, 1
        %s307 = smul.u32 2, %s25
        %s308 = ssub.s32 3, %s307
        %p309 = scmp.lt.s32.totalorder %s308, 2
        %s310 = scalar_select %p309, %s308, 2
        %s311 = smul.u32 64, %s310
        %p312 = scmp.lt.s32.totalorder %s307, 2
        %s313 = scalar_select %p312, %s307, 2
        %s314 = smul.addr %s313, 4
        %s315 = scalar_lea.vmem %s0, %s314
        %p316 = pneg %p46
        %p317 = pneg %p43
        %p318 = pneg %p67
        %p319 = pneg %p64
        %p320 = pneg %p88
        %p321 = pneg %p85
        %p322 = pneg %p109
        %p323 = pneg %p106
        %p324 = pneg %p130
        %p325 = pneg %p127
        %p326 = pneg %p151
        %p327 = pneg %p148
        %p328 = pneg %p172
        %p329 = pneg %p169
        %p330 = pneg %p193
        %p331 = pneg %p190
        %p332 = pneg %p214
        %p333 = pneg %p211
        %p334 = pneg %p240
        %p335 = pneg %p237
        %s336 = sand.u32 %s227, 1
        %s337 = scalar_lea.sflag [#allocation4], %s336
        %s338 = sand.u32 %s227, 1
        %s339 = smul.addr %s338, 2
        %s340 = scalar_lea.vmem [#allocation3], %s339
        %s341 = smul.u32 2, %s25
        %s342 = ssub.s32 3, %s341
        %p343 = scmp.lt.s32.totalorder %s342, 2
        %s344 = scalar_select %p343, %s342, 2
        %s345 = smul.u32 64, %s344
        %p346 = scmp.lt.s32.totalorder %s341, 2
        %s347 = scalar_select %p346, %s341, 2
        %s348 = smul.addr %s347, 4
        %s349 = scalar_lea.vmem %s0, %s348
        %s350 = smul.u32 2, %s25
        %s351 = ssub.s32 3, %s350
        %p352 = scmp.lt.s32.totalorder %s351, 2
        %s353 = scalar_select %p352, %s351, 2
        %s354 = smul.u32 64, %s353
        %s355 = smul.u32 2, %s25
        %s356 = ssub.s32 3, %s355
        %p357 = scmp.lt.s32.totalorder %s356, 2
        %s358 = scalar_select %p357, %s356, 2
        %s359 = smul.u32 16, %s358
        %v360 = vld [vmem:[%s349] sm:$0x77]
        %v361 = vld [vmem:[%s1] sm:$0xff]
        %v362 = vld [vmem:[%s1 + $0x8] sm:$0xff]
        %v363 = vld [vmem:[%s1 + $0x10] sm:$0xff]
        %v364 = vld [vmem:[%s1 + $0x18] sm:$0xff]
        %v365 = vld [vmem:[%s2] sm:$0xff]
        %v366 = vld [vmem:[%s2 + $0x8] sm:$0xff]
        %v367 = vld [vmem:[%s2 + $0x10] sm:$0xff]
        %v368 = vld [vmem:[%s2 + $0x18] sm:$0xff]
        %370 = vset.pattern.permute.xlu0 0
        %371 = vperm.xlu0 %370, %v365
        %v372 = vpop.permute.xlu0 %371
        %375 = vset.pattern.permute.xlu0 0
        %376 = vperm.xlu0 %375, %v366
        %v377 = vpop.permute.xlu0 %376
        %380 = vset.pattern.permute.xlu0 0
        %381 = vperm.xlu0 %380, %v367
        %v382 = vpop.permute.xlu0 %381
        %385 = vset.pattern.permute.xlu0 0
        %386 = vperm.xlu0 %385, %v368
        %v387 = vpop.permute.xlu0 %386
        %v390 = vcombine.high %v360, %v360
        %vm391 = vcmask 23552
        %v393 = vsel %vm391, %v361, 0
        %v396 = vsel %vm391, %v362, 0
        %v399 = vsel %vm391, %v363, 0
        %v402 = vsel %vm391, %v364, 0
        %vm404 = vcmask 1042432
        %v405 = vsel %vm404, %v360, 0
        %v407 = vsel %vm404, %v390, 0
        %409 = vmatprep.subr.mxu0 0.0
        %410 = vmatpush1.msra.mxu0 0.0
        %411 = vmatprep.subr.mxu0 0.0
        %412 = vmatpush1.msra.mxu0 0.0
        %413 = vmatprep.subr.mxu0 0.0
        %414 = vmatpush1.msra.mxu0 0.0
        %415 = vmatprep.subr.mxu0 0.0
        %416 = vmatpush1.msra.mxu0 0.0
        %417 = vmatprep.subr.mxu0 0.0
        %418 = vmatpush1.msra.mxu0 0.0
        %419 = vmatprep.subr.mxu0 0.0
        %420 = vmatpush1.msra.mxu0 0.0
        %421 = vmatprep.subr.mxu0 0.0
        %422 = vmatpush1.msra.mxu0 0.0
        %423 = vmatprep.subr.mxu0 0.0
        %424 = vmatpush1.msra.mxu0 0.0
        %425 = vmatprep.subr.mxu0 0.0
        %426 = vmatpush1.msra.mxu0 0.0
        %427 = vmatprep.subr.mxu0 0.0
        %428 = vmatpush1.msra.mxu0 0.0
        %429 = vmatprep.subr.mxu0 0.0
        %430 = vmatpush1.msra.mxu0 0.0
        %431 = vmatprep.subr.mxu0 0.0
        %432 = vmatpush1.msra.mxu0 0.0
        %433 = vmatprep.subr.mxu0 0.0
        %434 = vmatpush1.msra.mxu0 0.0
        %435 = vmatprep.subr.mxu0 0.0
        %436 = vmatpush1.msra.mxu0 0.0
        %437 = vmatprep.subr.mxu0 0.0
        %438 = vmatpush1.msra.mxu0 0.0
        %v439 = vand.u32 %v407, 4294901760
        %440 = vmatprep.subr.mxu0 %v439
        %v441 = vand.u32 %v405, 4294901760
        %442 = vmatpush1.msra.mxu0 %v441
        %443 = vmatprep.subr.mxu0 0.0
        %444 = vmatpush2.msra.mxu0 0.0
        %445 = vmatprep.subr.mxu0 0.0
        %446 = vmatpush2.msra.mxu0 0.0
        %447 = vmatprep.subr.mxu0 0.0
        %448 = vmatpush2.msra.mxu0 0.0
        %449 = vmatprep.subr.mxu0 0.0
        %450 = vmatpush2.msra.mxu0 0.0
        %451 = vmatprep.subr.mxu0 0.0
        %452 = vmatpush2.msra.mxu0 0.0
        %453 = vmatprep.subr.mxu0 0.0
        %454 = vmatpush2.msra.mxu0 0.0
        %455 = vmatprep.subr.mxu0 0.0
        %456 = vmatpush2.msra.mxu0 0.0
        %457 = vmatprep.subr.mxu0 0.0
        %458 = vmatpush2.msra.mxu0 0.0
        %459 = vmatprep.subr.mxu0 0.0
        %460 = vmatpush2.msra.mxu0 0.0
        %461 = vmatprep.subr.mxu0 0.0
        %462 = vmatpush2.msra.mxu0 0.0
        %463 = vmatprep.subr.mxu0 0.0
        %464 = vmatpush2.msra.mxu0 0.0
        %465 = vmatprep.subr.mxu0 0.0
        %466 = vmatpush2.msra.mxu0 0.0
        %467 = vmatprep.subr.mxu0 0.0
        %468 = vmatpush2.msra.mxu0 0.0
        %469 = vmatprep.subr.mxu0 0.0
        %470 = vmatpush2.msra.mxu0 0.0
        %471 = vmatprep.subr.mxu0 0.0
        %472 = vmatpush2.msra.mxu0 0.0
        %473 = vmatprep.subr.mxu0 0.0
        %474 = vmatpush2.msra.mxu0 0.0
        %475 = vmatprep.mubr.f32.mxu0 0.0
        %v476 = vand.u32 %v393, 4294901760
        %v477 = vsub.f32 %v393, %v476
        %v478 = vand.u32 %v477, 4294901760
        %v479 = vsub.f32 %v477, %v478
        %v480 = vand.u32 %v479, 4294901760
        %481 = vmatmul.mubr.f32.gmra.mxu0 %v480
        %v482 = vpop.f32.mrf.mxu0
        %v483 = vadd.f32 %v372, %v482
        %v484 = vpop.f32.mrf.mxu0
        %v485 = vadd.f32 %v372, %v484
        %486 = vmatprep.mubr.f32.mxu0 0.0
        %v487 = vand.u32 %v396, 4294901760
        %v488 = vsub.f32 %v396, %v487
        %v489 = vand.u32 %v488, 4294901760
        %v490 = vsub.f32 %v488, %v489
        %v491 = vand.u32 %v490, 4294901760
        %492 = vmatmul.mubr.f32.gmra.mxu0 %v491
        %v493 = vpop.f32.mrf.mxu0
        %v494 = vadd.f32 %v377, %v493
        %v495 = vpop.f32.mrf.mxu0
        %v496 = vadd.f32 %v377, %v495
        %497 = vmatprep.mubr.f32.mxu0 0.0
        %v498 = vand.u32 %v399, 4294901760
        %v499 = vsub.f32 %v399, %v498
        %v500 = vand.u32 %v499, 4294901760
        %v501 = vsub.f32 %v499, %v500
        %v502 = vand.u32 %v501, 4294901760
        %503 = vmatmul.mubr.f32.gmra.mxu0 %v502
        %v504 = vpop.f32.mrf.mxu0
        %v505 = vadd.f32 %v382, %v504
        %v506 = vpop.f32.mrf.mxu0
        %v507 = vadd.f32 %v382, %v506
        %508 = vmatprep.mubr.f32.mxu0 0.0
        %v509 = vand.u32 %v402, 4294901760
        %v510 = vsub.f32 %v402, %v509
        %v511 = vand.u32 %v510, 4294901760
        %v512 = vsub.f32 %v510, %v511
        %v513 = vand.u32 %v512, 4294901760
        %514 = vmatmul.mubr.f32.gmra.mxu0 %v513
        %v515 = vpop.f32.mrf.mxu0
        %v516 = vadd.f32 %v387, %v515
        %v517 = vpop.f32.mrf.mxu0
        %v518 = vadd.f32 %v387, %v517
        %519 = vdwg.mxu0
        %520 = vmatprep.subr.mxu0 0.0
        %521 = vmatpush1.msra.mxu0 0.0
        %522 = vmatprep.subr.mxu0 0.0
        %523 = vmatpush1.msra.mxu0 0.0
        %524 = vmatprep.subr.mxu0 0.0
        %525 = vmatpush1.msra.mxu0 0.0
        %526 = vmatprep.subr.mxu0 0.0
        %527 = vmatpush1.msra.mxu0 0.0
        %528 = vmatprep.subr.mxu0 0.0
        %529 = vmatpush1.msra.mxu0 0.0
        %530 = vmatprep.subr.mxu0 0.0
        %531 = vmatpush1.msra.mxu0 0.0
        %532 = vmatprep.subr.mxu0 0.0
        %533 = vmatpush1.msra.mxu0 0.0
        %534 = vmatprep.subr.mxu0 0.0
        %535 = vmatpush1.msra.mxu0 0.0
        %536 = vmatprep.subr.mxu0 0.0
        %537 = vmatpush1.msra.mxu0 0.0
        %538 = vmatprep.subr.mxu0 0.0
        %539 = vmatpush1.msra.mxu0 0.0
        %540 = vmatprep.subr.mxu0 0.0
        %541 = vmatpush1.msra.mxu0 0.0
        %542 = vmatprep.subr.mxu0 0.0
        %543 = vmatpush1.msra.mxu0 0.0
        %544 = vmatprep.subr.mxu0 0.0
        %545 = vmatpush1.msra.mxu0 0.0
        %546 = vmatprep.subr.mxu0 0.0
        %547 = vmatpush1.msra.mxu0 0.0
        %548 = vmatprep.subr.mxu0 0.0
        %549 = vmatpush1.msra.mxu0 0.0
        %v550 = vand.u32 %v407, 4294901760
        %v551 = vsub.f32 %v407, %v550
        %v552 = vand.u32 %v551, 4294901760
        %v553 = vsub.f32 %v551, %v552
        %v554 = vand.u32 %v553, 4294901760
        %555 = vmatprep.subr.mxu0 %v554
        %v556 = vand.u32 %v405, 4294901760
        %v557 = vsub.f32 %v405, %v556
        %v558 = vand.u32 %v557, 4294901760
        %v559 = vsub.f32 %v557, %v558
        %v560 = vand.u32 %v559, 4294901760
        %561 = vmatpush1.msra.mxu0 %v560
        %562 = vmatprep.subr.mxu0 0.0
        %563 = vmatpush2.msra.mxu0 0.0
        %564 = vmatprep.subr.mxu0 0.0
        %565 = vmatpush2.msra.mxu0 0.0
        %566 = vmatprep.subr.mxu0 0.0
        %567 = vmatpush2.msra.mxu0 0.0
        %568 = vmatprep.subr.mxu0 0.0
        %569 = vmatpush2.msra.mxu0 0.0
        %570 = vmatprep.subr.mxu0 0.0
        %571 = vmatpush2.msra.mxu0 0.0
        %572 = vmatprep.subr.mxu0 0.0
        %573 = vmatpush2.msra.mxu0 0.0
        %574 = vmatprep.subr.mxu0 0.0
        %575 = vmatpush2.msra.mxu0 0.0
        %576 = vmatprep.subr.mxu0 0.0
        %577 = vmatpush2.msra.mxu0 0.0
        %578 = vmatprep.subr.mxu0 0.0
        %579 = vmatpush2.msra.mxu0 0.0
        %580 = vmatprep.subr.mxu0 0.0
        %581 = vmatpush2.msra.mxu0 0.0
        %582 = vmatprep.subr.mxu0 0.0
        %583 = vmatpush2.msra.mxu0 0.0
        %584 = vmatprep.subr.mxu0 0.0
        %585 = vmatpush2.msra.mxu0 0.0
        %586 = vmatprep.subr.mxu0 0.0
        %587 = vmatpush2.msra.mxu0 0.0
        %588 = vmatprep.subr.mxu0 0.0
        %589 = vmatpush2.msra.mxu0 0.0
        %590 = vmatprep.subr.mxu0 0.0
        %591 = vmatpush2.msra.mxu0 0.0
        %592 = vmatprep.subr.mxu0 0.0
        %593 = vmatpush2.msra.mxu0 0.0
        %594 = vmatprep.mubr.f32.mxu0 0.0
        %v595 = vand.u32 %v393, 4294901760
        %596 = vmatmul.mubr.f32.gmra.mxu0 %v595
        %v597 = vpop.f32.mrf.mxu0
        %v598 = vadd.f32 %v483, %v597
        %v599 = vpop.f32.mrf.mxu0
        %v600 = vadd.f32 %v485, %v599
        %601 = vmatprep.mubr.f32.mxu0 0.0
        %v602 = vand.u32 %v396, 4294901760
        %603 = vmatmul.mubr.f32.gmra.mxu0 %v602
        %v604 = vpop.f32.mrf.mxu0
        %v605 = vadd.f32 %v494, %v604
        %v606 = vpop.f32.mrf.mxu0
        %v607 = vadd.f32 %v496, %v606
        %608 = vmatprep.mubr.f32.mxu0 0.0
        %v609 = vand.u32 %v399, 4294901760
        %610 = vmatmul.mubr.f32.gmra.mxu0 %v609
        %v611 = vpop.f32.mrf.mxu0
        %v612 = vadd.f32 %v505, %v611
        %v613 = vpop.f32.mrf.mxu0
        %v614 = vadd.f32 %v507, %v613
        %615 = vmatprep.mubr.f32.mxu0 0.0
        %v616 = vand.u32 %v402, 4294901760
        %617 = vmatmul.mubr.f32.gmra.mxu0 %v616
        %v618 = vpop.f32.mrf.mxu0
        %v619 = vadd.f32 %v516, %v618
        %v620 = vpop.f32.mrf.mxu0
        %v621 = vadd.f32 %v518, %v620
        %622 = vdwg.mxu0
        %623 = vmatprep.subr.mxu0 0.0
        %624 = vmatpush1.msra.mxu0 0.0
        %625 = vmatprep.subr.mxu0 0.0
        %626 = vmatpush1.msra.mxu0 0.0
        %627 = vmatprep.subr.mxu0 0.0
        %628 = vmatpush1.msra.mxu0 0.0
        %629 = vmatprep.subr.mxu0 0.0
        %630 = vmatpush1.msra.mxu0 0.0
        %631 = vmatprep.subr.mxu0 0.0
        %632 = vmatpush1.msra.mxu0 0.0
        %633 = vmatprep.subr.mxu0 0.0
        %634 = vmatpush1.msra.mxu0 0.0
        %635 = vmatprep.subr.mxu0 0.0
        %636 = vmatpush1.msra.mxu0 0.0
        %637 = vmatprep.subr.mxu0 0.0
        %638 = vmatpush1.msra.mxu0 0.0
        %639 = vmatprep.subr.mxu0 0.0
        %640 = vmatpush1.msra.mxu0 0.0
        %641 = vmatprep.subr.mxu0 0.0
        %642 = vmatpush1.msra.mxu0 0.0
        %643 = vmatprep.subr.mxu0 0.0
        %644 = vmatpush1.msra.mxu0 0.0
        %645 = vmatprep.subr.mxu0 0.0
        %646 = vmatpush1.msra.mxu0 0.0
        %647 = vmatprep.subr.mxu0 0.0
        %648 = vmatpush1.msra.mxu0 0.0
        %649 = vmatprep.subr.mxu0 0.0
        %650 = vmatpush1.msra.mxu0 0.0
        %651 = vmatprep.subr.mxu0 0.0
        %652 = vmatpush1.msra.mxu0 0.0
        %v653 = vand.u32 %v407, 4294901760
        %v654 = vsub.f32 %v407, %v653
        %655 = vmatprep.subr.mxu0 %v654
        %v656 = vand.u32 %v405, 4294901760
        %v657 = vsub.f32 %v405, %v656
        %658 = vmatpush1.msra.mxu0 %v657
        %659 = vmatprep.subr.mxu0 0.0
        %660 = vmatpush2.msra.mxu0 0.0
        %661 = vmatprep.subr.mxu0 0.0
        %662 = vmatpush2.msra.mxu0 0.0
        %663 = vmatprep.subr.mxu0 0.0
        %664 = vmatpush2.msra.mxu0 0.0
        %665 = vmatprep.subr.mxu0 0.0
        %666 = vmatpush2.msra.mxu0 0.0
        %667 = vmatprep.subr.mxu0 0.0
        %668 = vmatpush2.msra.mxu0 0.0
        %669 = vmatprep.subr.mxu0 0.0
        %670 = vmatpush2.msra.mxu0 0.0
        %671 = vmatprep.subr.mxu0 0.0
        %672 = vmatpush2.msra.mxu0 0.0
        %673 = vmatprep.subr.mxu0 0.0
        %674 = vmatpush2.msra.mxu0 0.0
        %675 = vmatprep.subr.mxu0 0.0
        %676 = vmatpush2.msra.mxu0 0.0
        %677 = vmatprep.subr.mxu0 0.0
        %678 = vmatpush2.msra.mxu0 0.0
        %679 = vmatprep.subr.mxu0 0.0
        %680 = vmatpush2.msra.mxu0 0.0
        %681 = vmatprep.subr.mxu0 0.0
        %682 = vmatpush2.msra.mxu0 0.0
        %683 = vmatprep.subr.mxu0 0.0
        %684 = vmatpush2.msra.mxu0 0.0
        %685 = vmatprep.subr.mxu0 0.0
        %686 = vmatpush2.msra.mxu0 0.0
        %687 = vmatprep.subr.mxu0 0.0
        %688 = vmatpush2.msra.mxu0 0.0
        %689 = vmatprep.subr.mxu0 0.0
        %690 = vmatpush2.msra.mxu0 0.0
        %691 = vmatprep.mubr.f32.mxu0 0.0
        %v692 = vand.u32 %v393, 4294901760
        %v693 = vsub.f32 %v393, %v692
        %694 = vmatmul.mubr.f32.gmra.mxu0 %v693
        %v695 = vpop.f32.mrf.mxu0
        %v696 = vadd.f32 %v598, %v695
        %v697 = vpop.f32.mrf.mxu0
        %v698 = vadd.f32 %v600, %v697
        %699 = vmatprep.mubr.f32.mxu0 0.0
        %v700 = vand.u32 %v396, 4294901760
        %v701 = vsub.f32 %v396, %v700
        %702 = vmatmul.mubr.f32.gmra.mxu0 %v701
        %v703 = vpop.f32.mrf.mxu0
        %v704 = vadd.f32 %v605, %v703
        %v705 = vpop.f32.mrf.mxu0
        %v706 = vadd.f32 %v607, %v705
        %707 = vmatprep.mubr.f32.mxu0 0.0
        %v708 = vand.u32 %v399, 4294901760
        %v709 = vsub.f32 %v399, %v708
        %710 = vmatmul.mubr.f32.gmra.mxu0 %v709
        %v711 = vpop.f32.mrf.mxu0
        %v712 = vadd.f32 %v612, %v711
        %v713 = vpop.f32.mrf.mxu0
        %v714 = vadd.f32 %v614, %v713
        %715 = vmatprep.mubr.f32.mxu0 0.0
        %v716 = vand.u32 %v402, 4294901760
        %v717 = vsub.f32 %v402, %v716
        %718 = vmatmul.mubr.f32.gmra.mxu0 %v717
        %v719 = vpop.f32.mrf.mxu0
        %v720 = vadd.f32 %v619, %v719
        %v721 = vpop.f32.mrf.mxu0
        %v722 = vadd.f32 %v621, %v721
        %723 = vdwg.mxu0
        %724 = vmatprep.subr.mxu0 0.0
        %725 = vmatpush1.msra.mxu0 0.0
        %726 = vmatprep.subr.mxu0 0.0
        %727 = vmatpush1.msra.mxu0 0.0
        %728 = vmatprep.subr.mxu0 0.0
        %729 = vmatpush1.msra.mxu0 0.0
        %730 = vmatprep.subr.mxu0 0.0
        %731 = vmatpush1.msra.mxu0 0.0
        %732 = vmatprep.subr.mxu0 0.0
        %733 = vmatpush1.msra.mxu0 0.0
        %734 = vmatprep.subr.mxu0 0.0
        %735 = vmatpush1.msra.mxu0 0.0
        %736 = vmatprep.subr.mxu0 0.0
        %737 = vmatpush1.msra.mxu0 0.0
        %738 = vmatprep.subr.mxu0 0.0
        %739 = vmatpush1.msra.mxu0 0.0
        %740 = vmatprep.subr.mxu0 0.0
        %741 = vmatpush1.msra.mxu0 0.0
        %742 = vmatprep.subr.mxu0 0.0
        %743 = vmatpush1.msra.mxu0 0.0
        %744 = vmatprep.subr.mxu0 0.0
        %745 = vmatpush1.msra.mxu0 0.0
        %746 = vmatprep.subr.mxu0 0.0
        %747 = vmatpush1.msra.mxu0 0.0
        %748 = vmatprep.subr.mxu0 0.0
        %749 = vmatpush1.msra.mxu0 0.0
        %750 = vmatprep.subr.mxu0 0.0
        %751 = vmatpush1.msra.mxu0 0.0
        %752 = vmatprep.subr.mxu0 0.0
        %753 = vmatpush1.msra.mxu0 0.0
        %v754 = vand.u32 %v407, 4294901760
        %755 = vmatprep.subr.mxu0 %v754
        %v756 = vand.u32 %v405, 4294901760
        %757 = vmatpush1.msra.mxu0 %v756
        %758 = vmatprep.subr.mxu0 0.0
        %759 = vmatpush2.msra.mxu0 0.0
        %760 = vmatprep.subr.mxu0 0.0
        %761 = vmatpush2.msra.mxu0 0.0
        %762 = vmatprep.subr.mxu0 0.0
        %763 = vmatpush2.msra.mxu0 0.0
        %764 = vmatprep.subr.mxu0 0.0
        %765 = vmatpush2.msra.mxu0 0.0
        %766 = vmatprep.subr.mxu0 0.0
        %767 = vmatpush2.msra.mxu0 0.0
        %768 = vmatprep.subr.mxu0 0.0
        %769 = vmatpush2.msra.mxu0 0.0
        %770 = vmatprep.subr.mxu0 0.0
        %771 = vmatpush2.msra.mxu0 0.0
        %772 = vmatprep.subr.mxu0 0.0
        %773 = vmatpush2.msra.mxu0 0.0
        %774 = vmatprep.subr.mxu0 0.0
        %775 = vmatpush2.msra.mxu0 0.0
        %776 = vmatprep.subr.mxu0 0.0
        %777 = vmatpush2.msra.mxu0 0.0
        %778 = vmatprep.subr.mxu0 0.0
        %779 = vmatpush2.msra.mxu0 0.0
        %780 = vmatprep.subr.mxu0 0.0
        %781 = vmatpush2.msra.mxu0 0.0
        %782 = vmatprep.subr.mxu0 0.0
        %783 = vmatpush2.msra.mxu0 0.0
        %784 = vmatprep.subr.mxu0 0.0
        %785 = vmatpush2.msra.mxu0 0.0
        %786 = vmatprep.subr.mxu0 0.0
        %787 = vmatpush2.msra.mxu0 0.0
        %788 = vmatprep.subr.mxu0 0.0
        %789 = vmatpush2.msra.mxu0 0.0
        %790 = vmatprep.mubr.f32.mxu0 0.0
        %v791 = vand.u32 %v393, 4294901760
        %v792 = vsub.f32 %v393, %v791
        %v793 = vand.u32 %v792, 4294901760
        %794 = vmatmul.mubr.f32.gmra.mxu0 %v793
        %v795 = vpop.f32.mrf.mxu0
        %v796 = vadd.f32 %v696, %v795
        %v797 = vpop.f32.mrf.mxu0
        %v798 = vadd.f32 %v698, %v797
        %799 = vmatprep.mubr.f32.mxu0 0.0
        %v800 = vand.u32 %v396, 4294901760
        %v801 = vsub.f32 %v396, %v800
        %v802 = vand.u32 %v801, 4294901760
        %803 = vmatmul.mubr.f32.gmra.mxu0 %v802
        %v804 = vpop.f32.mrf.mxu0
        %v805 = vadd.f32 %v704, %v804
        %v806 = vpop.f32.mrf.mxu0
        %v807 = vadd.f32 %v706, %v806
        %808 = vmatprep.mubr.f32.mxu0 0.0
        %v809 = vand.u32 %v399, 4294901760
        %v810 = vsub.f32 %v399, %v809
        %v811 = vand.u32 %v810, 4294901760
        %812 = vmatmul.mubr.f32.gmra.mxu0 %v811
        %v813 = vpop.f32.mrf.mxu0
        %v814 = vadd.f32 %v712, %v813
        %v815 = vpop.f32.mrf.mxu0
        %v816 = vadd.f32 %v714, %v815
        %817 = vmatprep.mubr.f32.mxu0 0.0
        %v818 = vand.u32 %v402, 4294901760
        %v819 = vsub.f32 %v402, %v818
        %v820 = vand.u32 %v819, 4294901760
        %821 = vmatmul.mubr.f32.gmra.mxu0 %v820
        %v822 = vpop.f32.mrf.mxu0
        %v823 = vadd.f32 %v720, %v822
        %v824 = vpop.f32.mrf.mxu0
        %v825 = vadd.f32 %v722, %v824
        %826 = vdwg.mxu0
        %827 = vmatprep.subr.mxu0 0.0
        %828 = vmatpush1.msra.mxu0 0.0
        %829 = vmatprep.subr.mxu0 0.0
        %830 = vmatpush1.msra.mxu0 0.0
        %831 = vmatprep.subr.mxu0 0.0
        %832 = vmatpush1.msra.mxu0 0.0
        %833 = vmatprep.subr.mxu0 0.0
        %834 = vmatpush1.msra.mxu0 0.0
        %835 = vmatprep.subr.mxu0 0.0
        %836 = vmatpush1.msra.mxu0 0.0
        %837 = vmatprep.subr.mxu0 0.0
        %838 = vmatpush1.msra.mxu0 0.0
        %839 = vmatprep.subr.mxu0 0.0
        %840 = vmatpush1.msra.mxu0 0.0
        %841 = vmatprep.subr.mxu0 0.0
        %842 = vmatpush1.msra.mxu0 0.0
        %843 = vmatprep.subr.mxu0 0.0
        %844 = vmatpush1.msra.mxu0 0.0
        %845 = vmatprep.subr.mxu0 0.0
        %846 = vmatpush1.msra.mxu0 0.0
        %847 = vmatprep.subr.mxu0 0.0
        %848 = vmatpush1.msra.mxu0 0.0
        %849 = vmatprep.subr.mxu0 0.0
        %850 = vmatpush1.msra.mxu0 0.0
        %851 = vmatprep.subr.mxu0 0.0
        %852 = vmatpush1.msra.mxu0 0.0
        %853 = vmatprep.subr.mxu0 0.0
        %854 = vmatpush1.msra.mxu0 0.0
        %855 = vmatprep.subr.mxu0 0.0
        %856 = vmatpush1.msra.mxu0 0.0
        %v857 = vand.u32 %v407, 4294901760
        %v858 = vsub.f32 %v407, %v857
        %v859 = vand.u32 %v858, 4294901760
        %860 = vmatprep.subr.mxu0 %v859
        %v861 = vand.u32 %v405, 4294901760
        %v862 = vsub.f32 %v405, %v861
        %v863 = vand.u32 %v862, 4294901760
        %864 = vmatpush1.msra.mxu0 %v863
        %865 = vmatprep.subr.mxu0 0.0
        %866 = vmatpush2.msra.mxu0 0.0
        %867 = vmatprep.subr.mxu0 0.0
        %868 = vmatpush2.msra.mxu0 0.0
        %869 = vmatprep.subr.mxu0 0.0
        %870 = vmatpush2.msra.mxu0 0.0
        %871 = vmatprep.subr.mxu0 0.0
        %872 = vmatpush2.msra.mxu0 0.0
        %873 = vmatprep.subr.mxu0 0.0
        %874 = vmatpush2.msra.mxu0 0.0
        %875 = vmatprep.subr.mxu0 0.0
        %876 = vmatpush2.msra.mxu0 0.0
        %877 = vmatprep.subr.mxu0 0.0
        %878 = vmatpush2.msra.mxu0 0.0
        %879 = vmatprep.subr.mxu0 0.0
        %880 = vmatpush2.msra.mxu0 0.0
        %881 = vmatprep.subr.mxu0 0.0
        %882 = vmatpush2.msra.mxu0 0.0
        %883 = vmatprep.subr.mxu0 0.0
        %884 = vmatpush2.msra.mxu0 0.0
        %885 = vmatprep.subr.mxu0 0.0
        %886 = vmatpush2.msra.mxu0 0.0
        %887 = vmatprep.subr.mxu0 0.0
        %888 = vmatpush2.msra.mxu0 0.0
        %889 = vmatprep.subr.mxu0 0.0
        %890 = vmatpush2.msra.mxu0 0.0
        %891 = vmatprep.subr.mxu0 0.0
        %892 = vmatpush2.msra.mxu0 0.0
        %893 = vmatprep.subr.mxu0 0.0
        %894 = vmatpush2.msra.mxu0 0.0
        %895 = vmatprep.subr.mxu0 0.0
        %896 = vmatpush2.msra.mxu0 0.0
        %897 = vmatprep.mubr.f32.mxu0 0.0
        %v898 = vand.u32 %v393, 4294901760
        %899 = vmatmul.mubr.f32.gmra.mxu0 %v898
        %v900 = vpop.f32.mrf.mxu0
        %v901 = vadd.f32 %v796, %v900
        %v902 = vpop.f32.mrf.mxu0
        %v903 = vadd.f32 %v798, %v902
        %904 = vmatprep.mubr.f32.mxu0 0.0
        %v905 = vand.u32 %v396, 4294901760
        %906 = vmatmul.mubr.f32.gmra.mxu0 %v905
        %v907 = vpop.f32.mrf.mxu0
        %v908 = vadd.f32 %v805, %v907
        %v909 = vpop.f32.mrf.mxu0
        %v910 = vadd.f32 %v807, %v909
        %911 = vmatprep.mubr.f32.mxu0 0.0
        %v912 = vand.u32 %v399, 4294901760
        %913 = vmatmul.mubr.f32.gmra.mxu0 %v912
        %v914 = vpop.f32.mrf.mxu0
        %v915 = vadd.f32 %v814, %v914
        %v916 = vpop.f32.mrf.mxu0
        %v917 = vadd.f32 %v816, %v916
        %918 = vmatprep.mubr.f32.mxu0 0.0
        %v919 = vand.u32 %v402, 4294901760
        %920 = vmatmul.mubr.f32.gmra.mxu0 %v919
        %v921 = vpop.f32.mrf.mxu0
        %v922 = vadd.f32 %v823, %v921
        %v923 = vpop.f32.mrf.mxu0
        %v924 = vadd.f32 %v825, %v923
        %925 = vdwg.mxu0
        %926 = vmatprep.subr.mxu0 0.0
        %927 = vmatpush1.msra.mxu0 0.0
        %928 = vmatprep.subr.mxu0 0.0
        %929 = vmatpush1.msra.mxu0 0.0
        %930 = vmatprep.subr.mxu0 0.0
        %931 = vmatpush1.msra.mxu0 0.0
        %932 = vmatprep.subr.mxu0 0.0
        %933 = vmatpush1.msra.mxu0 0.0
        %934 = vmatprep.subr.mxu0 0.0
        %935 = vmatpush1.msra.mxu0 0.0
        %936 = vmatprep.subr.mxu0 0.0
        %937 = vmatpush1.msra.mxu0 0.0
        %938 = vmatprep.subr.mxu0 0.0
        %939 = vmatpush1.msra.mxu0 0.0
        %940 = vmatprep.subr.mxu0 0.0
        %941 = vmatpush1.msra.mxu0 0.0
        %942 = vmatprep.subr.mxu0 0.0
        %943 = vmatpush1.msra.mxu0 0.0
        %944 = vmatprep.subr.mxu0 0.0
        %945 = vmatpush1.msra.mxu0 0.0
        %946 = vmatprep.subr.mxu0 0.0
        %947 = vmatpush1.msra.mxu0 0.0
        %948 = vmatprep.subr.mxu0 0.0
        %949 = vmatpush1.msra.mxu0 0.0
        %950 = vmatprep.subr.mxu0 0.0
        %951 = vmatpush1.msra.mxu0 0.0
        %952 = vmatprep.subr.mxu0 0.0
        %953 = vmatpush1.msra.mxu0 0.0
        %954 = vmatprep.subr.mxu0 0.0
        %955 = vmatpush1.msra.mxu0 0.0
        %v956 = vand.u32 %v407, 4294901760
        %957 = vmatprep.subr.mxu0 %v956
        %v958 = vand.u32 %v405, 4294901760
        %959 = vmatpush1.msra.mxu0 %v958
        %960 = vmatprep.subr.mxu0 0.0
        %961 = vmatpush2.msra.mxu0 0.0
        %962 = vmatprep.subr.mxu0 0.0
        %963 = vmatpush2.msra.mxu0 0.0
        %964 = vmatprep.subr.mxu0 0.0
        %965 = vmatpush2.msra.mxu0 0.0
        %966 = vmatprep.subr.mxu0 0.0
        %967 = vmatpush2.msra.mxu0 0.0
        %968 = vmatprep.subr.mxu0 0.0
        %969 = vmatpush2.msra.mxu0 0.0
        %970 = vmatprep.subr.mxu0 0.0
        %971 = vmatpush2.msra.mxu0 0.0
        %972 = vmatprep.subr.mxu0 0.0
        %973 = vmatpush2.msra.mxu0 0.0
        %974 = vmatprep.subr.mxu0 0.0
        %975 = vmatpush2.msra.mxu0 0.0
        %976 = vmatprep.subr.mxu0 0.0
        %977 = vmatpush2.msra.mxu0 0.0
        %978 = vmatprep.subr.mxu0 0.0
        %979 = vmatpush2.msra.mxu0 0.0
        %980 = vmatprep.subr.mxu0 0.0
        %981 = vmatpush2.msra.mxu0 0.0
        %982 = vmatprep.subr.mxu0 0.0
        %983 = vmatpush2.msra.mxu0 0.0
        %984 = vmatprep.subr.mxu0 0.0
        %985 = vmatpush2.msra.mxu0 0.0
        %986 = vmatprep.subr.mxu0 0.0
        %987 = vmatpush2.msra.mxu0 0.0
        %988 = vmatprep.subr.mxu0 0.0
        %989 = vmatpush2.msra.mxu0 0.0
        %990 = vmatprep.subr.mxu0 0.0
        %991 = vmatpush2.msra.mxu0 0.0
        %992 = vmatprep.mubr.f32.mxu0 0.0
        %v993 = vand.u32 %v393, 4294901760
        %994 = vmatmul.mubr.f32.gmra.mxu0 %v993
        %v995 = vpop.f32.mrf.mxu0
        %v996 = vadd.f32 %v901, %v995
        %v997 = vpop.f32.mrf.mxu0
        %v998 = vadd.f32 %v903, %v997
        %999 = vmatprep.mubr.f32.mxu0 0.0
        %v1000 = vand.u32 %v396, 4294901760
        %1001 = vmatmul.mubr.f32.gmra.mxu0 %v1000
        %v1002 = vpop.f32.mrf.mxu0
        %v1003 = vadd.f32 %v908, %v1002
        %v1004 = vpop.f32.mrf.mxu0
        %v1005 = vadd.f32 %v910, %v1004
        %1006 = vmatprep.mubr.f32.mxu0 0.0
        %v1007 = vand.u32 %v399, 4294901760
        %1008 = vmatmul.mubr.f32.gmra.mxu0 %v1007
        %v1009 = vpop.f32.mrf.mxu0
        %v1010 = vadd.f32 %v915, %v1009
        %v1011 = vpop.f32.mrf.mxu0
        %v1012 = vadd.f32 %v917, %v1011
        %1013 = vmatprep.mubr.f32.mxu0 0.0
        %v1014 = vand.u32 %v402, 4294901760
        %1015 = vmatmul.mubr.f32.gmra.mxu0 %v1014
        %v1016 = vpop.f32.mrf.mxu0
        %v1017 = vadd.f32 %v922, %v1016
        %v1018 = vpop.f32.mrf.mxu0
        %v1019 = vadd.f32 %v924, %v1018
        %1020 = vdwg.mxu0
        %v1021 = vand.u32 2147483647, %v996
        %vm1022 = vcmp.le.f32.partialorder %v1021, 0.7853982
        %vm1023 = vcmp.lt.s32.totalorder %v996, 0
        %v1024 = vand.u32 %v996, 2139095040
        %v1025 = vshrl.u32 %v1024, 23
        %v1026 = vsub.s32 %v1025, 127
        %v1027 = vand.u32 2147483647, %v996
        %v1028 = vand.u32 %v1027, 8388607
        %v1029 = vor.u32 %v1028, 8388608
        %v1030 = vsub.s32 0, %v1029
        %v1031 = vadd.s32 %v1026, 1
        %vm1032 = vcmp.gt.s32.totalorder %v1031, 0
        %v1033 = vsel %vm1032, %v1031, 0
        %v1034 = vshrl.u32 %v1033, 5
        %v1035 = vand.u32 %v1033, 31
        %v1036 = vsub.s32 32, %v1035
        %v1037 = vshrl.u32 683565275, %v1036
        %v1038 = vshll.u32 683565275, %v1035
        %v1039 = vshrl.u32 2475754826, %v1036
        %v1040 = vor.u32 %v1038, %v1039
        %v1041 = vshll.u32 2475754826, %v1035
        %v1042 = vshrl.u32 2131351028, %v1036
        %v1043 = vor.u32 %v1041, %v1042
        %v1044 = vshll.u32 2131351028, %v1035
        %v1045 = vshrl.u32 2102212464, %v1036
        %v1046 = vor.u32 %v1044, %v1045
        %v1047 = vshll.u32 2102212464, %v1035
        %v1048 = vshrl.u32 920167782, %v1036
        %v1049 = vor.u32 %v1047, %v1048
        %v1050 = vshll.u32 920167782, %v1035
        %v1051 = vshrl.u32 1326507024, %v1036
        %v1052 = vor.u32 %v1050, %v1051
        %vm1053 = vcmp.lt.s32.totalorder %v1034, 1
        %vm1054 = vcmp.lt.s32.totalorder %v1034, 2
        %vm1055 = vcmp.lt.s32.totalorder %v1034, 3
        %vm1056 = vcmp.lt.s32.totalorder %v1034, 4
        %v1057 = vsel %vm1053, %v1037, %v1040
        %v1058 = vsel %vm1056, %v1046, 2102212464
        %v1059 = vsel %vm1055, %v1043, %v1058
        %v1060 = vsel %vm1054, %v1057, %v1059
        %v1061 = vsel %vm1053, %v1040, %v1043
        %v1062 = vsel %vm1056, %v1049, 920167782
        %v1063 = vsel %vm1055, %v1046, %v1062
        %v1064 = vsel %vm1054, %v1061, %v1063
        %v1065 = vsel %vm1053, %v1043, %v1046
        %v1066 = vsel %vm1056, %v1052, 1326507024
        %v1067 = vsel %vm1055, %v1049, %v1066
        %v1068 = vsel %vm1054, %v1065, %v1067
        %v1069 = vshll.u32 %v1029, 8
        %v1070 = vmul.u32.u64.compose %v1069, %v1068
        %v1071 = vextract.low.u32 %v1070
        %v1072 = vextract.high.u32 %v1070
        %v1073 = vmul.u32.u64.compose %v1069, %v1064
        %v1074 = vextract.low.u32 %v1073
        %v1075 = vextract.high.u32 %v1073
        %v1076 = vmul.u32 %v1069, %v1060
        %v1077 = vadd.s32 %v1072, %v1074
        %vm1078 = vc.u32 %v1072, %v1074
        %v1079 = vadd.s32 %v1075, 1
        %v1080 = vsel %vm1078, %v1079, %v1075
        %v1081 = vadd.s32 %v1076, %v1080
        %v1082 = vadd.s32 %v1081, 536870912
        %v1083 = vshrl.u32 %v1082, 30
        %v1084 = vshll.u32 %v1083, 30
        %v1085 = vsub.s32 %v1081, %v1084
        %vm1086 = vcmp.lt.s32.totalorder %v1085, 0
        %v1087 = vsub.s32 0, %v1085
        %v1088 = vsel %vm1086, %v1087, %v1085
        %v1089 = vclz %v1088
        %v1090 = vsub.s32 %v1089, 2
        %vm1091 = vcmp.gt.s32.totalorder 0, %v1090
        %v1092 = vsel %vm1091, 0, %v1090
        %v1093 = vsub.s32 32, %v1092
        %v1094 = vshll.u32 %v1085, %v1092
        %v1095 = vshrl.u32 %v1077, %v1093
        %v1096 = vor.u32 %v1094, %v1095
        %v1097 = vsub.s32 4294967266, %v1092
        %v1098 = vadd.s32 %v1097, 127
        %v1099 = vshll.u32 %v1098, 23
        %v1100 = vor.u32 4788187, %v1099
        %v1101 = vand.u32 2147483647, %v1100
        %v1103 = vcvt.s32.f32 %v1096
        %v1104 = vmul.f32 %v1103, %v1101
        %v1105 = vxor.u32 %v1104, 2147483648
        %v1106 = vsel %vm1023, %v1105, %v1104
        %v1107 = vsub.s32 4, %v1083
        %v1108 = vsel %vm1023, %v1107, %v1083
        %v1109 = vsel %vm1022, %v996, %v1106
        %v1110 = vsel %vm1022, 0, %v1108
        %v1111 = vcosq.f32.pop %v1109
        %v1112 = vsinq.f32.pop %v1109
        %vm1113 = vweird.f32 %v996
        %v1114 = vadd.s32 %v1110, 3
        %v1115 = vand.u32 %v1114, 3
        %vm1116 = vcmp.lt.s32.totalorder %v1115, 2
        %vm1117 = vcmp.eq.s32.totalorder %v1115, 0
        %v1118 = vxor.u32 %v1112, 2147483648
        %v1119 = vsel %vm1117, %v1111, %v1118
        %vm1120 = vcmp.eq.s32.totalorder %v1115, 2
        %v1121 = vxor.u32 %v1111, 2147483648
        %v1122 = vsel %vm1120, %v1121, %v1112
        %v1123 = vsel %vm1116, %v1119, %v1122
        %v1124 = vsel %vm1113, nan, %v1123
        %v1125 = vand.u32 2147483647, %v998
        %vm1126 = vcmp.le.f32.partialorder %v1125, 0.7853982
        %vm1127 = vcmp.lt.s32.totalorder %v998, 0
        %v1128 = vand.u32 %v998, 2139095040
        %v1129 = vshrl.u32 %v1128, 23
        %v1130 = vsub.s32 %v1129, 127
        %v1131 = vand.u32 2147483647, %v998
        %v1132 = vand.u32 %v1131, 8388607
        %v1133 = vor.u32 %v1132, 8388608
        %v1134 = vsub.s32 0, %v1133
        %v1135 = vadd.s32 %v1130, 1
        %vm1136 = vcmp.gt.s32.totalorder %v1135, 0
        %v1137 = vsel %vm1136, %v1135, 0
        %v1138 = vshrl.u32 %v1137, 5
        %v1139 = vand.u32 %v1137, 31
        %v1140 = vsub.s32 32, %v1139
        %v1141 = vshrl.u32 683565275, %v1140
        %v1142 = vshll.u32 683565275, %v1139
        %v1143 = vshrl.u32 2475754826, %v1140
        %v1144 = vor.u32 %v1142, %v1143
        %v1145 = vshll.u32 2475754826, %v1139
        %v1146 = vshrl.u32 2131351028, %v1140
        %v1147 = vor.u32 %v1145, %v1146
        %v1148 = vshll.u32 2131351028, %v1139
        %v1149 = vshrl.u32 2102212464, %v1140
        %v1150 = vor.u32 %v1148, %v1149
        %v1151 = vshll.u32 2102212464, %v1139
        %v1152 = vshrl.u32 920167782, %v1140
        %v1153 = vor.u32 %v1151, %v1152
        %v1154 = vshll.u32 920167782, %v1139
        %v1155 = vshrl.u32 1326507024, %v1140
        %v1156 = vor.u32 %v1154, %v1155
        %vm1157 = vcmp.lt.s32.totalorder %v1138, 1
        %vm1158 = vcmp.lt.s32.totalorder %v1138, 2
        %vm1159 = vcmp.lt.s32.totalorder %v1138, 3
        %vm1160 = vcmp.lt.s32.totalorder %v1138, 4
        %v1161 = vsel %vm1157, %v1141, %v1144
        %v1162 = vsel %vm1160, %v1150, 2102212464
        %v1163 = vsel %vm1159, %v1147, %v1162
        %v1164 = vsel %vm1158, %v1161, %v1163
        %v1165 = vsel %vm1157, %v1144, %v1147
        %v1166 = vsel %vm1160, %v1153, 920167782
        %v1167 = vsel %vm1159, %v1150, %v1166
        %v1168 = vsel %vm1158, %v1165, %v1167
        %v1169 = vsel %vm1157, %v1147, %v1150
        %v1170 = vsel %vm1160, %v1156, 1326507024
        %v1171 = vsel %vm1159, %v1153, %v1170
        %v1172 = vsel %vm1158, %v1169, %v1171
        %v1173 = vshll.u32 %v1133, 8
        %v1174 = vmul.u32.u64.compose %v1173, %v1172
        %v1175 = vextract.low.u32 %v1174
        %v1176 = vextract.high.u32 %v1174
        %v1177 = vmul.u32.u64.compose %v1173, %v1168
        %v1178 = vextract.low.u32 %v1177
        %v1179 = vextract.high.u32 %v1177
        %v1180 = vmul.u32 %v1173, %v1164
        %v1181 = vadd.s32 %v1176, %v1178
        %vm1182 = vc.u32 %v1176, %v1178
        %v1183 = vadd.s32 %v1179, 1
        %v1184 = vsel %vm1182, %v1183, %v1179
        %v1185 = vadd.s32 %v1180, %v1184
        %v1186 = vadd.s32 %v1185, 536870912
        %v1187 = vshrl.u32 %v1186, 30
        %v1188 = vshll.u32 %v1187, 30
        %v1189 = vsub.s32 %v1185, %v1188
        %vm1190 = vcmp.lt.s32.totalorder %v1189, 0
        %v1191 = vsub.s32 0, %v1189
        %v1192 = vsel %vm1190, %v1191, %v1189
        %v1193 = vclz %v1192
        %v1194 = vsub.s32 %v1193, 2
        %vm1195 = vcmp.gt.s32.totalorder 0, %v1194
        %v1196 = vsel %vm1195, 0, %v1194
        %v1197 = vsub.s32 32, %v1196
        %v1198 = vshll.u32 %v1189, %v1196
        %v1199 = vshrl.u32 %v1181, %v1197
        %v1200 = vor.u32 %v1198, %v1199
        %v1201 = vsub.s32 4294967266, %v1196
        %v1202 = vadd.s32 %v1201, 127
        %v1203 = vshll.u32 %v1202, 23
        %v1204 = vor.u32 4788187, %v1203
        %v1205 = vand.u32 2147483647, %v1204
        %v1207 = vcvt.s32.f32 %v1200
        %v1208 = vmul.f32 %v1207, %v1205
        %v1209 = vxor.u32 %v1208, 2147483648
        %v1210 = vsel %vm1127, %v1209, %v1208
        %v1211 = vsub.s32 4, %v1187
        %v1212 = vsel %vm1127, %v1211, %v1187
        %v1213 = vsel %vm1126, %v998, %v1210
        %v1214 = vsel %vm1126, 0, %v1212
        %v1215 = vcosq.f32.pop %v1213
        %v1216 = vsinq.f32.pop %v1213
        %vm1217 = vweird.f32 %v998
        %v1218 = vadd.s32 %v1214, 3
        %v1219 = vand.u32 %v1218, 3
        %vm1220 = vcmp.lt.s32.totalorder %v1219, 2
        %vm1221 = vcmp.eq.s32.totalorder %v1219, 0
        %v1222 = vxor.u32 %v1216, 2147483648
        %v1223 = vsel %vm1221, %v1215, %v1222
        %vm1224 = vcmp.eq.s32.totalorder %v1219, 2
        %v1225 = vxor.u32 %v1215, 2147483648
        %v1226 = vsel %vm1224, %v1225, %v1216
        %v1227 = vsel %vm1220, %v1223, %v1226
        %v1228 = vsel %vm1217, nan, %v1227
        %v1229 = vand.u32 2147483647, %v1003
        %vm1230 = vcmp.le.f32.partialorder %v1229, 0.7853982
        %vm1231 = vcmp.lt.s32.totalorder %v1003, 0
        %v1232 = vand.u32 %v1003, 2139095040
        %v1233 = vshrl.u32 %v1232, 23
        %v1234 = vsub.s32 %v1233, 127
        %v1235 = vand.u32 2147483647, %v1003
        %v1236 = vand.u32 %v1235, 8388607
        %v1237 = vor.u32 %v1236, 8388608
        %v1238 = vsub.s32 0, %v1237
        %v1239 = vadd.s32 %v1234, 1
        %vm1240 = vcmp.gt.s32.totalorder %v1239, 0
        %v1241 = vsel %vm1240, %v1239, 0
        %v1242 = vshrl.u32 %v1241, 5
        %v1243 = vand.u32 %v1241, 31
        %v1244 = vsub.s32 32, %v1243
        %v1245 = vshrl.u32 683565275, %v1244
        %v1246 = vshll.u32 683565275, %v1243
        %v1247 = vshrl.u32 2475754826, %v1244
        %v1248 = vor.u32 %v1246, %v1247
        %v1249 = vshll.u32 2475754826, %v1243
        %v1250 = vshrl.u32 2131351028, %v1244
        %v1251 = vor.u32 %v1249, %v1250
        %v1252 = vshll.u32 2131351028, %v1243
        %v1253 = vshrl.u32 2102212464, %v1244
        %v1254 = vor.u32 %v1252, %v1253
        %v1255 = vshll.u32 2102212464, %v1243
        %v1256 = vshrl.u32 920167782, %v1244
        %v1257 = vor.u32 %v1255, %v1256
        %v1258 = vshll.u32 920167782, %v1243
        %v1259 = vshrl.u32 1326507024, %v1244
        %v1260 = vor.u32 %v1258, %v1259
        %vm1261 = vcmp.lt.s32.totalorder %v1242, 1
        %vm1262 = vcmp.lt.s32.totalorder %v1242, 2
        %vm1263 = vcmp.lt.s32.totalorder %v1242, 3
        %vm1264 = vcmp.lt.s32.totalorder %v1242, 4
        %v1265 = vsel %vm1261, %v1245, %v1248
        %v1266 = vsel %vm1264, %v1254, 2102212464
        %v1267 = vsel %vm1263, %v1251, %v1266
        %v1268 = vsel %vm1262, %v1265, %v1267
        %v1269 = vsel %vm1261, %v1248, %v1251
        %v1270 = vsel %vm1264, %v1257, 920167782
        %v1271 = vsel %vm1263, %v1254, %v1270
        %v1272 = vsel %vm1262, %v1269, %v1271
        %v1273 = vsel %vm1261, %v1251, %v1254
        %v1274 = vsel %vm1264, %v1260, 1326507024
        %v1275 = vsel %vm1263, %v1257, %v1274
        %v1276 = vsel %vm1262, %v1273, %v1275
        %v1277 = vshll.u32 %v1237, 8
        %v1278 = vmul.u32.u64.compose %v1277, %v1276
        %v1279 = vextract.low.u32 %v1278
        %v1280 = vextract.high.u32 %v1278
        %v1281 = vmul.u32.u64.compose %v1277, %v1272
        %v1282 = vextract.low.u32 %v1281
        %v1283 = vextract.high.u32 %v1281
        %v1284 = vmul.u32 %v1277, %v1268
        %v1285 = vadd.s32 %v1280, %v1282
        %vm1286 = vc.u32 %v1280, %v1282
        %v1287 = vadd.s32 %v1283, 1
        %v1288 = vsel %vm1286, %v1287, %v1283
        %v1289 = vadd.s32 %v1284, %v1288
        %v1290 = vadd.s32 %v1289, 536870912
        %v1291 = vshrl.u32 %v1290, 30
        %v1292 = vshll.u32 %v1291, 30
        %v1293 = vsub.s32 %v1289, %v1292
        %vm1294 = vcmp.lt.s32.totalorder %v1293, 0
        %v1295 = vsub.s32 0, %v1293
        %v1296 = vsel %vm1294, %v1295, %v1293
        %v1297 = vclz %v1296
        %v1298 = vsub.s32 %v1297, 2
        %vm1299 = vcmp.gt.s32.totalorder 0, %v1298
        %v1300 = vsel %vm1299, 0, %v1298
        %v1301 = vsub.s32 32, %v1300
        %v1302 = vshll.u32 %v1293, %v1300
        %v1303 = vshrl.u32 %v1285, %v1301
        %v1304 = vor.u32 %v1302, %v1303
        %v1305 = vsub.s32 4294967266, %v1300
        %v1306 = vadd.s32 %v1305, 127
        %v1307 = vshll.u32 %v1306, 23
        %v1308 = vor.u32 4788187, %v1307
        %v1309 = vand.u32 2147483647, %v1308
        %v1311 = vcvt.s32.f32 %v1304
        %v1312 = vmul.f32 %v1311, %v1309
        %v1313 = vxor.u32 %v1312, 2147483648
        %v1314 = vsel %vm1231, %v1313, %v1312
        %v1315 = vsub.s32 4, %v1291
        %v1316 = vsel %vm1231, %v1315, %v1291
        %v1317 = vsel %vm1230, %v1003, %v1314
        %v1318 = vsel %vm1230, 0, %v1316
        %v1319 = vcosq.f32.pop %v1317
        %v1320 = vsinq.f32.pop %v1317
        %vm1321 = vweird.f32 %v1003
        %v1322 = vadd.s32 %v1318, 3
        %v1323 = vand.u32 %v1322, 3
        %vm1324 = vcmp.lt.s32.totalorder %v1323, 2
        %vm1325 = vcmp.eq.s32.totalorder %v1323, 0
        %v1326 = vxor.u32 %v1320, 2147483648
        %v1327 = vsel %vm1325, %v1319, %v1326
        %vm1328 = vcmp.eq.s32.totalorder %v1323, 2
        %v1329 = vxor.u32 %v1319, 2147483648
        %v1330 = vsel %vm1328, %v1329, %v1320
        %v1331 = vsel %vm1324, %v1327, %v1330
        %v1332 = vsel %vm1321, nan, %v1331
        %v1333 = vand.u32 2147483647, %v1005
        %vm1334 = vcmp.le.f32.partialorder %v1333, 0.7853982
        %vm1335 = vcmp.lt.s32.totalorder %v1005, 0
        %v1336 = vand.u32 %v1005, 2139095040
        %v1337 = vshrl.u32 %v1336, 23
        %v1338 = vsub.s32 %v1337, 127
        %v1339 = vand.u32 2147483647, %v1005
        %v1340 = vand.u32 %v1339, 8388607
        %v1341 = vor.u32 %v1340, 8388608
        %v1342 = vsub.s32 0, %v1341
        %v1343 = vadd.s32 %v1338, 1
        %vm1344 = vcmp.gt.s32.totalorder %v1343, 0
        %v1345 = vsel %vm1344, %v1343, 0
        %v1346 = vshrl.u32 %v1345, 5
        %v1347 = vand.u32 %v1345, 31
        %v1348 = vsub.s32 32, %v1347
        %v1349 = vshrl.u32 683565275, %v1348
        %v1350 = vshll.u32 683565275, %v1347
        %v1351 = vshrl.u32 2475754826, %v1348
        %v1352 = vor.u32 %v1350, %v1351
        %v1353 = vshll.u32 2475754826, %v1347
        %v1354 = vshrl.u32 2131351028, %v1348
        %v1355 = vor.u32 %v1353, %v1354
        %v1356 = vshll.u32 2131351028, %v1347
        %v1357 = vshrl.u32 2102212464, %v1348
        %v1358 = vor.u32 %v1356, %v1357
        %v1359 = vshll.u32 2102212464, %v1347
        %v1360 = vshrl.u32 920167782, %v1348
        %v1361 = vor.u32 %v1359, %v1360
        %v1362 = vshll.u32 920167782, %v1347
        %v1363 = vshrl.u32 1326507024, %v1348
        %v1364 = vor.u32 %v1362, %v1363
        %vm1365 = vcmp.lt.s32.totalorder %v1346, 1
        %vm1366 = vcmp.lt.s32.totalorder %v1346, 2
        %vm1367 = vcmp.lt.s32.totalorder %v1346, 3
        %vm1368 = vcmp.lt.s32.totalorder %v1346, 4
        %v1369 = vsel %vm1365, %v1349, %v1352
        %v1370 = vsel %vm1368, %v1358, 2102212464
        %v1371 = vsel %vm1367, %v1355, %v1370
        %v1372 = vsel %vm1366, %v1369, %v1371
        %v1373 = vsel %vm1365, %v1352, %v1355
        %v1374 = vsel %vm1368, %v1361, 920167782
        %v1375 = vsel %vm1367, %v1358, %v1374
        %v1376 = vsel %vm1366, %v1373, %v1375
        %v1377 = vsel %vm1365, %v1355, %v1358
        %v1378 = vsel %vm1368, %v1364, 1326507024
        %v1379 = vsel %vm1367, %v1361, %v1378
        %v1380 = vsel %vm1366, %v1377, %v1379
        %v1381 = vshll.u32 %v1341, 8
        %v1382 = vmul.u32.u64.compose %v1381, %v1380
        %v1383 = vextract.low.u32 %v1382
        %v1384 = vextract.high.u32 %v1382
        %v1385 = vmul.u32.u64.compose %v1381, %v1376
        %v1386 = vextract.low.u32 %v1385
        %v1387 = vextract.high.u32 %v1385
        %v1388 = vmul.u32 %v1381, %v1372
        %v1389 = vadd.s32 %v1384, %v1386
        %vm1390 = vc.u32 %v1384, %v1386
        %v1391 = vadd.s32 %v1387, 1
        %v1392 = vsel %vm1390, %v1391, %v1387
        %v1393 = vadd.s32 %v1388, %v1392
        %v1394 = vadd.s32 %v1393, 536870912
        %v1395 = vshrl.u32 %v1394, 30
        %v1396 = vshll.u32 %v1395, 30
        %v1397 = vsub.s32 %v1393, %v1396
        %vm1398 = vcmp.lt.s32.totalorder %v1397, 0
        %v1399 = vsub.s32 0, %v1397
        %v1400 = vsel %vm1398, %v1399, %v1397
        %v1401 = vclz %v1400
        %v1402 = vsub.s32 %v1401, 2
        %vm1403 = vcmp.gt.s32.totalorder 0, %v1402
        %v1404 = vsel %vm1403, 0, %v1402
        %v1405 = vsub.s32 32, %v1404
        %v1406 = vshll.u32 %v1397, %v1404
        %v1407 = vshrl.u32 %v1389, %v1405
        %v1408 = vor.u32 %v1406, %v1407
        %v1409 = vsub.s32 4294967266, %v1404
        %v1410 = vadd.s32 %v1409, 127
        %v1411 = vshll.u32 %v1410, 23
        %v1412 = vor.u32 4788187, %v1411
        %v1413 = vand.u32 2147483647, %v1412
        %v1415 = vcvt.s32.f32 %v1408
        %v1416 = vmul.f32 %v1415, %v1413
        %v1417 = vxor.u32 %v1416, 2147483648
        %v1418 = vsel %vm1335, %v1417, %v1416
        %v1419 = vsub.s32 4, %v1395
        %v1420 = vsel %vm1335, %v1419, %v1395
        %v1421 = vsel %vm1334, %v1005, %v1418
        %v1422 = vsel %vm1334, 0, %v1420
        %v1423 = vcosq.f32.pop %v1421
        %v1424 = vsinq.f32.pop %v1421
        %vm1425 = vweird.f32 %v1005
        %v1426 = vadd.s32 %v1422, 3
        %v1427 = vand.u32 %v1426, 3
        %vm1428 = vcmp.lt.s32.totalorder %v1427, 2
        %vm1429 = vcmp.eq.s32.totalorder %v1427, 0
        %v1430 = vxor.u32 %v1424, 2147483648
        %v1431 = vsel %vm1429, %v1423, %v1430
        %vm1432 = vcmp.eq.s32.totalorder %v1427, 2
        %v1433 = vxor.u32 %v1423, 2147483648
        %v1434 = vsel %vm1432, %v1433, %v1424
        %v1435 = vsel %vm1428, %v1431, %v1434
        %v1436 = vsel %vm1425, nan, %v1435
        %v1437 = vand.u32 2147483647, %v1010
        %vm1438 = vcmp.le.f32.partialorder %v1437, 0.7853982
        %vm1439 = vcmp.lt.s32.totalorder %v1010, 0
        %v1440 = vand.u32 %v1010, 2139095040
        %v1441 = vshrl.u32 %v1440, 23
        %v1442 = vsub.s32 %v1441, 127
        %v1443 = vand.u32 2147483647, %v1010
        %v1444 = vand.u32 %v1443, 8388607
        %v1445 = vor.u32 %v1444, 8388608
        %v1446 = vsub.s32 0, %v1445
        %v1447 = vadd.s32 %v1442, 1
        %vm1448 = vcmp.gt.s32.totalorder %v1447, 0
        %v1449 = vsel %vm1448, %v1447, 0
        %v1450 = vshrl.u32 %v1449, 5
        %v1451 = vand.u32 %v1449, 31
        %v1452 = vsub.s32 32, %v1451
        %v1453 = vshrl.u32 683565275, %v1452
        %v1454 = vshll.u32 683565275, %v1451
        %v1455 = vshrl.u32 2475754826, %v1452
        %v1456 = vor.u32 %v1454, %v1455
        %v1457 = vshll.u32 2475754826, %v1451
        %v1458 = vshrl.u32 2131351028, %v1452
        %v1459 = vor.u32 %v1457, %v1458
        %v1460 = vshll.u32 2131351028, %v1451
        %v1461 = vshrl.u32 2102212464, %v1452
        %v1462 = vor.u32 %v1460, %v1461
        %v1463 = vshll.u32 2102212464, %v1451
        %v1464 = vshrl.u32 920167782, %v1452
        %v1465 = vor.u32 %v1463, %v1464
        %v1466 = vshll.u32 920167782, %v1451
        %v1467 = vshrl.u32 1326507024, %v1452
        %v1468 = vor.u32 %v1466, %v1467
        %vm1469 = vcmp.lt.s32.totalorder %v1450, 1
        %vm1470 = vcmp.lt.s32.totalorder %v1450, 2
        %vm1471 = vcmp.lt.s32.totalorder %v1450, 3
        %vm1472 = vcmp.lt.s32.totalorder %v1450, 4
        %v1473 = vsel %vm1469, %v1453, %v1456
        %v1474 = vsel %vm1472, %v1462, 2102212464
        %v1475 = vsel %vm1471, %v1459, %v1474
        %v1476 = vsel %vm1470, %v1473, %v1475
        %v1477 = vsel %vm1469, %v1456, %v1459
        %v1478 = vsel %vm1472, %v1465, 920167782
        %v1479 = vsel %vm1471, %v1462, %v1478
        %v1480 = vsel %vm1470, %v1477, %v1479
        %v1481 = vsel %vm1469, %v1459, %v1462
        %v1482 = vsel %vm1472, %v1468, 1326507024
        %v1483 = vsel %vm1471, %v1465, %v1482
        %v1484 = vsel %vm1470, %v1481, %v1483
        %v1485 = vshll.u32 %v1445, 8
        %v1486 = vmul.u32.u64.compose %v1485, %v1484
        %v1487 = vextract.low.u32 %v1486
        %v1488 = vextract.high.u32 %v1486
        %v1489 = vmul.u32.u64.compose %v1485, %v1480
        %v1490 = vextract.low.u32 %v1489
        %v1491 = vextract.high.u32 %v1489
        %v1492 = vmul.u32 %v1485, %v1476
        %v1493 = vadd.s32 %v1488, %v1490
        %vm1494 = vc.u32 %v1488, %v1490
        %v1495 = vadd.s32 %v1491, 1
        %v1496 = vsel %vm1494, %v1495, %v1491
        %v1497 = vadd.s32 %v1492, %v1496
        %v1498 = vadd.s32 %v1497, 536870912
        %v1499 = vshrl.u32 %v1498, 30
        %v1500 = vshll.u32 %v1499, 30
        %v1501 = vsub.s32 %v1497, %v1500
        %vm1502 = vcmp.lt.s32.totalorder %v1501, 0
        %v1503 = vsub.s32 0, %v1501
        %v1504 = vsel %vm1502, %v1503, %v1501
        %v1505 = vclz %v1504
        %v1506 = vsub.s32 %v1505, 2
        %vm1507 = vcmp.gt.s32.totalorder 0, %v1506
        %v1508 = vsel %vm1507, 0, %v1506
        %v1509 = vsub.s32 32, %v1508
        %v1510 = vshll.u32 %v1501, %v1508
        %v1511 = vshrl.u32 %v1493, %v1509
        %v1512 = vor.u32 %v1510, %v1511
        %v1513 = vsub.s32 4294967266, %v1508
        %v1514 = vadd.s32 %v1513, 127
        %v1515 = vshll.u32 %v1514, 23
        %v1516 = vor.u32 4788187, %v1515
        %v1517 = vand.u32 2147483647, %v1516
        %v1519 = vcvt.s32.f32 %v1512
        %v1520 = vmul.f32 %v1519, %v1517
        %v1521 = vxor.u32 %v1520, 2147483648
        %v1522 = vsel %vm1439, %v1521, %v1520
        %v1523 = vsub.s32 4, %v1499
        %v1524 = vsel %vm1439, %v1523, %v1499
        %v1525 = vsel %vm1438, %v1010, %v1522
        %v1526 = vsel %vm1438, 0, %v1524
        %v1527 = vcosq.f32.pop %v1525
        %v1528 = vsinq.f32.pop %v1525
        %vm1529 = vweird.f32 %v1010
        %v1530 = vadd.s32 %v1526, 3
        %v1531 = vand.u32 %v1530, 3
        %vm1532 = vcmp.lt.s32.totalorder %v1531, 2
        %vm1533 = vcmp.eq.s32.totalorder %v1531, 0
        %v1534 = vxor.u32 %v1528, 2147483648
        %v1535 = vsel %vm1533, %v1527, %v1534
        %vm1536 = vcmp.eq.s32.totalorder %v1531, 2
        %v1537 = vxor.u32 %v1527, 2147483648
        %v1538 = vsel %vm1536, %v1537, %v1528
        %v1539 = vsel %vm1532, %v1535, %v1538
        %v1540 = vsel %vm1529, nan, %v1539
        %v1541 = vand.u32 2147483647, %v1012
        %vm1542 = vcmp.le.f32.partialorder %v1541, 0.7853982
        %vm1543 = vcmp.lt.s32.totalorder %v1012, 0
        %v1544 = vand.u32 %v1012, 2139095040
        %v1545 = vshrl.u32 %v1544, 23
        %v1546 = vsub.s32 %v1545, 127
        %v1547 = vand.u32 2147483647, %v1012
        %v1548 = vand.u32 %v1547, 8388607
        %v1549 = vor.u32 %v1548, 8388608
        %v1550 = vsub.s32 0, %v1549
        %v1551 = vadd.s32 %v1546, 1
        %vm1552 = vcmp.gt.s32.totalorder %v1551, 0
        %v1553 = vsel %vm1552, %v1551, 0
        %v1554 = vshrl.u32 %v1553, 5
        %v1555 = vand.u32 %v1553, 31
        %v1556 = vsub.s32 32, %v1555
        %v1557 = vshrl.u32 683565275, %v1556
        %v1558 = vshll.u32 683565275, %v1555
        %v1559 = vshrl.u32 2475754826, %v1556
        %v1560 = vor.u32 %v1558, %v1559
        %v1561 = vshll.u32 2475754826, %v1555
        %v1562 = vshrl.u32 2131351028, %v1556
        %v1563 = vor.u32 %v1561, %v1562
        %v1564 = vshll.u32 2131351028, %v1555
        %v1565 = vshrl.u32 2102212464, %v1556
        %v1566 = vor.u32 %v1564, %v1565
        %v1567 = vshll.u32 2102212464, %v1555
        %v1568 = vshrl.u32 920167782, %v1556
        %v1569 = vor.u32 %v1567, %v1568
        %v1570 = vshll.u32 920167782, %v1555
        %v1571 = vshrl.u32 1326507024, %v1556
        %v1572 = vor.u32 %v1570, %v1571
        %vm1573 = vcmp.lt.s32.totalorder %v1554, 1
        %vm1574 = vcmp.lt.s32.totalorder %v1554, 2
        %vm1575 = vcmp.lt.s32.totalorder %v1554, 3
        %vm1576 = vcmp.lt.s32.totalorder %v1554, 4
        %v1577 = vsel %vm1573, %v1557, %v1560
        %v1578 = vsel %vm1576, %v1566, 2102212464
        %v1579 = vsel %vm1575, %v1563, %v1578
        %v1580 = vsel %vm1574, %v1577, %v1579
        %v1581 = vsel %vm1573, %v1560, %v1563
        %v1582 = vsel %vm1576, %v1569, 920167782
        %v1583 = vsel %vm1575, %v1566, %v1582
        %v1584 = vsel %vm1574, %v1581, %v1583
        %v1585 = vsel %vm1573, %v1563, %v1566
        %v1586 = vsel %vm1576, %v1572, 1326507024
        %v1587 = vsel %vm1575, %v1569, %v1586
        %v1588 = vsel %vm1574, %v1585, %v1587
        %v1589 = vshll.u32 %v1549, 8
        %v1590 = vmul.u32.u64.compose %v1589, %v1588
        %v1591 = vextract.low.u32 %v1590
        %v1592 = vextract.high.u32 %v1590
        %v1593 = vmul.u32.u64.compose %v1589, %v1584
        %v1594 = vextract.low.u32 %v1593
        %v1595 = vextract.high.u32 %v1593
        %v1596 = vmul.u32 %v1589, %v1580
        %v1597 = vadd.s32 %v1592, %v1594
        %vm1598 = vc.u32 %v1592, %v1594
        %v1599 = vadd.s32 %v1595, 1
        %v1600 = vsel %vm1598, %v1599, %v1595
        %v1601 = vadd.s32 %v1596, %v1600
        %v1602 = vadd.s32 %v1601, 536870912
        %v1603 = vshrl.u32 %v1602, 30
        %v1604 = vshll.u32 %v1603, 30
        %v1605 = vsub.s32 %v1601, %v1604
        %vm1606 = vcmp.lt.s32.totalorder %v1605, 0
        %v1607 = vsub.s32 0, %v1605
        %v1608 = vsel %vm1606, %v1607, %v1605
        %v1609 = vclz %v1608
        %v1610 = vsub.s32 %v1609, 2
        %vm1611 = vcmp.gt.s32.totalorder 0, %v1610
        %v1612 = vsel %vm1611, 0, %v1610
        %v1613 = vsub.s32 32, %v1612
        %v1614 = vshll.u32 %v1605, %v1612
        %v1615 = vshrl.u32 %v1597, %v1613
        %v1616 = vor.u32 %v1614, %v1615
        %v1617 = vsub.s32 4294967266, %v1612
        %v1618 = vadd.s32 %v1617, 127
        %v1619 = vshll.u32 %v1618, 23
        %v1620 = vor.u32 4788187, %v1619
        %v1621 = vand.u32 2147483647, %v1620
        %v1623 = vcvt.s32.f32 %v1616
        %v1624 = vmul.f32 %v1623, %v1621
        %v1625 = vxor.u32 %v1624, 2147483648
        %v1626 = vsel %vm1543, %v1625, %v1624
        %v1627 = vsub.s32 4, %v1603
        %v1628 = vsel %vm1543, %v1627, %v1603
        %v1629 = vsel %vm1542, %v1012, %v1626
        %v1630 = vsel %vm1542, 0, %v1628
        %v1631 = vcosq.f32.pop %v1629
        %v1632 = vsinq.f32.pop %v1629
        %vm1633 = vweird.f32 %v1012
        %v1634 = vadd.s32 %v1630, 3
        %v1635 = vand.u32 %v1634, 3
        %vm1636 = vcmp.lt.s32.totalorder %v1635, 2
        %vm1637 = vcmp.eq.s32.totalorder %v1635, 0
        %v1638 = vxor.u32 %v1632, 2147483648
        %v1639 = vsel %vm1637, %v1631, %v1638
        %vm1640 = vcmp.eq.s32.totalorder %v1635, 2
        %v1641 = vxor.u32 %v1631, 2147483648
        %v1642 = vsel %vm1640, %v1641, %v1632
        %v1643 = vsel %vm1636, %v1639, %v1642
        %v1644 = vsel %vm1633, nan, %v1643
        %v1645 = vand.u32 2147483647, %v1017
        %vm1646 = vcmp.le.f32.partialorder %v1645, 0.7853982
        %vm1647 = vcmp.lt.s32.totalorder %v1017, 0
        %v1648 = vand.u32 %v1017, 2139095040
        %v1649 = vshrl.u32 %v1648, 23
        %v1650 = vsub.s32 %v1649, 127
        %v1651 = vand.u32 2147483647, %v1017
        %v1652 = vand.u32 %v1651, 8388607
        %v1653 = vor.u32 %v1652, 8388608
        %v1654 = vsub.s32 0, %v1653
        %v1655 = vadd.s32 %v1650, 1
        %vm1656 = vcmp.gt.s32.totalorder %v1655, 0
        %v1657 = vsel %vm1656, %v1655, 0
        %v1658 = vshrl.u32 %v1657, 5
        %v1659 = vand.u32 %v1657, 31
        %v1660 = vsub.s32 32, %v1659
        %v1661 = vshrl.u32 683565275, %v1660
        %v1662 = vshll.u32 683565275, %v1659
        %v1663 = vshrl.u32 2475754826, %v1660
        %v1664 = vor.u32 %v1662, %v1663
        %v1665 = vshll.u32 2475754826, %v1659
        %v1666 = vshrl.u32 2131351028, %v1660
        %v1667 = vor.u32 %v1665, %v1666
        %v1668 = vshll.u32 2131351028, %v1659
        %v1669 = vshrl.u32 2102212464, %v1660
        %v1670 = vor.u32 %v1668, %v1669
        %v1671 = vshll.u32 2102212464, %v1659
        %v1672 = vshrl.u32 920167782, %v1660
        %v1673 = vor.u32 %v1671, %v1672
        %v1674 = vshll.u32 920167782, %v1659
        %v1675 = vshrl.u32 1326507024, %v1660
        %v1676 = vor.u32 %v1674, %v1675
        %vm1677 = vcmp.lt.s32.totalorder %v1658, 1
        %vm1678 = vcmp.lt.s32.totalorder %v1658, 2
        %vm1679 = vcmp.lt.s32.totalorder %v1658, 3
        %vm1680 = vcmp.lt.s32.totalorder %v1658, 4
        %v1681 = vsel %vm1677, %v1661, %v1664
        %v1682 = vsel %vm1680, %v1670, 2102212464
        %v1683 = vsel %vm1679, %v1667, %v1682
        %v1684 = vsel %vm1678, %v1681, %v1683
        %v1685 = vsel %vm1677, %v1664, %v1667
        %v1686 = vsel %vm1680, %v1673, 920167782
        %v1687 = vsel %vm1679, %v1670, %v1686
        %v1688 = vsel %vm1678, %v1685, %v1687
        %v1689 = vsel %vm1677, %v1667, %v1670
        %v1690 = vsel %vm1680, %v1676, 1326507024
        %v1691 = vsel %vm1679, %v1673, %v1690
        %v1692 = vsel %vm1678, %v1689, %v1691
        %v1693 = vshll.u32 %v1653, 8
        %v1694 = vmul.u32.u64.compose %v1693, %v1692
        %v1695 = vextract.low.u32 %v1694
        %v1696 = vextract.high.u32 %v1694
        %v1697 = vmul.u32.u64.compose %v1693, %v1688
        %v1698 = vextract.low.u32 %v1697
        %v1699 = vextract.high.u32 %v1697
        %v1700 = vmul.u32 %v1693, %v1684
        %v1701 = vadd.s32 %v1696, %v1698
        %vm1702 = vc.u32 %v1696, %v1698
        %v1703 = vadd.s32 %v1699, 1
        %v1704 = vsel %vm1702, %v1703, %v1699
        %v1705 = vadd.s32 %v1700, %v1704
        %v1706 = vadd.s32 %v1705, 536870912
        %v1707 = vshrl.u32 %v1706, 30
        %v1708 = vshll.u32 %v1707, 30
        %v1709 = vsub.s32 %v1705, %v1708
        %vm1710 = vcmp.lt.s32.totalorder %v1709, 0
        %v1711 = vsub.s32 0, %v1709
        %v1712 = vsel %vm1710, %v1711, %v1709
        %v1713 = vclz %v1712
        %v1714 = vsub.s32 %v1713, 2
        %vm1715 = vcmp.gt.s32.totalorder 0, %v1714
        %v1716 = vsel %vm1715, 0, %v1714
        %v1717 = vsub.s32 32, %v1716
        %v1718 = vshll.u32 %v1709, %v1716
        %v1719 = vshrl.u32 %v1701, %v1717
        %v1720 = vor.u32 %v1718, %v1719
        %v1721 = vsub.s32 4294967266, %v1716
        %v1722 = vadd.s32 %v1721, 127
        %v1723 = vshll.u32 %v1722, 23
        %v1724 = vor.u32 4788187, %v1723
        %v1725 = vand.u32 2147483647, %v1724
        %v1727 = vcvt.s32.f32 %v1720
        %v1728 = vmul.f32 %v1727, %v1725
        %v1729 = vxor.u32 %v1728, 2147483648
        %v1730 = vsel %vm1647, %v1729, %v1728
        %v1731 = vsub.s32 4, %v1707
        %v1732 = vsel %vm1647, %v1731, %v1707
        %v1733 = vsel %vm1646, %v1017, %v1730
        %v1734 = vsel %vm1646, 0, %v1732
        %v1735 = vcosq.f32.pop %v1733
        %v1736 = vsinq.f32.pop %v1733
        %vm1737 = vweird.f32 %v1017
        %v1738 = vadd.s32 %v1734, 3
        %v1739 = vand.u32 %v1738, 3
        %vm1740 = vcmp.lt.s32.totalorder %v1739, 2
        %vm1741 = vcmp.eq.s32.totalorder %v1739, 0
        %v1742 = vxor.u32 %v1736, 2147483648
        %v1743 = vsel %vm1741, %v1735, %v1742
        %vm1744 = vcmp.eq.s32.totalorder %v1739, 2
        %v1745 = vxor.u32 %v1735, 2147483648
        %v1746 = vsel %vm1744, %v1745, %v1736
        %v1747 = vsel %vm1740, %v1743, %v1746
        %v1748 = vsel %vm1737, nan, %v1747
        %v1749 = vand.u32 2147483647, %v1019
        %vm1750 = vcmp.le.f32.partialorder %v1749, 0.7853982
        %vm1751 = vcmp.lt.s32.totalorder %v1019, 0
        %v1752 = vand.u32 %v1019, 2139095040
        %v1753 = vshrl.u32 %v1752, 23
        %v1754 = vsub.s32 %v1753, 127
        %v1755 = vand.u32 2147483647, %v1019
        %v1756 = vand.u32 %v1755, 8388607
        %v1757 = vor.u32 %v1756, 8388608
        %v1758 = vsub.s32 0, %v1757
        %v1759 = vadd.s32 %v1754, 1
        %vm1760 = vcmp.gt.s32.totalorder %v1759, 0
        %v1761 = vsel %vm1760, %v1759, 0
        %v1762 = vshrl.u32 %v1761, 5
        %v1763 = vand.u32 %v1761, 31
        %v1764 = vsub.s32 32, %v1763
        %v1765 = vshrl.u32 683565275, %v1764
        %v1766 = vshll.u32 683565275, %v1763
        %v1767 = vshrl.u32 2475754826, %v1764
        %v1768 = vor.u32 %v1766, %v1767
        %v1769 = vshll.u32 2475754826, %v1763
        %v1770 = vshrl.u32 2131351028, %v1764
        %v1771 = vor.u32 %v1769, %v1770
        %v1772 = vshll.u32 2131351028, %v1763
        %v1773 = vshrl.u32 2102212464, %v1764
        %v1774 = vor.u32 %v1772, %v1773
        %v1775 = vshll.u32 2102212464, %v1763
        %v1776 = vshrl.u32 920167782, %v1764
        %v1777 = vor.u32 %v1775, %v1776
        %v1778 = vshll.u32 920167782, %v1763
        %v1779 = vshrl.u32 1326507024, %v1764
        %v1780 = vor.u32 %v1778, %v1779
        %vm1781 = vcmp.lt.s32.totalorder %v1762, 1
        %vm1782 = vcmp.lt.s32.totalorder %v1762, 2
        %vm1783 = vcmp.lt.s32.totalorder %v1762, 3
        %vm1784 = vcmp.lt.s32.totalorder %v1762, 4
        %v1785 = vsel %vm1781, %v1765, %v1768
        %v1786 = vsel %vm1784, %v1774, 2102212464
        %v1787 = vsel %vm1783, %v1771, %v1786
        %v1788 = vsel %vm1782, %v1785, %v1787
        %v1789 = vsel %vm1781, %v1768, %v1771
        %v1790 = vsel %vm1784, %v1777, 920167782
        %v1791 = vsel %vm1783, %v1774, %v1790
        %v1792 = vsel %vm1782, %v1789, %v1791
        %v1793 = vsel %vm1781, %v1771, %v1774
        %v1794 = vsel %vm1784, %v1780, 1326507024
        %v1795 = vsel %vm1783, %v1777, %v1794
        %v1796 = vsel %vm1782, %v1793, %v1795
        %v1797 = vshll.u32 %v1757, 8
        %v1798 = vmul.u32.u64.compose %v1797, %v1796
        %v1799 = vextract.low.u32 %v1798
        %v1800 = vextract.high.u32 %v1798
        %v1801 = vmul.u32.u64.compose %v1797, %v1792
        %v1802 = vextract.low.u32 %v1801
        %v1803 = vextract.high.u32 %v1801
        %v1804 = vmul.u32 %v1797, %v1788
        %v1805 = vadd.s32 %v1800, %v1802
        %vm1806 = vc.u32 %v1800, %v1802
        %v1807 = vadd.s32 %v1803, 1
        %v1808 = vsel %vm1806, %v1807, %v1803
        %v1809 = vadd.s32 %v1804, %v1808
        %v1810 = vadd.s32 %v1809, 536870912
        %v1811 = vshrl.u32 %v1810, 30
        %v1812 = vshll.u32 %v1811, 30
        %v1813 = vsub.s32 %v1809, %v1812
        %vm1814 = vcmp.lt.s32.totalorder %v1813, 0
        %v1815 = vsub.s32 0, %v1813
        %v1816 = vsel %vm1814, %v1815, %v1813
        %v1817 = vclz %v1816
        %v1818 = vsub.s32 %v1817, 2
        %vm1819 = vcmp.gt.s32.totalorder 0, %v1818
        %v1820 = vsel %vm1819, 0, %v1818
        %v1821 = vsub.s32 32, %v1820
        %v1822 = vshll.u32 %v1813, %v1820
        %v1823 = vshrl.u32 %v1805, %v1821
        %v1824 = vor.u32 %v1822, %v1823
        %v1825 = vsub.s32 4294967266, %v1820
        %v1826 = vadd.s32 %v1825, 127
        %v1827 = vshll.u32 %v1826, 23
        %v1828 = vor.u32 4788187, %v1827
        %v1829 = vand.u32 2147483647, %v1828
        %v1831 = vcvt.s32.f32 %v1824
        %v1832 = vmul.f32 %v1831, %v1829
        %v1833 = vxor.u32 %v1832, 2147483648
        %v1834 = vsel %vm1751, %v1833, %v1832
        %v1835 = vsub.s32 4, %v1811
        %v1836 = vsel %vm1751, %v1835, %v1811
        %v1837 = vsel %vm1750, %v1019, %v1834
        %v1838 = vsel %vm1750, 0, %v1836
        %v1839 = vcosq.f32.pop %v1837
        %v1840 = vsinq.f32.pop %v1837
        %vm1841 = vweird.f32 %v1019
        %v1842 = vadd.s32 %v1838, 3
        %v1843 = vand.u32 %v1842, 3
        %vm1844 = vcmp.lt.s32.totalorder %v1843, 2
        %vm1845 = vcmp.eq.s32.totalorder %v1843, 0
        %v1846 = vxor.u32 %v1840, 2147483648
        %v1847 = vsel %vm1845, %v1839, %v1846
        %vm1848 = vcmp.eq.s32.totalorder %v1843, 2
        %v1849 = vxor.u32 %v1839, 2147483648
        %v1850 = vsel %vm1848, %v1849, %v1840
        %v1851 = vsel %vm1844, %v1847, %v1850
        %v1852 = vsel %vm1841, nan, %v1851
        %v1853 = vld [vmem:[%s3] sm:$0xff]
        %v1854 = vld [vmem:[%s3 + $0x8] sm:$0xff]
        %v1855 = vld [vmem:[%s3 + $0x10] sm:$0xff]
        %v1856 = vld [vmem:[%s3 + $0x18] sm:$0xff]
        %v1857 = vld [vmem:[%s4] sm:$0xff]
        %v1858 = vld [vmem:[%s4 + $0x8] sm:$0xff]
        %v1859 = vld [vmem:[%s4 + $0x10] sm:$0xff]
        %v1860 = vld [vmem:[%s4 + $0x18] sm:$0xff]
        %1862 = vset.pattern.permute.xlu0 0
        %1863 = vperm.xlu0 %1862, %v1857
        %v1864 = vpop.permute.xlu0 %1863
        %1867 = vset.pattern.permute.xlu0 0
        %1868 = vperm.xlu0 %1867, %v1858
        %v1869 = vpop.permute.xlu0 %1868
        %1872 = vset.pattern.permute.xlu0 0
        %1873 = vperm.xlu0 %1872, %v1859
        %v1874 = vpop.permute.xlu0 %1873
        %1877 = vset.pattern.permute.xlu0 0
        %1878 = vperm.xlu0 %1877, %v1860
        %v1879 = vpop.permute.xlu0 %1878
        %vm1881 = vcmask 261120
        %v1883 = vsel %vm1881, %v1853, 0
        %v1886 = vsel %vm1881, %v1854, 0
        %v1889 = vsel %vm1881, %v1855, 0
        %v1892 = vsel %vm1881, %v1856, 0
        %1894 = vmatprep.subr.mxu0 0.0
        %1895 = vmatpush1.msra.mxu0 0.0
        %1896 = vmatprep.subr.mxu0 0.0
        %1897 = vmatpush1.msra.mxu0 0.0
        %1898 = vmatprep.subr.mxu0 0.0
        %1899 = vmatpush1.msra.mxu0 0.0
        %1900 = vmatprep.subr.mxu0 0.0
        %1901 = vmatpush1.msra.mxu0 0.0
        %1902 = vmatprep.subr.mxu0 0.0
        %1903 = vmatpush1.msra.mxu0 0.0
        %1904 = vmatprep.subr.mxu0 0.0
        %1905 = vmatpush1.msra.mxu0 0.0
        %1906 = vmatprep.subr.mxu0 0.0
        %1907 = vmatpush1.msra.mxu0 0.0
        %1908 = vmatprep.subr.mxu0 0.0
        %1909 = vmatpush1.msra.mxu0 0.0
        %1910 = vmatprep.subr.mxu0 0.0
        %1911 = vmatpush1.msra.mxu0 0.0
        %1912 = vmatprep.subr.mxu0 0.0
        %1913 = vmatpush1.msra.mxu0 0.0
        %1914 = vmatprep.subr.mxu0 0.0
        %1915 = vmatpush1.msra.mxu0 0.0
        %1916 = vmatprep.subr.mxu0 0.0
        %1917 = vmatpush1.msra.mxu0 0.0
        %v1918 = vand.u32 %v1852, 4294901760
        %1919 = vmatprep.subr.mxu0 %v1918
        %v1920 = vand.u32 %v1748, 4294901760
        %1921 = vmatpush1.msra.mxu0 %v1920
        %v1922 = vand.u32 %v1644, 4294901760
        %1923 = vmatprep.subr.mxu0 %v1922
        %v1924 = vand.u32 %v1540, 4294901760
        %1925 = vmatpush1.msra.mxu0 %v1924
        %v1926 = vand.u32 %v1436, 4294901760
        %1927 = vmatprep.subr.mxu0 %v1926
        %v1928 = vand.u32 %v1332, 4294901760
        %1929 = vmatpush1.msra.mxu0 %v1928
        %v1930 = vand.u32 %v1228, 4294901760
        %1931 = vmatprep.subr.mxu0 %v1930
        %v1932 = vand.u32 %v1124, 4294901760
        %1933 = vmatpush1.msra.mxu0 %v1932
        %1934 = vmatprep.subr.mxu0 0.0
        %1935 = vmatpush2.msra.mxu0 0.0
        %1936 = vmatprep.subr.mxu0 0.0
        %1937 = vmatpush2.msra.mxu0 0.0
        %1938 = vmatprep.subr.mxu0 0.0
        %1939 = vmatpush2.msra.mxu0 0.0
        %1940 = vmatprep.subr.mxu0 0.0
        %1941 = vmatpush2.msra.mxu0 0.0
        %1942 = vmatprep.subr.mxu0 0.0
        %1943 = vmatpush2.msra.mxu0 0.0
        %1944 = vmatprep.subr.mxu0 0.0
        %1945 = vmatpush2.msra.mxu0 0.0
        %1946 = vmatprep.subr.mxu0 0.0
        %1947 = vmatpush2.msra.mxu0 0.0
        %1948 = vmatprep.subr.mxu0 0.0
        %1949 = vmatpush2.msra.mxu0 0.0
        %1950 = vmatprep.subr.mxu0 0.0
        %1951 = vmatpush2.msra.mxu0 0.0
        %1952 = vmatprep.subr.mxu0 0.0
        %1953 = vmatpush2.msra.mxu0 0.0
        %1954 = vmatprep.subr.mxu0 0.0
        %1955 = vmatpush2.msra.mxu0 0.0
        %1956 = vmatprep.subr.mxu0 0.0
        %1957 = vmatpush2.msra.mxu0 0.0
        %1958 = vmatprep.subr.mxu0 0.0
        %1959 = vmatpush2.msra.mxu0 0.0
        %1960 = vmatprep.subr.mxu0 0.0
        %1961 = vmatpush2.msra.mxu0 0.0
        %1962 = vmatprep.subr.mxu0 0.0
        %1963 = vmatpush2.msra.mxu0 0.0
        %1964 = vmatprep.subr.mxu0 0.0
        %1965 = vmatpush2.msra.mxu0 0.0
        %1966 = vmatprep.mubr.f32.mxu0 0.0
        %v1967 = vand.u32 %v1883, 4294901760
        %v1968 = vsub.f32 %v1883, %v1967
        %v1969 = vand.u32 %v1968, 4294901760
        %v1970 = vsub.f32 %v1968, %v1969
        %v1971 = vand.u32 %v1970, 4294901760
        %1972 = vmatmul.mubr.f32.gmra.mxu0 %v1971
        %v1973 = vpop.f32.mrf.mxu0
        %v1974 = vadd.f32 %v1864, %v1973
        %v1975 = vpop.f32.mrf.mxu0
        %v1976 = vadd.f32 %v1864, %v1975
        %1977 = vmatprep.mubr.f32.mxu0 0.0
        %v1978 = vand.u32 %v1886, 4294901760
        %v1979 = vsub.f32 %v1886, %v1978
        %v1980 = vand.u32 %v1979, 4294901760
        %v1981 = vsub.f32 %v1979, %v1980
        %v1982 = vand.u32 %v1981, 4294901760
        %1983 = vmatmul.mubr.f32.gmra.mxu0 %v1982
        %v1984 = vpop.f32.mrf.mxu0
        %v1985 = vadd.f32 %v1869, %v1984
        %v1986 = vpop.f32.mrf.mxu0
        %v1987 = vadd.f32 %v1869, %v1986
        %1988 = vmatprep.mubr.f32.mxu0 0.0
        %v1989 = vand.u32 %v1889, 4294901760
        %v1990 = vsub.f32 %v1889, %v1989
        %v1991 = vand.u32 %v1990, 4294901760
        %v1992 = vsub.f32 %v1990, %v1991
        %v1993 = vand.u32 %v1992, 4294901760
        %1994 = vmatmul.mubr.f32.gmra.mxu0 %v1993
        %v1995 = vpop.f32.mrf.mxu0
        %v1996 = vadd.f32 %v1874, %v1995
        %v1997 = vpop.f32.mrf.mxu0
        %v1998 = vadd.f32 %v1874, %v1997
        %1999 = vmatprep.mubr.f32.mxu0 0.0
        %v2000 = vand.u32 %v1892, 4294901760
        %v2001 = vsub.f32 %v1892, %v2000
        %v2002 = vand.u32 %v2001, 4294901760
        %v2003 = vsub.f32 %v2001, %v2002
        %v2004 = vand.u32 %v2003, 4294901760
        %2005 = vmatmul.mubr.f32.gmra.mxu0 %v2004
        %v2006 = vpop.f32.mrf.mxu0
        %v2007 = vadd.f32 %v1879, %v2006
        %v2008 = vpop.f32.mrf.mxu0
        %v2009 = vadd.f32 %v1879, %v2008
        %2010 = vdwg.mxu0
        %2011 = vmatprep.subr.mxu0 0.0
        %2012 = vmatpush1.msra.mxu0 0.0
        %2013 = vmatprep.subr.mxu0 0.0
        %2014 = vmatpush1.msra.mxu0 0.0
        %2015 = vmatprep.subr.mxu0 0.0
        %2016 = vmatpush1.msra.mxu0 0.0
        %2017 = vmatprep.subr.mxu0 0.0
        %2018 = vmatpush1.msra.mxu0 0.0
        %2019 = vmatprep.subr.mxu0 0.0
        %2020 = vmatpush1.msra.mxu0 0.0
        %2021 = vmatprep.subr.mxu0 0.0
        %2022 = vmatpush1.msra.mxu0 0.0
        %2023 = vmatprep.subr.mxu0 0.0
        %2024 = vmatpush1.msra.mxu0 0.0
        %2025 = vmatprep.subr.mxu0 0.0
        %2026 = vmatpush1.msra.mxu0 0.0
        %2027 = vmatprep.subr.mxu0 0.0
        %2028 = vmatpush1.msra.mxu0 0.0
        %2029 = vmatprep.subr.mxu0 0.0
        %2030 = vmatpush1.msra.mxu0 0.0
        %2031 = vmatprep.subr.mxu0 0.0
        %2032 = vmatpush1.msra.mxu0 0.0
        %2033 = vmatprep.subr.mxu0 0.0
        %2034 = vmatpush1.msra.mxu0 0.0
        %v2035 = vand.u32 %v1852, 4294901760
        %v2036 = vsub.f32 %v1852, %v2035
        %v2037 = vand.u32 %v2036, 4294901760
        %v2038 = vsub.f32 %v2036, %v2037
        %v2039 = vand.u32 %v2038, 4294901760
        %2040 = vmatprep.subr.mxu0 %v2039
        %v2041 = vand.u32 %v1748, 4294901760
        %v2042 = vsub.f32 %v1748, %v2041
        %v2043 = vand.u32 %v2042, 4294901760
        %v2044 = vsub.f32 %v2042, %v2043
        %v2045 = vand.u32 %v2044, 4294901760
        %2046 = vmatpush1.msra.mxu0 %v2045
        %v2047 = vand.u32 %v1644, 4294901760
        %v2048 = vsub.f32 %v1644, %v2047
        %v2049 = vand.u32 %v2048, 4294901760
        %v2050 = vsub.f32 %v2048, %v2049
        %v2051 = vand.u32 %v2050, 4294901760
        %2052 = vmatprep.subr.mxu0 %v2051
        %v2053 = vand.u32 %v1540, 4294901760
        %v2054 = vsub.f32 %v1540, %v2053
        %v2055 = vand.u32 %v2054, 4294901760
        %v2056 = vsub.f32 %v2054, %v2055
        %v2057 = vand.u32 %v2056, 4294901760
        %2058 = vmatpush1.msra.mxu0 %v2057
        %v2059 = vand.u32 %v1436, 4294901760
        %v2060 = vsub.f32 %v1436, %v2059
        %v2061 = vand.u32 %v2060, 4294901760
        %v2062 = vsub.f32 %v2060, %v2061
        %v2063 = vand.u32 %v2062, 4294901760
        %2064 = vmatprep.subr.mxu0 %v2063
        %v2065 = vand.u32 %v1332, 4294901760
        %v2066 = vsub.f32 %v1332, %v2065
        %v2067 = vand.u32 %v2066, 4294901760
        %v2068 = vsub.f32 %v2066, %v2067
        %v2069 = vand.u32 %v2068, 4294901760
        %2070 = vmatpush1.msra.mxu0 %v2069
        %v2071 = vand.u32 %v1228, 4294901760
        %v2072 = vsub.f32 %v1228, %v2071
        %v2073 = vand.u32 %v2072, 4294901760
        %v2074 = vsub.f32 %v2072, %v2073
        %v2075 = vand.u32 %v2074, 4294901760
        %2076 = vmatprep.subr.mxu0 %v2075
        %v2077 = vand.u32 %v1124, 4294901760
        %v2078 = vsub.f32 %v1124, %v2077
        %v2079 = vand.u32 %v2078, 4294901760
        %v2080 = vsub.f32 %v2078, %v2079
        %v2081 = vand.u32 %v2080, 4294901760
        %2082 = vmatpush1.msra.mxu0 %v2081
        %2083 = vmatprep.subr.mxu0 0.0
        %2084 = vmatpush2.msra.mxu0 0.0
        %2085 = vmatprep.subr.mxu0 0.0
        %2086 = vmatpush2.msra.mxu0 0.0
        %2087 = vmatprep.subr.mxu0 0.0
        %2088 = vmatpush2.msra.mxu0 0.0
        %2089 = vmatprep.subr.mxu0 0.0
        %2090 = vmatpush2.msra.mxu0 0.0
        %2091 = vmatprep.subr.mxu0 0.0
        %2092 = vmatpush2.msra.mxu0 0.0
        %2093 = vmatprep.subr.mxu0 0.0
        %2094 = vmatpush2.msra.mxu0 0.0
        %2095 = vmatprep.subr.mxu0 0.0
        %2096 = vmatpush2.msra.mxu0 0.0
        %2097 = vmatprep.subr.mxu0 0.0
        %2098 = vmatpush2.msra.mxu0 0.0
        %2099 = vmatprep.subr.mxu0 0.0
        %2100 = vmatpush2.msra.mxu0 0.0
        %2101 = vmatprep.subr.mxu0 0.0
        %2102 = vmatpush2.msra.mxu0 0.0
        %2103 = vmatprep.subr.mxu0 0.0
        %2104 = vmatpush2.msra.mxu0 0.0
        %2105 = vmatprep.subr.mxu0 0.0
        %2106 = vmatpush2.msra.mxu0 0.0
        %2107 = vmatprep.subr.mxu0 0.0
        %2108 = vmatpush2.msra.mxu0 0.0
        %2109 = vmatprep.subr.mxu0 0.0
        %2110 = vmatpush2.msra.mxu0 0.0
        %2111 = vmatprep.subr.mxu0 0.0
        %2112 = vmatpush2.msra.mxu0 0.0
        %2113 = vmatprep.subr.mxu0 0.0
        %2114 = vmatpush2.msra.mxu0 0.0
        %2115 = vmatprep.mubr.f32.mxu0 0.0
        %v2116 = vand.u32 %v1883, 4294901760
        %2117 = vmatmul.mubr.f32.gmra.mxu0 %v2116
        %v2118 = vpop.f32.mrf.mxu0
        %v2119 = vadd.f32 %v1974, %v2118
        %v2120 = vpop.f32.mrf.mxu0
        %v2121 = vadd.f32 %v1976, %v2120
        %2122 = vmatprep.mubr.f32.mxu0 0.0
        %v2123 = vand.u32 %v1886, 4294901760
        %2124 = vmatmul.mubr.f32.gmra.mxu0 %v2123
        %v2125 = vpop.f32.mrf.mxu0
        %v2126 = vadd.f32 %v1985, %v2125
        %v2127 = vpop.f32.mrf.mxu0
        %v2128 = vadd.f32 %v1987, %v2127
        %2129 = vmatprep.mubr.f32.mxu0 0.0
        %v2130 = vand.u32 %v1889, 4294901760
        %2131 = vmatmul.mubr.f32.gmra.mxu0 %v2130
        %v2132 = vpop.f32.mrf.mxu0
        %v2133 = vadd.f32 %v1996, %v2132
        %v2134 = vpop.f32.mrf.mxu0
        %v2135 = vadd.f32 %v1998, %v2134
        %2136 = vmatprep.mubr.f32.mxu0 0.0
        %v2137 = vand.u32 %v1892, 4294901760
        %2138 = vmatmul.mubr.f32.gmra.mxu0 %v2137
        %v2139 = vpop.f32.mrf.mxu0
        %v2140 = vadd.f32 %v2007, %v2139
        %v2141 = vpop.f32.mrf.mxu0
        %v2142 = vadd.f32 %v2009, %v2141
        %2143 = vdwg.mxu0
        %2144 = vmatprep.subr.mxu0 0.0
        %2145 = vmatpush1.msra.mxu0 0.0
        %2146 = vmatprep.subr.mxu0 0.0
        %2147 = vmatpush1.msra.mxu0 0.0
        %2148 = vmatprep.subr.mxu0 0.0
        %2149 = vmatpush1.msra.mxu0 0.0
        %2150 = vmatprep.subr.mxu0 0.0
        %2151 = vmatpush1.msra.mxu0 0.0
        %2152 = vmatprep.subr.mxu0 0.0
        %2153 = vmatpush1.msra.mxu0 0.0
        %2154 = vmatprep.subr.mxu0 0.0
        %2155 = vmatpush1.msra.mxu0 0.0
        %2156 = vmatprep.subr.mxu0 0.0
        %2157 = vmatpush1.msra.mxu0 0.0
        %2158 = vmatprep.subr.mxu0 0.0
        %2159 = vmatpush1.msra.mxu0 0.0
        %2160 = vmatprep.subr.mxu0 0.0
        %2161 = vmatpush1.msra.mxu0 0.0
        %2162 = vmatprep.subr.mxu0 0.0
        %2163 = vmatpush1.msra.mxu0 0.0
        %2164 = vmatprep.subr.mxu0 0.0
        %2165 = vmatpush1.msra.mxu0 0.0
        %2166 = vmatprep.subr.mxu0 0.0
        %2167 = vmatpush1.msra.mxu0 0.0
        %v2168 = vand.u32 %v1852, 4294901760
        %v2169 = vsub.f32 %v1852, %v2168
        %2170 = vmatprep.subr.mxu0 %v2169
        %v2171 = vand.u32 %v1748, 4294901760
        %v2172 = vsub.f32 %v1748, %v2171
        %2173 = vmatpush1.msra.mxu0 %v2172
        %v2174 = vand.u32 %v1644, 4294901760
        %v2175 = vsub.f32 %v1644, %v2174
        %2176 = vmatprep.subr.mxu0 %v2175
        %v2177 = vand.u32 %v1540, 4294901760
        %v2178 = vsub.f32 %v1540, %v2177
        %2179 = vmatpush1.msra.mxu0 %v2178
        %v2180 = vand.u32 %v1436, 4294901760
        %v2181 = vsub.f32 %v1436, %v2180
        %2182 = vmatprep.subr.mxu0 %v2181
        %v2183 = vand.u32 %v1332, 4294901760
        %v2184 = vsub.f32 %v1332, %v2183
        %2185 = vmatpush1.msra.mxu0 %v2184
        %v2186 = vand.u32 %v1228, 4294901760
        %v2187 = vsub.f32 %v1228, %v2186
        %2188 = vmatprep.subr.mxu0 %v2187
        %v2189 = vand.u32 %v1124, 4294901760
        %v2190 = vsub.f32 %v1124, %v2189
        %2191 = vmatpush1.msra.mxu0 %v2190
        %2192 = vmatprep.subr.mxu0 0.0
        %2193 = vmatpush2.msra.mxu0 0.0
        %2194 = vmatprep.subr.mxu0 0.0
        %2195 = vmatpush2.msra.mxu0 0.0
        %2196 = vmatprep.subr.mxu0 0.0
        %2197 = vmatpush2.msra.mxu0 0.0
        %2198 = vmatprep.subr.mxu0 0.0
        %2199 = vmatpush2.msra.mxu0 0.0
        %2200 = vmatprep.subr.mxu0 0.0
        %2201 = vmatpush2.msra.mxu0 0.0
        %2202 = vmatprep.subr.mxu0 0.0
        %2203 = vmatpush2.msra.mxu0 0.0
        %2204 = vmatprep.subr.mxu0 0.0
        %2205 = vmatpush2.msra.mxu0 0.0
        %2206 = vmatprep.subr.mxu0 0.0
        %2207 = vmatpush2.msra.mxu0 0.0
        %2208 = vmatprep.subr.mxu0 0.0
        %2209 = vmatpush2.msra.mxu0 0.0
        %2210 = vmatprep.subr.mxu0 0.0
        %2211 = vmatpush2.msra.mxu0 0.0
        %2212 = vmatprep.subr.mxu0 0.0
        %2213 = vmatpush2.msra.mxu0 0.0
        %2214 = vmatprep.subr.mxu0 0.0
        %2215 = vmatpush2.msra.mxu0 0.0
        %2216 = vmatprep.subr.mxu0 0.0
        %2217 = vmatpush2.msra.mxu0 0.0
        %2218 = vmatprep.subr.mxu0 0.0
        %2219 = vmatpush2.msra.mxu0 0.0
        %2220 = vmatprep.subr.mxu0 0.0
        %2221 = vmatpush2.msra.mxu0 0.0
        %2222 = vmatprep.subr.mxu0 0.0
        %2223 = vmatpush2.msra.mxu0 0.0
        %2224 = vmatprep.mubr.f32.mxu0 0.0
        %v2225 = vand.u32 %v1883, 4294901760
        %v2226 = vsub.f32 %v1883, %v2225
        %2227 = vmatmul.mubr.f32.gmra.mxu0 %v2226
        %v2228 = vpop.f32.mrf.mxu0
        %v2229 = vadd.f32 %v2119, %v2228
        %v2230 = vpop.f32.mrf.mxu0
        %v2231 = vadd.f32 %v2121, %v2230
        %2232 = vmatprep.mubr.f32.mxu0 0.0
        %v2233 = vand.u32 %v1886, 4294901760
        %v2234 = vsub.f32 %v1886, %v2233
        %2235 = vmatmul.mubr.f32.gmra.mxu0 %v2234
        %v2236 = vpop.f32.mrf.mxu0
        %v2237 = vadd.f32 %v2126, %v2236
        %v2238 = vpop.f32.mrf.mxu0
        %v2239 = vadd.f32 %v2128, %v2238
        %2240 = vmatprep.mubr.f32.mxu0 0.0
        %v2241 = vand.u32 %v1889, 4294901760
        %v2242 = vsub.f32 %v1889, %v2241
        %2243 = vmatmul.mubr.f32.gmra.mxu0 %v2242
        %v2244 = vpop.f32.mrf.mxu0
        %v2245 = vadd.f32 %v2133, %v2244
        %v2246 = vpop.f32.mrf.mxu0
        %v2247 = vadd.f32 %v2135, %v2246
        %2248 = vmatprep.mubr.f32.mxu0 0.0
        %v2249 = vand.u32 %v1892, 4294901760
        %v2250 = vsub.f32 %v1892, %v2249
        %2251 = vmatmul.mubr.f32.gmra.mxu0 %v2250
        %v2252 = vpop.f32.mrf.mxu0
        %v2253 = vadd.f32 %v2140, %v2252
        %v2254 = vpop.f32.mrf.mxu0
        %v2255 = vadd.f32 %v2142, %v2254
        %2256 = vdwg.mxu0
        %2257 = vmatprep.subr.mxu0 0.0
        %2258 = vmatpush1.msra.mxu0 0.0
        %2259 = vmatprep.subr.mxu0 0.0
        %2260 = vmatpush1.msra.mxu0 0.0
        %2261 = vmatprep.subr.mxu0 0.0
        %2262 = vmatpush1.msra.mxu0 0.0
        %2263 = vmatprep.subr.mxu0 0.0
        %2264 = vmatpush1.msra.mxu0 0.0
        %2265 = vmatprep.subr.mxu0 0.0
        %2266 = vmatpush1.msra.mxu0 0.0
        %2267 = vmatprep.subr.mxu0 0.0
        %2268 = vmatpush1.msra.mxu0 0.0
        %2269 = vmatprep.subr.mxu0 0.0
        %2270 = vmatpush1.msra.mxu0 0.0
        %2271 = vmatprep.subr.mxu0 0.0
        %2272 = vmatpush1.msra.mxu0 0.0
        %2273 = vmatprep.subr.mxu0 0.0
        %2274 = vmatpush1.msra.mxu0 0.0
        %2275 = vmatprep.subr.mxu0 0.0
        %2276 = vmatpush1.msra.mxu0 0.0
        %2277 = vmatprep.subr.mxu0 0.0
        %2278 = vmatpush1.msra.mxu0 0.0
        %2279 = vmatprep.subr.mxu0 0.0
        %2280 = vmatpush1.msra.mxu0 0.0
        %v2281 = vand.u32 %v1852, 4294901760
        %2282 = vmatprep.subr.mxu0 %v2281
        %v2283 = vand.u32 %v1748, 4294901760
        %2284 = vmatpush1.msra.mxu0 %v2283
        %v2285 = vand.u32 %v1644, 4294901760
        %2286 = vmatprep.subr.mxu0 %v2285
        %v2287 = vand.u32 %v1540, 4294901760
        %2288 = vmatpush1.msra.mxu0 %v2287
        %v2289 = vand.u32 %v1436, 4294901760
        %2290 = vmatprep.subr.mxu0 %v2289
        %v2291 = vand.u32 %v1332, 4294901760
        %2292 = vmatpush1.msra.mxu0 %v2291
        %v2293 = vand.u32 %v1228, 4294901760
        %2294 = vmatprep.subr.mxu0 %v2293
        %v2295 = vand.u32 %v1124, 4294901760
        %2296 = vmatpush1.msra.mxu0 %v2295
        %2297 = vmatprep.subr.mxu0 0.0
        %2298 = vmatpush2.msra.mxu0 0.0
        %2299 = vmatprep.subr.mxu0 0.0
        %2300 = vmatpush2.msra.mxu0 0.0
        %2301 = vmatprep.subr.mxu0 0.0
        %2302 = vmatpush2.msra.mxu0 0.0
        %2303 = vmatprep.subr.mxu0 0.0
        %2304 = vmatpush2.msra.mxu0 0.0
        %2305 = vmatprep.subr.mxu0 0.0
        %2306 = vmatpush2.msra.mxu0 0.0
        %2307 = vmatprep.subr.mxu0 0.0
        %2308 = vmatpush2.msra.mxu0 0.0
        %2309 = vmatprep.subr.mxu0 0.0
        %2310 = vmatpush2.msra.mxu0 0.0
        %2311 = vmatprep.subr.mxu0 0.0
        %2312 = vmatpush2.msra.mxu0 0.0
        %2313 = vmatprep.subr.mxu0 0.0
        %2314 = vmatpush2.msra.mxu0 0.0
        %2315 = vmatprep.subr.mxu0 0.0
        %2316 = vmatpush2.msra.mxu0 0.0
        %2317 = vmatprep.subr.mxu0 0.0
        %2318 = vmatpush2.msra.mxu0 0.0
        %2319 = vmatprep.subr.mxu0 0.0
        %2320 = vmatpush2.msra.mxu0 0.0
        %2321 = vmatprep.subr.mxu0 0.0
        %2322 = vmatpush2.msra.mxu0 0.0
        %2323 = vmatprep.subr.mxu0 0.0
        %2324 = vmatpush2.msra.mxu0 0.0
        %2325 = vmatprep.subr.mxu0 0.0
        %2326 = vmatpush2.msra.mxu0 0.0
        %2327 = vmatprep.subr.mxu0 0.0
        %2328 = vmatpush2.msra.mxu0 0.0
        %2329 = vmatprep.mubr.f32.mxu0 0.0
        %v2330 = vand.u32 %v1883, 4294901760
        %v2331 = vsub.f32 %v1883, %v2330
        %v2332 = vand.u32 %v2331, 4294901760
        %2333 = vmatmul.mubr.f32.gmra.mxu0 %v2332
        %v2334 = vpop.f32.mrf.mxu0
        %v2335 = vadd.f32 %v2229, %v2334
        %v2336 = vpop.f32.mrf.mxu0
        %v2337 = vadd.f32 %v2231, %v2336
        %2338 = vmatprep.mubr.f32.mxu0 0.0
        %v2339 = vand.u32 %v1886, 4294901760
        %v2340 = vsub.f32 %v1886, %v2339
        %v2341 = vand.u32 %v2340, 4294901760
        %2342 = vmatmul.mubr.f32.gmra.mxu0 %v2341
        %v2343 = vpop.f32.mrf.mxu0
        %v2344 = vadd.f32 %v2237, %v2343
        %v2345 = vpop.f32.mrf.mxu0
        %v2346 = vadd.f32 %v2239, %v2345
        %2347 = vmatprep.mubr.f32.mxu0 0.0
        %v2348 = vand.u32 %v1889, 4294901760
        %v2349 = vsub.f32 %v1889, %v2348
        %v2350 = vand.u32 %v2349, 4294901760
        %2351 = vmatmul.mubr.f32.gmra.mxu0 %v2350
        %v2352 = vpop.f32.mrf.mxu0
        %v2353 = vadd.f32 %v2245, %v2352
        %v2354 = vpop.f32.mrf.mxu0
        %v2355 = vadd.f32 %v2247, %v2354
        %2356 = vmatprep.mubr.f32.mxu0 0.0
        %v2357 = vand.u32 %v1892, 4294901760
        %v2358 = vsub.f32 %v1892, %v2357
        %v2359 = vand.u32 %v2358, 4294901760
        %2360 = vmatmul.mubr.f32.gmra.mxu0 %v2359
        %v2361 = vpop.f32.mrf.mxu0
        %v2362 = vadd.f32 %v2253, %v2361
        %v2363 = vpop.f32.mrf.mxu0
        %v2364 = vadd.f32 %v2255, %v2363
        %2365 = vdwg.mxu0
        %2366 = vmatprep.subr.mxu0 0.0
        %2367 = vmatpush1.msra.mxu0 0.0
        %2368 = vmatprep.subr.mxu0 0.0
        %2369 = vmatpush1.msra.mxu0 0.0
        %2370 = vmatprep.subr.mxu0 0.0
        %2371 = vmatpush1.msra.mxu0 0.0
        %2372 = vmatprep.subr.mxu0 0.0
        %2373 = vmatpush1.msra.mxu0 0.0
        %2374 = vmatprep.subr.mxu0 0.0
        %2375 = vmatpush1.msra.mxu0 0.0
        %2376 = vmatprep.subr.mxu0 0.0
        %2377 = vmatpush1.msra.mxu0 0.0
        %2378 = vmatprep.subr.mxu0 0.0
        %2379 = vmatpush1.msra.mxu0 0.0
        %2380 = vmatprep.subr.mxu0 0.0
        %2381 = vmatpush1.msra.mxu0 0.0
        %2382 = vmatprep.subr.mxu0 0.0
        %2383 = vmatpush1.msra.mxu0 0.0
        %2384 = vmatprep.subr.mxu0 0.0
        %2385 = vmatpush1.msra.mxu0 0.0
        %2386 = vmatprep.subr.mxu0 0.0
        %2387 = vmatpush1.msra.mxu0 0.0
        %2388 = vmatprep.subr.mxu0 0.0
        %2389 = vmatpush1.msra.mxu0 0.0
        %v2390 = vand.u32 %v1852, 4294901760
        %v2391 = vsub.f32 %v1852, %v2390
        %v2392 = vand.u32 %v2391, 4294901760
        %2393 = vmatprep.subr.mxu0 %v2392
        %v2394 = vand.u32 %v1748, 4294901760
        %v2395 = vsub.f32 %v1748, %v2394
        %v2396 = vand.u32 %v2395, 4294901760
        %2397 = vmatpush1.msra.mxu0 %v2396
        %v2398 = vand.u32 %v1644, 4294901760
        %v2399 = vsub.f32 %v1644, %v2398
        %v2400 = vand.u32 %v2399, 4294901760
        %2401 = vmatprep.subr.mxu0 %v2400
        %v2402 = vand.u32 %v1540, 4294901760
        %v2403 = vsub.f32 %v1540, %v2402
        %v2404 = vand.u32 %v2403, 4294901760
        %2405 = vmatpush1.msra.mxu0 %v2404
        %v2406 = vand.u32 %v1436, 4294901760
        %v2407 = vsub.f32 %v1436, %v2406
        %v2408 = vand.u32 %v2407, 4294901760
        %2409 = vmatprep.subr.mxu0 %v2408
        %v2410 = vand.u32 %v1332, 4294901760
        %v2411 = vsub.f32 %v1332, %v2410
        %v2412 = vand.u32 %v2411, 4294901760
        %2413 = vmatpush1.msra.mxu0 %v2412
        %v2414 = vand.u32 %v1228, 4294901760
        %v2415 = vsub.f32 %v1228, %v2414
        %v2416 = vand.u32 %v2415, 4294901760
        %2417 = vmatprep.subr.mxu0 %v2416
        %v2418 = vand.u32 %v1124, 4294901760
        %v2419 = vsub.f32 %v1124, %v2418
        %v2420 = vand.u32 %v2419, 4294901760
        %2421 = vmatpush1.msra.mxu0 %v2420
        %2422 = vmatprep.subr.mxu0 0.0
        %2423 = vmatpush2.msra.mxu0 0.0
        %2424 = vmatprep.subr.mxu0 0.0
        %2425 = vmatpush2.msra.mxu0 0.0
        %2426 = vmatprep.subr.mxu0 0.0
        %2427 = vmatpush2.msra.mxu0 0.0
        %2428 = vmatprep.subr.mxu0 0.0
        %2429 = vmatpush2.msra.mxu0 0.0
        %2430 = vmatprep.subr.mxu0 0.0
        %2431 = vmatpush2.msra.mxu0 0.0
        %2432 = vmatprep.subr.mxu0 0.0
        %2433 = vmatpush2.msra.mxu0 0.0
        %2434 = vmatprep.subr.mxu0 0.0
        %2435 = vmatpush2.msra.mxu0 0.0
        %2436 = vmatprep.subr.mxu0 0.0
        %2437 = vmatpush2.msra.mxu0 0.0
        %2438 = vmatprep.subr.mxu0 0.0
        %2439 = vmatpush2.msra.mxu0 0.0
        %2440 = vmatprep.subr.mxu0 0.0
        %2441 = vmatpush2.msra.mxu0 0.0
        %2442 = vmatprep.subr.mxu0 0.0
        %2443 = vmatpush2.msra.mxu0 0.0
        %2444 = vmatprep.subr.mxu0 0.0
        %2445 = vmatpush2.msra.mxu0 0.0
        %2446 = vmatprep.subr.mxu0 0.0
        %2447 = vmatpush2.msra.mxu0 0.0
        %2448 = vmatprep.subr.mxu0 0.0
        %2449 = vmatpush2.msra.mxu0 0.0
        %2450 = vmatprep.subr.mxu0 0.0
        %2451 = vmatpush2.msra.mxu0 0.0
        %2452 = vmatprep.subr.mxu0 0.0
        %2453 = vmatpush2.msra.mxu0 0.0
        %2454 = vmatprep.mubr.f32.mxu0 0.0
        %v2455 = vand.u32 %v1883, 4294901760
        %2456 = vmatmul.mubr.f32.gmra.mxu0 %v2455
        %v2457 = vpop.f32.mrf.mxu0
        %v2458 = vadd.f32 %v2335, %v2457
        %v2459 = vpop.f32.mrf.mxu0
        %v2460 = vadd.f32 %v2337, %v2459
        %2461 = vmatprep.mubr.f32.mxu0 0.0
        %v2462 = vand.u32 %v1886, 4294901760
        %2463 = vmatmul.mubr.f32.gmra.mxu0 %v2462
        %v2464 = vpop.f32.mrf.mxu0
        %v2465 = vadd.f32 %v2344, %v2464
        %v2466 = vpop.f32.mrf.mxu0
        %v2467 = vadd.f32 %v2346, %v2466
        %2468 = vmatprep.mubr.f32.mxu0 0.0
        %v2469 = vand.u32 %v1889, 4294901760
        %2470 = vmatmul.mubr.f32.gmra.mxu0 %v2469
        %v2471 = vpop.f32.mrf.mxu0
        %v2472 = vadd.f32 %v2353, %v2471
        %v2473 = vpop.f32.mrf.mxu0
        %v2474 = vadd.f32 %v2355, %v2473
        %2475 = vmatprep.mubr.f32.mxu0 0.0
        %v2476 = vand.u32 %v1892, 4294901760
        %2477 = vmatmul.mubr.f32.gmra.mxu0 %v2476
        %v2478 = vpop.f32.mrf.mxu0
        %v2479 = vadd.f32 %v2362, %v2478
        %v2480 = vpop.f32.mrf.mxu0
        %v2481 = vadd.f32 %v2364, %v2480
        %2482 = vdwg.mxu0
        %2483 = vmatprep.subr.mxu0 0.0
        %2484 = vmatpush1.msra.mxu0 0.0
        %2485 = vmatprep.subr.mxu0 0.0
        %2486 = vmatpush1.msra.mxu0 0.0
        %2487 = vmatprep.subr.mxu0 0.0
        %2488 = vmatpush1.msra.mxu0 0.0
        %2489 = vmatprep.subr.mxu0 0.0
        %2490 = vmatpush1.msra.mxu0 0.0
        %2491 = vmatprep.subr.mxu0 0.0
        %2492 = vmatpush1.msra.mxu0 0.0
        %2493 = vmatprep.subr.mxu0 0.0
        %2494 = vmatpush1.msra.mxu0 0.0
        %2495 = vmatprep.subr.mxu0 0.0
        %2496 = vmatpush1.msra.mxu0 0.0
        %2497 = vmatprep.subr.mxu0 0.0
        %2498 = vmatpush1.msra.mxu0 0.0
        %2499 = vmatprep.subr.mxu0 0.0
        %2500 = vmatpush1.msra.mxu0 0.0
        %2501 = vmatprep.subr.mxu0 0.0
        %2502 = vmatpush1.msra.mxu0 0.0
        %2503 = vmatprep.subr.mxu0 0.0
        %2504 = vmatpush1.msra.mxu0 0.0
        %2505 = vmatprep.subr.mxu0 0.0
        %2506 = vmatpush1.msra.mxu0 0.0
        %v2507 = vand.u32 %v1852, 4294901760
        %2508 = vmatprep.subr.mxu0 %v2507
        %v2509 = vand.u32 %v1748, 4294901760
        %2510 = vmatpush1.msra.mxu0 %v2509
        %v2511 = vand.u32 %v1644, 4294901760
        %2512 = vmatprep.subr.mxu0 %v2511
        %v2513 = vand.u32 %v1540, 4294901760
        %2514 = vmatpush1.msra.mxu0 %v2513
        %v2515 = vand.u32 %v1436, 4294901760
        %2516 = vmatprep.subr.mxu0 %v2515
        %v2517 = vand.u32 %v1332, 4294901760
        %2518 = vmatpush1.msra.mxu0 %v2517
        %v2519 = vand.u32 %v1228, 4294901760
        %2520 = vmatprep.subr.mxu0 %v2519
        %v2521 = vand.u32 %v1124, 4294901760
        %2522 = vmatpush1.msra.mxu0 %v2521
        %2523 = vmatprep.subr.mxu0 0.0
        %2524 = vmatpush2.msra.mxu0 0.0
        %2525 = vmatprep.subr.mxu0 0.0
        %2526 = vmatpush2.msra.mxu0 0.0
        %2527 = vmatprep.subr.mxu0 0.0
        %2528 = vmatpush2.msra.mxu0 0.0
        %2529 = vmatprep.subr.mxu0 0.0
        %2530 = vmatpush2.msra.mxu0 0.0
        %2531 = vmatprep.subr.mxu0 0.0
        %2532 = vmatpush2.msra.mxu0 0.0
        %2533 = vmatprep.subr.mxu0 0.0
        %2534 = vmatpush2.msra.mxu0 0.0
        %2535 = vmatprep.subr.mxu0 0.0
        %2536 = vmatpush2.msra.mxu0 0.0
        %2537 = vmatprep.subr.mxu0 0.0
        %2538 = vmatpush2.msra.mxu0 0.0
        %2539 = vmatprep.subr.mxu0 0.0
        %2540 = vmatpush2.msra.mxu0 0.0
        %2541 = vmatprep.subr.mxu0 0.0
        %2542 = vmatpush2.msra.mxu0 0.0
        %2543 = vmatprep.subr.mxu0 0.0
        %2544 = vmatpush2.msra.mxu0 0.0
        %2545 = vmatprep.subr.mxu0 0.0
        %2546 = vmatpush2.msra.mxu0 0.0
        %2547 = vmatprep.subr.mxu0 0.0
        %2548 = vmatpush2.msra.mxu0 0.0
        %2549 = vmatprep.subr.mxu0 0.0
        %2550 = vmatpush2.msra.mxu0 0.0
        %2551 = vmatprep.subr.mxu0 0.0
        %2552 = vmatpush2.msra.mxu0 0.0
        %2553 = vmatprep.subr.mxu0 0.0
        %2554 = vmatpush2.msra.mxu0 0.0
        %2555 = vmatprep.mubr.f32.mxu0 0.0
        %v2556 = vand.u32 %v1883, 4294901760
        %2557 = vmatmul.mubr.f32.gmra.mxu0 %v2556
        %v2558 = vpop.f32.mrf.mxu0
        %v2559 = vadd.f32 %v2458, %v2558
        %v2560 = vpop.f32.mrf.mxu0
        %v2561 = vadd.f32 %v2460, %v2560
        %2562 = vmatprep.mubr.f32.mxu0 0.0
        %v2563 = vand.u32 %v1886, 4294901760
        %2564 = vmatmul.mubr.f32.gmra.mxu0 %v2563
        %v2565 = vpop.f32.mrf.mxu0
        %v2566 = vadd.f32 %v2465, %v2565
        %v2567 = vpop.f32.mrf.mxu0
        %v2568 = vadd.f32 %v2467, %v2567
        %2569 = vmatprep.mubr.f32.mxu0 0.0
        %v2570 = vand.u32 %v1889, 4294901760
        %2571 = vmatmul.mubr.f32.gmra.mxu0 %v2570
        %v2572 = vpop.f32.mrf.mxu0
        %v2573 = vadd.f32 %v2472, %v2572
        %v2574 = vpop.f32.mrf.mxu0
        %v2575 = vadd.f32 %v2474, %v2574
        %2576 = vmatprep.mubr.f32.mxu0 0.0
        %v2577 = vand.u32 %v1892, 4294901760
        %2578 = vmatmul.mubr.f32.gmra.mxu0 %v2577
        %v2579 = vpop.f32.mrf.mxu0
        %v2580 = vadd.f32 %v2479, %v2579
        %v2581 = vpop.f32.mrf.mxu0
        %v2582 = vadd.f32 %v2481, %v2581
        %2583 = vdwg.mxu0
        %v2584 = vand.u32 2147483647, %v2559
        %vm2585 = vcmp.le.f32.partialorder %v2584, 0.7853982
        %vm2586 = vcmp.lt.s32.totalorder %v2559, 0
        %v2587 = vand.u32 %v2559, 2139095040
        %v2588 = vshrl.u32 %v2587, 23
        %v2589 = vsub.s32 %v2588, 127
        %v2590 = vand.u32 2147483647, %v2559
        %v2591 = vand.u32 %v2590, 8388607
        %v2592 = vor.u32 %v2591, 8388608
        %v2593 = vsub.s32 0, %v2592
        %v2594 = vadd.s32 %v2589, 1
        %vm2595 = vcmp.gt.s32.totalorder %v2594, 0
        %v2596 = vsel %vm2595, %v2594, 0
        %v2597 = vshrl.u32 %v2596, 5
        %v2598 = vand.u32 %v2596, 31
        %v2599 = vsub.s32 32, %v2598
        %v2600 = vshrl.u32 683565275, %v2599
        %v2601 = vshll.u32 683565275, %v2598
        %v2602 = vshrl.u32 2475754826, %v2599
        %v2603 = vor.u32 %v2601, %v2602
        %v2604 = vshll.u32 2475754826, %v2598
        %v2605 = vshrl.u32 2131351028, %v2599
        %v2606 = vor.u32 %v2604, %v2605
        %v2607 = vshll.u32 2131351028, %v2598
        %v2608 = vshrl.u32 2102212464, %v2599
        %v2609 = vor.u32 %v2607, %v2608
        %v2610 = vshll.u32 2102212464, %v2598
        %v2611 = vshrl.u32 920167782, %v2599
        %v2612 = vor.u32 %v2610, %v2611
        %v2613 = vshll.u32 920167782, %v2598
        %v2614 = vshrl.u32 1326507024, %v2599
        %v2615 = vor.u32 %v2613, %v2614
        %vm2616 = vcmp.lt.s32.totalorder %v2597, 1
        %vm2617 = vcmp.lt.s32.totalorder %v2597, 2
        %vm2618 = vcmp.lt.s32.totalorder %v2597, 3
        %vm2619 = vcmp.lt.s32.totalorder %v2597, 4
        %v2620 = vsel %vm2616, %v2600, %v2603
        %v2621 = vsel %vm2619, %v2609, 2102212464
        %v2622 = vsel %vm2618, %v2606, %v2621
        %v2623 = vsel %vm2617, %v2620, %v2622
        %v2624 = vsel %vm2616, %v2603, %v2606
        %v2625 = vsel %vm2619, %v2612, 920167782
        %v2626 = vsel %vm2618, %v2609, %v2625
        %v2627 = vsel %vm2617, %v2624, %v2626
        %v2628 = vsel %vm2616, %v2606, %v2609
        %v2629 = vsel %vm2619, %v2615, 1326507024
        %v2630 = vsel %vm2618, %v2612, %v2629
        %v2631 = vsel %vm2617, %v2628, %v2630
        %v2632 = vshll.u32 %v2592, 8
        %v2633 = vmul.u32.u64.compose %v2632, %v2631
        %v2634 = vextract.low.u32 %v2633
        %v2635 = vextract.high.u32 %v2633
        %v2636 = vmul.u32.u64.compose %v2632, %v2627
        %v2637 = vextract.low.u32 %v2636
        %v2638 = vextract.high.u32 %v2636
        %v2639 = vmul.u32 %v2632, %v2623
        %v2640 = vadd.s32 %v2635, %v2637
        %vm2641 = vc.u32 %v2635, %v2637
        %v2642 = vadd.s32 %v2638, 1
        %v2643 = vsel %vm2641, %v2642, %v2638
        %v2644 = vadd.s32 %v2639, %v2643
        %v2645 = vadd.s32 %v2644, 536870912
        %v2646 = vshrl.u32 %v2645, 30
        %v2647 = vshll.u32 %v2646, 30
        %v2648 = vsub.s32 %v2644, %v2647
        %vm2649 = vcmp.lt.s32.totalorder %v2648, 0
        %v2650 = vsub.s32 0, %v2648
        %v2651 = vsel %vm2649, %v2650, %v2648
        %v2652 = vclz %v2651
        %v2653 = vsub.s32 %v2652, 2
        %vm2654 = vcmp.gt.s32.totalorder 0, %v2653
        %v2655 = vsel %vm2654, 0, %v2653
        %v2656 = vsub.s32 32, %v2655
        %v2657 = vshll.u32 %v2648, %v2655
        %v2658 = vshrl.u32 %v2640, %v2656
        %v2659 = vor.u32 %v2657, %v2658
        %v2660 = vsub.s32 4294967266, %v2655
        %v2661 = vadd.s32 %v2660, 127
        %v2662 = vshll.u32 %v2661, 23
        %v2663 = vor.u32 4788187, %v2662
        %v2664 = vand.u32 2147483647, %v2663
        %v2666 = vcvt.s32.f32 %v2659
        %v2667 = vmul.f32 %v2666, %v2664
        %v2668 = vxor.u32 %v2667, 2147483648
        %v2669 = vsel %vm2586, %v2668, %v2667
        %v2670 = vsub.s32 4, %v2646
        %v2671 = vsel %vm2586, %v2670, %v2646
        %v2672 = vsel %vm2585, %v2559, %v2669
        %v2673 = vsel %vm2585, 0, %v2671
        %v2674 = vcosq.f32.pop %v2672
        %v2675 = vsinq.f32.pop %v2672
        %vm2676 = vweird.f32 %v2559
        %v2677 = vadd.s32 %v2673, 3
        %v2678 = vand.u32 %v2677, 3
        %vm2679 = vcmp.lt.s32.totalorder %v2678, 2
        %vm2680 = vcmp.eq.s32.totalorder %v2678, 0
        %v2681 = vxor.u32 %v2675, 2147483648
        %v2682 = vsel %vm2680, %v2674, %v2681
        %vm2683 = vcmp.eq.s32.totalorder %v2678, 2
        %v2684 = vxor.u32 %v2674, 2147483648
        %v2685 = vsel %vm2683, %v2684, %v2675
        %v2686 = vsel %vm2679, %v2682, %v2685
        %v2687 = vsel %vm2676, nan, %v2686
        %v2688 = vand.u32 2147483647, %v2561
        %vm2689 = vcmp.le.f32.partialorder %v2688, 0.7853982
        %vm2690 = vcmp.lt.s32.totalorder %v2561, 0
        %v2691 = vand.u32 %v2561, 2139095040
        %v2692 = vshrl.u32 %v2691, 23
        %v2693 = vsub.s32 %v2692, 127
        %v2694 = vand.u32 2147483647, %v2561
        %v2695 = vand.u32 %v2694, 8388607
        %v2696 = vor.u32 %v2695, 8388608
        %v2697 = vsub.s32 0, %v2696
        %v2698 = vadd.s32 %v2693, 1
        %vm2699 = vcmp.gt.s32.totalorder %v2698, 0
        %v2700 = vsel %vm2699, %v2698, 0
        %v2701 = vshrl.u32 %v2700, 5
        %v2702 = vand.u32 %v2700, 31
        %v2703 = vsub.s32 32, %v2702
        %v2704 = vshrl.u32 683565275, %v2703
        %v2705 = vshll.u32 683565275, %v2702
        %v2706 = vshrl.u32 2475754826, %v2703
        %v2707 = vor.u32 %v2705, %v2706
        %v2708 = vshll.u32 2475754826, %v2702
        %v2709 = vshrl.u32 2131351028, %v2703
        %v2710 = vor.u32 %v2708, %v2709
        %v2711 = vshll.u32 2131351028, %v2702
        %v2712 = vshrl.u32 2102212464, %v2703
        %v2713 = vor.u32 %v2711, %v2712
        %v2714 = vshll.u32 2102212464, %v2702
        %v2715 = vshrl.u32 920167782, %v2703
        %v2716 = vor.u32 %v2714, %v2715
        %v2717 = vshll.u32 920167782, %v2702
        %v2718 = vshrl.u32 1326507024, %v2703
        %v2719 = vor.u32 %v2717, %v2718
        %vm2720 = vcmp.lt.s32.totalorder %v2701, 1
        %vm2721 = vcmp.lt.s32.totalorder %v2701, 2
        %vm2722 = vcmp.lt.s32.totalorder %v2701, 3
        %vm2723 = vcmp.lt.s32.totalorder %v2701, 4
        %v2724 = vsel %vm2720, %v2704, %v2707
        %v2725 = vsel %vm2723, %v2713, 2102212464
        %v2726 = vsel %vm2722, %v2710, %v2725
        %v2727 = vsel %vm2721, %v2724, %v2726
        %v2728 = vsel %vm2720, %v2707, %v2710
        %v2729 = vsel %vm2723, %v2716, 920167782
        %v2730 = vsel %vm2722, %v2713, %v2729
        %v2731 = vsel %vm2721, %v2728, %v2730
        %v2732 = vsel %vm2720, %v2710, %v2713
        %v2733 = vsel %vm2723, %v2719, 1326507024
        %v2734 = vsel %vm2722, %v2716, %v2733
        %v2735 = vsel %vm2721, %v2732, %v2734
        %v2736 = vshll.u32 %v2696, 8
        %v2737 = vmul.u32.u64.compose %v2736, %v2735
        %v2738 = vextract.low.u32 %v2737
        %v2739 = vextract.high.u32 %v2737
        %v2740 = vmul.u32.u64.compose %v2736, %v2731
        %v2741 = vextract.low.u32 %v2740
        %v2742 = vextract.high.u32 %v2740
        %v2743 = vmul.u32 %v2736, %v2727
        %v2744 = vadd.s32 %v2739, %v2741
        %vm2745 = vc.u32 %v2739, %v2741
        %v2746 = vadd.s32 %v2742, 1
        %v2747 = vsel %vm2745, %v2746, %v2742
        %v2748 = vadd.s32 %v2743, %v2747
        %v2749 = vadd.s32 %v2748, 536870912
        %v2750 = vshrl.u32 %v2749, 30
        %v2751 = vshll.u32 %v2750, 30
        %v2752 = vsub.s32 %v2748, %v2751
        %vm2753 = vcmp.lt.s32.totalorder %v2752, 0
        %v2754 = vsub.s32 0, %v2752
        %v2755 = vsel %vm2753, %v2754, %v2752
        %v2756 = vclz %v2755
        %v2757 = vsub.s32 %v2756, 2
        %vm2758 = vcmp.gt.s32.totalorder 0, %v2757
        %v2759 = vsel %vm2758, 0, %v2757
        %v2760 = vsub.s32 32, %v2759
        %v2761 = vshll.u32 %v2752, %v2759
        %v2762 = vshrl.u32 %v2744, %v2760
        %v2763 = vor.u32 %v2761, %v2762
        %v2764 = vsub.s32 4294967266, %v2759
        %v2765 = vadd.s32 %v2764, 127
        %v2766 = vshll.u32 %v2765, 23
        %v2767 = vor.u32 4788187, %v2766
        %v2768 = vand.u32 2147483647, %v2767
        %v2770 = vcvt.s32.f32 %v2763
        %v2771 = vmul.f32 %v2770, %v2768
        %v2772 = vxor.u32 %v2771, 2147483648
        %v2773 = vsel %vm2690, %v2772, %v2771
        %v2774 = vsub.s32 4, %v2750
        %v2775 = vsel %vm2690, %v2774, %v2750
        %v2776 = vsel %vm2689, %v2561, %v2773
        %v2777 = vsel %vm2689, 0, %v2775
        %v2778 = vcosq.f32.pop %v2776
        %v2779 = vsinq.f32.pop %v2776
        %vm2780 = vweird.f32 %v2561
        %v2781 = vadd.s32 %v2777, 3
        %v2782 = vand.u32 %v2781, 3
        %vm2783 = vcmp.lt.s32.totalorder %v2782, 2
        %vm2784 = vcmp.eq.s32.totalorder %v2782, 0
        %v2785 = vxor.u32 %v2779, 2147483648
        %v2786 = vsel %vm2784, %v2778, %v2785
        %vm2787 = vcmp.eq.s32.totalorder %v2782, 2
        %v2788 = vxor.u32 %v2778, 2147483648
        %v2789 = vsel %vm2787, %v2788, %v2779
        %v2790 = vsel %vm2783, %v2786, %v2789
        %v2791 = vsel %vm2780, nan, %v2790
        %v2792 = vand.u32 2147483647, %v2566
        %vm2793 = vcmp.le.f32.partialorder %v2792, 0.7853982
        %vm2794 = vcmp.lt.s32.totalorder %v2566, 0
        %v2795 = vand.u32 %v2566, 2139095040
        %v2796 = vshrl.u32 %v2795, 23
        %v2797 = vsub.s32 %v2796, 127
        %v2798 = vand.u32 2147483647, %v2566
        %v2799 = vand.u32 %v2798, 8388607
        %v2800 = vor.u32 %v2799, 8388608
        %v2801 = vsub.s32 0, %v2800
        %v2802 = vadd.s32 %v2797, 1
        %vm2803 = vcmp.gt.s32.totalorder %v2802, 0
        %v2804 = vsel %vm2803, %v2802, 0
        %v2805 = vshrl.u32 %v2804, 5
        %v2806 = vand.u32 %v2804, 31
        %v2807 = vsub.s32 32, %v2806
        %v2808 = vshrl.u32 683565275, %v2807
        %v2809 = vshll.u32 683565275, %v2806
        %v2810 = vshrl.u32 2475754826, %v2807
        %v2811 = vor.u32 %v2809, %v2810
        %v2812 = vshll.u32 2475754826, %v2806
        %v2813 = vshrl.u32 2131351028, %v2807
        %v2814 = vor.u32 %v2812, %v2813
        %v2815 = vshll.u32 2131351028, %v2806
        %v2816 = vshrl.u32 2102212464, %v2807
        %v2817 = vor.u32 %v2815, %v2816
        %v2818 = vshll.u32 2102212464, %v2806
        %v2819 = vshrl.u32 920167782, %v2807
        %v2820 = vor.u32 %v2818, %v2819
        %v2821 = vshll.u32 920167782, %v2806
        %v2822 = vshrl.u32 1326507024, %v2807
        %v2823 = vor.u32 %v2821, %v2822
        %vm2824 = vcmp.lt.s32.totalorder %v2805, 1
        %vm2825 = vcmp.lt.s32.totalorder %v2805, 2
        %vm2826 = vcmp.lt.s32.totalorder %v2805, 3
        %vm2827 = vcmp.lt.s32.totalorder %v2805, 4
        %v2828 = vsel %vm2824, %v2808, %v2811
        %v2829 = vsel %vm2827, %v2817, 2102212464
        %v2830 = vsel %vm2826, %v2814, %v2829
        %v2831 = vsel %vm2825, %v2828, %v2830
        %v2832 = vsel %vm2824, %v2811, %v2814
        %v2833 = vsel %vm2827, %v2820, 920167782
        %v2834 = vsel %vm2826, %v2817, %v2833
        %v2835 = vsel %vm2825, %v2832, %v2834
        %v2836 = vsel %vm2824, %v2814, %v2817
        %v2837 = vsel %vm2827, %v2823, 1326507024
        %v2838 = vsel %vm2826, %v2820, %v2837
        %v2839 = vsel %vm2825, %v2836, %v2838
        %v2840 = vshll.u32 %v2800, 8
        %v2841 = vmul.u32.u64.compose %v2840, %v2839
        %v2842 = vextract.low.u32 %v2841
        %v2843 = vextract.high.u32 %v2841
        %v2844 = vmul.u32.u64.compose %v2840, %v2835
        %v2845 = vextract.low.u32 %v2844
        %v2846 = vextract.high.u32 %v2844
        %v2847 = vmul.u32 %v2840, %v2831
        %v2848 = vadd.s32 %v2843, %v2845
        %vm2849 = vc.u32 %v2843, %v2845
        %v2850 = vadd.s32 %v2846, 1
        %v2851 = vsel %vm2849, %v2850, %v2846
        %v2852 = vadd.s32 %v2847, %v2851
        %v2853 = vadd.s32 %v2852, 536870912
        %v2854 = vshrl.u32 %v2853, 30
        %v2855 = vshll.u32 %v2854, 30
        %v2856 = vsub.s32 %v2852, %v2855
        %vm2857 = vcmp.lt.s32.totalorder %v2856, 0
        %v2858 = vsub.s32 0, %v2856
        %v2859 = vsel %vm2857, %v2858, %v2856
        %v2860 = vclz %v2859
        %v2861 = vsub.s32 %v2860, 2
        %vm2862 = vcmp.gt.s32.totalorder 0, %v2861
        %v2863 = vsel %vm2862, 0, %v2861
        %v2864 = vsub.s32 32, %v2863
        %v2865 = vshll.u32 %v2856, %v2863
        %v2866 = vshrl.u32 %v2848, %v2864
        %v2867 = vor.u32 %v2865, %v2866
        %v2868 = vsub.s32 4294967266, %v2863
        %v2869 = vadd.s32 %v2868, 127
        %v2870 = vshll.u32 %v2869, 23
        %v2871 = vor.u32 4788187, %v2870
        %v2872 = vand.u32 2147483647, %v2871
        %v2874 = vcvt.s32.f32 %v2867
        %v2875 = vmul.f32 %v2874, %v2872
        %v2876 = vxor.u32 %v2875, 2147483648
        %v2877 = vsel %vm2794, %v2876, %v2875
        %v2878 = vsub.s32 4, %v2854
        %v2879 = vsel %vm2794, %v2878, %v2854
        %v2880 = vsel %vm2793, %v2566, %v2877
        %v2881 = vsel %vm2793, 0, %v2879
        %v2882 = vcosq.f32.pop %v2880
        %v2883 = vsinq.f32.pop %v2880
        %vm2884 = vweird.f32 %v2566
        %v2885 = vadd.s32 %v2881, 3
        %v2886 = vand.u32 %v2885, 3
        %vm2887 = vcmp.lt.s32.totalorder %v2886, 2
        %vm2888 = vcmp.eq.s32.totalorder %v2886, 0
        %v2889 = vxor.u32 %v2883, 2147483648
        %v2890 = vsel %vm2888, %v2882, %v2889
        %vm2891 = vcmp.eq.s32.totalorder %v2886, 2
        %v2892 = vxor.u32 %v2882, 2147483648
        %v2893 = vsel %vm2891, %v2892, %v2883
        %v2894 = vsel %vm2887, %v2890, %v2893
        %v2895 = vsel %vm2884, nan, %v2894
        %v2896 = vand.u32 2147483647, %v2568
        %vm2897 = vcmp.le.f32.partialorder %v2896, 0.7853982
        %vm2898 = vcmp.lt.s32.totalorder %v2568, 0
        %v2899 = vand.u32 %v2568, 2139095040
        %v2900 = vshrl.u32 %v2899, 23
        %v2901 = vsub.s32 %v2900, 127
        %v2902 = vand.u32 2147483647, %v2568
        %v2903 = vand.u32 %v2902, 8388607
        %v2904 = vor.u32 %v2903, 8388608
        %v2905 = vsub.s32 0, %v2904
        %v2906 = vadd.s32 %v2901, 1
        %vm2907 = vcmp.gt.s32.totalorder %v2906, 0
        %v2908 = vsel %vm2907, %v2906, 0
        %v2909 = vshrl.u32 %v2908, 5
        %v2910 = vand.u32 %v2908, 31
        %v2911 = vsub.s32 32, %v2910
        %v2912 = vshrl.u32 683565275, %v2911
        %v2913 = vshll.u32 683565275, %v2910
        %v2914 = vshrl.u32 2475754826, %v2911
        %v2915 = vor.u32 %v2913, %v2914
        %v2916 = vshll.u32 2475754826, %v2910
        %v2917 = vshrl.u32 2131351028, %v2911
        %v2918 = vor.u32 %v2916, %v2917
        %v2919 = vshll.u32 2131351028, %v2910
        %v2920 = vshrl.u32 2102212464, %v2911
        %v2921 = vor.u32 %v2919, %v2920
        %v2922 = vshll.u32 2102212464, %v2910
        %v2923 = vshrl.u32 920167782, %v2911
        %v2924 = vor.u32 %v2922, %v2923
        %v2925 = vshll.u32 920167782, %v2910
        %v2926 = vshrl.u32 1326507024, %v2911
        %v2927 = vor.u32 %v2925, %v2926
        %vm2928 = vcmp.lt.s32.totalorder %v2909, 1
        %vm2929 = vcmp.lt.s32.totalorder %v2909, 2
        %vm2930 = vcmp.lt.s32.totalorder %v2909, 3
        %vm2931 = vcmp.lt.s32.totalorder %v2909, 4
        %v2932 = vsel %vm2928, %v2912, %v2915
        %v2933 = vsel %vm2931, %v2921, 2102212464
        %v2934 = vsel %vm2930, %v2918, %v2933
        %v2935 = vsel %vm2929, %v2932, %v2934
        %v2936 = vsel %vm2928, %v2915, %v2918
        %v2937 = vsel %vm2931, %v2924, 920167782
        %v2938 = vsel %vm2930, %v2921, %v2937
        %v2939 = vsel %vm2929, %v2936, %v2938
        %v2940 = vsel %vm2928, %v2918, %v2921
        %v2941 = vsel %vm2931, %v2927, 1326507024
        %v2942 = vsel %vm2930, %v2924, %v2941
        %v2943 = vsel %vm2929, %v2940, %v2942
        %v2944 = vshll.u32 %v2904, 8
        %v2945 = vmul.u32.u64.compose %v2944, %v2943
        %v2946 = vextract.low.u32 %v2945
        %v2947 = vextract.high.u32 %v2945
        %v2948 = vmul.u32.u64.compose %v2944, %v2939
        %v2949 = vextract.low.u32 %v2948
        %v2950 = vextract.high.u32 %v2948
        %v2951 = vmul.u32 %v2944, %v2935
        %v2952 = vadd.s32 %v2947, %v2949
        %vm2953 = vc.u32 %v2947, %v2949
        %v2954 = vadd.s32 %v2950, 1
        %v2955 = vsel %vm2953, %v2954, %v2950
        %v2956 = vadd.s32 %v2951, %v2955
        %v2957 = vadd.s32 %v2956, 536870912
        %v2958 = vshrl.u32 %v2957, 30
        %v2959 = vshll.u32 %v2958, 30
        %v2960 = vsub.s32 %v2956, %v2959
        %vm2961 = vcmp.lt.s32.totalorder %v2960, 0
        %v2962 = vsub.s32 0, %v2960
        %v2963 = vsel %vm2961, %v2962, %v2960
        %v2964 = vclz %v2963
        %v2965 = vsub.s32 %v2964, 2
        %vm2966 = vcmp.gt.s32.totalorder 0, %v2965
        %v2967 = vsel %vm2966, 0, %v2965
        %v2968 = vsub.s32 32, %v2967
        %v2969 = vshll.u32 %v2960, %v2967
        %v2970 = vshrl.u32 %v2952, %v2968
        %v2971 = vor.u32 %v2969, %v2970
        %v2972 = vsub.s32 4294967266, %v2967
        %v2973 = vadd.s32 %v2972, 127
        %v2974 = vshll.u32 %v2973, 23
        %v2975 = vor.u32 4788187, %v2974
        %v2976 = vand.u32 2147483647, %v2975
        %v2978 = vcvt.s32.f32 %v2971
        %v2979 = vmul.f32 %v2978, %v2976
        %v2980 = vxor.u32 %v2979, 2147483648
        %v2981 = vsel %vm2898, %v2980, %v2979
        %v2982 = vsub.s32 4, %v2958
        %v2983 = vsel %vm2898, %v2982, %v2958
        %v2984 = vsel %vm2897, %v2568, %v2981
        %v2985 = vsel %vm2897, 0, %v2983
        %v2986 = vcosq.f32.pop %v2984
        %v2987 = vsinq.f32.pop %v2984
        %vm2988 = vweird.f32 %v2568
        %v2989 = vadd.s32 %v2985, 3
        %v2990 = vand.u32 %v2989, 3
        %vm2991 = vcmp.lt.s32.totalorder %v2990, 2
        %vm2992 = vcmp.eq.s32.totalorder %v2990, 0
        %v2993 = vxor.u32 %v2987, 2147483648
        %v2994 = vsel %vm2992, %v2986, %v2993
        %vm2995 = vcmp.eq.s32.totalorder %v2990, 2
        %v2996 = vxor.u32 %v2986, 2147483648
        %v2997 = vsel %vm2995, %v2996, %v2987
        %v2998 = vsel %vm2991, %v2994, %v2997
        %v2999 = vsel %vm2988, nan, %v2998
        %v3000 = vand.u32 2147483647, %v2573
        %vm3001 = vcmp.le.f32.partialorder %v3000, 0.7853982
        %vm3002 = vcmp.lt.s32.totalorder %v2573, 0
        %v3003 = vand.u32 %v2573, 2139095040
        %v3004 = vshrl.u32 %v3003, 23
        %v3005 = vsub.s32 %v3004, 127
        %v3006 = vand.u32 2147483647, %v2573
        %v3007 = vand.u32 %v3006, 8388607
        %v3008 = vor.u32 %v3007, 8388608
        %v3009 = vsub.s32 0, %v3008
        %v3010 = vadd.s32 %v3005, 1
        %vm3011 = vcmp.gt.s32.totalorder %v3010, 0
        %v3012 = vsel %vm3011, %v3010, 0
        %v3013 = vshrl.u32 %v3012, 5
        %v3014 = vand.u32 %v3012, 31
        %v3015 = vsub.s32 32, %v3014
        %v3016 = vshrl.u32 683565275, %v3015
        %v3017 = vshll.u32 683565275, %v3014
        %v3018 = vshrl.u32 2475754826, %v3015
        %v3019 = vor.u32 %v3017, %v3018
        %v3020 = vshll.u32 2475754826, %v3014
        %v3021 = vshrl.u32 2131351028, %v3015
        %v3022 = vor.u32 %v3020, %v3021
        %v3023 = vshll.u32 2131351028, %v3014
        %v3024 = vshrl.u32 2102212464, %v3015
        %v3025 = vor.u32 %v3023, %v3024
        %v3026 = vshll.u32 2102212464, %v3014
        %v3027 = vshrl.u32 920167782, %v3015
        %v3028 = vor.u32 %v3026, %v3027
        %v3029 = vshll.u32 920167782, %v3014
        %v3030 = vshrl.u32 1326507024, %v3015
        %v3031 = vor.u32 %v3029, %v3030
        %vm3032 = vcmp.lt.s32.totalorder %v3013, 1
        %vm3033 = vcmp.lt.s32.totalorder %v3013, 2
        %vm3034 = vcmp.lt.s32.totalorder %v3013, 3
        %vm3035 = vcmp.lt.s32.totalorder %v3013, 4
        %v3036 = vsel %vm3032, %v3016, %v3019
        %v3037 = vsel %vm3035, %v3025, 2102212464
        %v3038 = vsel %vm3034, %v3022, %v3037
        %v3039 = vsel %vm3033, %v3036, %v3038
        %v3040 = vsel %vm3032, %v3019, %v3022
        %v3041 = vsel %vm3035, %v3028, 920167782
        %v3042 = vsel %vm3034, %v3025, %v3041
        %v3043 = vsel %vm3033, %v3040, %v3042
        %v3044 = vsel %vm3032, %v3022, %v3025
        %v3045 = vsel %vm3035, %v3031, 1326507024
        %v3046 = vsel %vm3034, %v3028, %v3045
        %v3047 = vsel %vm3033, %v3044, %v3046
        %v3048 = vshll.u32 %v3008, 8
        %v3049 = vmul.u32.u64.compose %v3048, %v3047
        %v3050 = vextract.low.u32 %v3049
        %v3051 = vextract.high.u32 %v3049
        %v3052 = vmul.u32.u64.compose %v3048, %v3043
        %v3053 = vextract.low.u32 %v3052
        %v3054 = vextract.high.u32 %v3052
        %v3055 = vmul.u32 %v3048, %v3039
        %v3056 = vadd.s32 %v3051, %v3053
        %vm3057 = vc.u32 %v3051, %v3053
        %v3058 = vadd.s32 %v3054, 1
        %v3059 = vsel %vm3057, %v3058, %v3054
        %v3060 = vadd.s32 %v3055, %v3059
        %v3061 = vadd.s32 %v3060, 536870912
        %v3062 = vshrl.u32 %v3061, 30
        %v3063 = vshll.u32 %v3062, 30
        %v3064 = vsub.s32 %v3060, %v3063
        %vm3065 = vcmp.lt.s32.totalorder %v3064, 0
        %v3066 = vsub.s32 0, %v3064
        %v3067 = vsel %vm3065, %v3066, %v3064
        %v3068 = vclz %v3067
        %v3069 = vsub.s32 %v3068, 2
        %vm3070 = vcmp.gt.s32.totalorder 0, %v3069
        %v3071 = vsel %vm3070, 0, %v3069
        %v3072 = vsub.s32 32, %v3071
        %v3073 = vshll.u32 %v3064, %v3071
        %v3074 = vshrl.u32 %v3056, %v3072
        %v3075 = vor.u32 %v3073, %v3074
        %v3076 = vsub.s32 4294967266, %v3071
        %v3077 = vadd.s32 %v3076, 127
        %v3078 = vshll.u32 %v3077, 23
        %v3079 = vor.u32 4788187, %v3078
        %v3080 = vand.u32 2147483647, %v3079
        %v3082 = vcvt.s32.f32 %v3075
        %v3083 = vmul.f32 %v3082, %v3080
        %v3084 = vxor.u32 %v3083, 2147483648
        %v3085 = vsel %vm3002, %v3084, %v3083
        %v3086 = vsub.s32 4, %v3062
        %v3087 = vsel %vm3002, %v3086, %v3062
        %v3088 = vsel %vm3001, %v2573, %v3085
        %v3089 = vsel %vm3001, 0, %v3087
        %v3090 = vcosq.f32.pop %v3088
        %v3091 = vsinq.f32.pop %v3088
        %vm3092 = vweird.f32 %v2573
        %v3093 = vadd.s32 %v3089, 3
        %v3094 = vand.u32 %v3093, 3
        %vm3095 = vcmp.lt.s32.totalorder %v3094, 2
        %vm3096 = vcmp.eq.s32.totalorder %v3094, 0
        %v3097 = vxor.u32 %v3091, 2147483648
        %v3098 = vsel %vm3096, %v3090, %v3097
        %vm3099 = vcmp.eq.s32.totalorder %v3094, 2
        %v3100 = vxor.u32 %v3090, 2147483648
        %v3101 = vsel %vm3099, %v3100, %v3091
        %v3102 = vsel %vm3095, %v3098, %v3101
        %v3103 = vsel %vm3092, nan, %v3102
        %v3104 = vand.u32 2147483647, %v2575
        %vm3105 = vcmp.le.f32.partialorder %v3104, 0.7853982
        %vm3106 = vcmp.lt.s32.totalorder %v2575, 0
        %v3107 = vand.u32 %v2575, 2139095040
        %v3108 = vshrl.u32 %v3107, 23
        %v3109 = vsub.s32 %v3108, 127
        %v3110 = vand.u32 2147483647, %v2575
        %v3111 = vand.u32 %v3110, 8388607
        %v3112 = vor.u32 %v3111, 8388608
        %v3113 = vsub.s32 0, %v3112
        %v3114 = vadd.s32 %v3109, 1
        %vm3115 = vcmp.gt.s32.totalorder %v3114, 0
        %v3116 = vsel %vm3115, %v3114, 0
        %v3117 = vshrl.u32 %v3116, 5
        %v3118 = vand.u32 %v3116, 31
        %v3119 = vsub.s32 32, %v3118
        %v3120 = vshrl.u32 683565275, %v3119
        %v3121 = vshll.u32 683565275, %v3118
        %v3122 = vshrl.u32 2475754826, %v3119
        %v3123 = vor.u32 %v3121, %v3122
        %v3124 = vshll.u32 2475754826, %v3118
        %v3125 = vshrl.u32 2131351028, %v3119
        %v3126 = vor.u32 %v3124, %v3125
        %v3127 = vshll.u32 2131351028, %v3118
        %v3128 = vshrl.u32 2102212464, %v3119
        %v3129 = vor.u32 %v3127, %v3128
        %v3130 = vshll.u32 2102212464, %v3118
        %v3131 = vshrl.u32 920167782, %v3119
        %v3132 = vor.u32 %v3130, %v3131
        %v3133 = vshll.u32 920167782, %v3118
        %v3134 = vshrl.u32 1326507024, %v3119
        %v3135 = vor.u32 %v3133, %v3134
        %vm3136 = vcmp.lt.s32.totalorder %v3117, 1
        %vm3137 = vcmp.lt.s32.totalorder %v3117, 2
        %vm3138 = vcmp.lt.s32.totalorder %v3117, 3
        %vm3139 = vcmp.lt.s32.totalorder %v3117, 4
        %v3140 = vsel %vm3136, %v3120, %v3123
        %v3141 = vsel %vm3139, %v3129, 2102212464
        %v3142 = vsel %vm3138, %v3126, %v3141
        %v3143 = vsel %vm3137, %v3140, %v3142
        %v3144 = vsel %vm3136, %v3123, %v3126
        %v3145 = vsel %vm3139, %v3132, 920167782
        %v3146 = vsel %vm3138, %v3129, %v3145
        %v3147 = vsel %vm3137, %v3144, %v3146
        %v3148 = vsel %vm3136, %v3126, %v3129
        %v3149 = vsel %vm3139, %v3135, 1326507024
        %v3150 = vsel %vm3138, %v3132, %v3149
        %v3151 = vsel %vm3137, %v3148, %v3150
        %v3152 = vshll.u32 %v3112, 8
        %v3153 = vmul.u32.u64.compose %v3152, %v3151
        %v3154 = vextract.low.u32 %v3153
        %v3155 = vextract.high.u32 %v3153
        %v3156 = vmul.u32.u64.compose %v3152, %v3147
        %v3157 = vextract.low.u32 %v3156
        %v3158 = vextract.high.u32 %v3156
        %v3159 = vmul.u32 %v3152, %v3143
        %v3160 = vadd.s32 %v3155, %v3157
        %vm3161 = vc.u32 %v3155, %v3157
        %v3162 = vadd.s32 %v3158, 1
        %v3163 = vsel %vm3161, %v3162, %v3158
        %v3164 = vadd.s32 %v3159, %v3163
        %v3165 = vadd.s32 %v3164, 536870912
        %v3166 = vshrl.u32 %v3165, 30
        %v3167 = vshll.u32 %v3166, 30
        %v3168 = vsub.s32 %v3164, %v3167
        %vm3169 = vcmp.lt.s32.totalorder %v3168, 0
        %v3170 = vsub.s32 0, %v3168
        %v3171 = vsel %vm3169, %v3170, %v3168
        %v3172 = vclz %v3171
        %v3173 = vsub.s32 %v3172, 2
        %vm3174 = vcmp.gt.s32.totalorder 0, %v3173
        %v3175 = vsel %vm3174, 0, %v3173
        %v3176 = vsub.s32 32, %v3175
        %v3177 = vshll.u32 %v3168, %v3175
        %v3178 = vshrl.u32 %v3160, %v3176
        %v3179 = vor.u32 %v3177, %v3178
        %v3180 = vsub.s32 4294967266, %v3175
        %v3181 = vadd.s32 %v3180, 127
        %v3182 = vshll.u32 %v3181, 23
        %v3183 = vor.u32 4788187, %v3182
        %v3184 = vand.u32 2147483647, %v3183
        %v3186 = vcvt.s32.f32 %v3179
        %v3187 = vmul.f32 %v3186, %v3184
        %v3188 = vxor.u32 %v3187, 2147483648
        %v3189 = vsel %vm3106, %v3188, %v3187
        %v3190 = vsub.s32 4, %v3166
        %v3191 = vsel %vm3106, %v3190, %v3166
        %v3192 = vsel %vm3105, %v2575, %v3189
        %v3193 = vsel %vm3105, 0, %v3191
        %v3194 = vcosq.f32.pop %v3192
        %v3195 = vsinq.f32.pop %v3192
        %vm3196 = vweird.f32 %v2575
        %v3197 = vadd.s32 %v3193, 3
        %v3198 = vand.u32 %v3197, 3
        %vm3199 = vcmp.lt.s32.totalorder %v3198, 2
        %vm3200 = vcmp.eq.s32.totalorder %v3198, 0
        %v3201 = vxor.u32 %v3195, 2147483648
        %v3202 = vsel %vm3200, %v3194, %v3201
        %vm3203 = vcmp.eq.s32.totalorder %v3198, 2
        %v3204 = vxor.u32 %v3194, 2147483648
        %v3205 = vsel %vm3203, %v3204, %v3195
        %v3206 = vsel %vm3199, %v3202, %v3205
        %v3207 = vsel %vm3196, nan, %v3206
        %v3208 = vand.u32 2147483647, %v2580
        %vm3209 = vcmp.le.f32.partialorder %v3208, 0.7853982
        %vm3210 = vcmp.lt.s32.totalorder %v2580, 0
        %v3211 = vand.u32 %v2580, 2139095040
        %v3212 = vshrl.u32 %v3211, 23
        %v3213 = vsub.s32 %v3212, 127
        %v3214 = vand.u32 2147483647, %v2580
        %v3215 = vand.u32 %v3214, 8388607
        %v3216 = vor.u32 %v3215, 8388608
        %v3217 = vsub.s32 0, %v3216
        %v3218 = vadd.s32 %v3213, 1
        %vm3219 = vcmp.gt.s32.totalorder %v3218, 0
        %v3220 = vsel %vm3219, %v3218, 0
        %v3221 = vshrl.u32 %v3220, 5
        %v3222 = vand.u32 %v3220, 31
        %v3223 = vsub.s32 32, %v3222
        %v3224 = vshrl.u32 683565275, %v3223
        %v3225 = vshll.u32 683565275, %v3222
        %v3226 = vshrl.u32 2475754826, %v3223
        %v3227 = vor.u32 %v3225, %v3226
        %v3228 = vshll.u32 2475754826, %v3222
        %v3229 = vshrl.u32 2131351028, %v3223
        %v3230 = vor.u32 %v3228, %v3229
        %v3231 = vshll.u32 2131351028, %v3222
        %v3232 = vshrl.u32 2102212464, %v3223
        %v3233 = vor.u32 %v3231, %v3232
        %v3234 = vshll.u32 2102212464, %v3222
        %v3235 = vshrl.u32 920167782, %v3223
        %v3236 = vor.u32 %v3234, %v3235
        %v3237 = vshll.u32 920167782, %v3222
        %v3238 = vshrl.u32 1326507024, %v3223
        %v3239 = vor.u32 %v3237, %v3238
        %vm3240 = vcmp.lt.s32.totalorder %v3221, 1
        %vm3241 = vcmp.lt.s32.totalorder %v3221, 2
        %vm3242 = vcmp.lt.s32.totalorder %v3221, 3
        %vm3243 = vcmp.lt.s32.totalorder %v3221, 4
        %v3244 = vsel %vm3240, %v3224, %v3227
        %v3245 = vsel %vm3243, %v3233, 2102212464
        %v3246 = vsel %vm3242, %v3230, %v3245
        %v3247 = vsel %vm3241, %v3244, %v3246
        %v3248 = vsel %vm3240, %v3227, %v3230
        %v3249 = vsel %vm3243, %v3236, 920167782
        %v3250 = vsel %vm3242, %v3233, %v3249
        %v3251 = vsel %vm3241, %v3248, %v3250
        %v3252 = vsel %vm3240, %v3230, %v3233
        %v3253 = vsel %vm3243, %v3239, 1326507024
        %v3254 = vsel %vm3242, %v3236, %v3253
        %v3255 = vsel %vm3241, %v3252, %v3254
        %v3256 = vshll.u32 %v3216, 8
        %v3257 = vmul.u32.u64.compose %v3256, %v3255
        %v3258 = vextract.low.u32 %v3257
        %v3259 = vextract.high.u32 %v3257
        %v3260 = vmul.u32.u64.compose %v3256, %v3251
        %v3261 = vextract.low.u32 %v3260
        %v3262 = vextract.high.u32 %v3260
        %v3263 = vmul.u32 %v3256, %v3247
        %v3264 = vadd.s32 %v3259, %v3261
        %vm3265 = vc.u32 %v3259, %v3261
        %v3266 = vadd.s32 %v3262, 1
        %v3267 = vsel %vm3265, %v3266, %v3262
        %v3268 = vadd.s32 %v3263, %v3267
        %v3269 = vadd.s32 %v3268, 536870912
        %v3270 = vshrl.u32 %v3269, 30
        %v3271 = vshll.u32 %v3270, 30
        %v3272 = vsub.s32 %v3268, %v3271
        %vm3273 = vcmp.lt.s32.totalorder %v3272, 0
        %v3274 = vsub.s32 0, %v3272
        %v3275 = vsel %vm3273, %v3274, %v3272
        %v3276 = vclz %v3275
        %v3277 = vsub.s32 %v3276, 2
        %vm3278 = vcmp.gt.s32.totalorder 0, %v3277
        %v3279 = vsel %vm3278, 0, %v3277
        %v3280 = vsub.s32 32, %v3279
        %v3281 = vshll.u32 %v3272, %v3279
        %v3282 = vshrl.u32 %v3264, %v3280
        %v3283 = vor.u32 %v3281, %v3282
        %v3284 = vsub.s32 4294967266, %v3279
        %v3285 = vadd.s32 %v3284, 127
        %v3286 = vshll.u32 %v3285, 23
        %v3287 = vor.u32 4788187, %v3286
        %v3288 = vand.u32 2147483647, %v3287
        %v3290 = vcvt.s32.f32 %v3283
        %v3291 = vmul.f32 %v3290, %v3288
        %v3292 = vxor.u32 %v3291, 2147483648
        %v3293 = vsel %vm3210, %v3292, %v3291
        %v3294 = vsub.s32 4, %v3270
        %v3295 = vsel %vm3210, %v3294, %v3270
        %v3296 = vsel %vm3209, %v2580, %v3293
        %v3297 = vsel %vm3209, 0, %v3295
        %v3298 = vcosq.f32.pop %v3296
        %v3299 = vsinq.f32.pop %v3296
        %vm3300 = vweird.f32 %v2580
        %v3301 = vadd.s32 %v3297, 3
        %v3302 = vand.u32 %v3301, 3
        %vm3303 = vcmp.lt.s32.totalorder %v3302, 2
        %vm3304 = vcmp.eq.s32.totalorder %v3302, 0
        %v3305 = vxor.u32 %v3299, 2147483648
        %v3306 = vsel %vm3304, %v3298, %v3305
        %vm3307 = vcmp.eq.s32.totalorder %v3302, 2
        %v3308 = vxor.u32 %v3298, 2147483648
        %v3309 = vsel %vm3307, %v3308, %v3299
        %v3310 = vsel %vm3303, %v3306, %v3309
        %v3311 = vsel %vm3300, nan, %v3310
        %v3312 = vand.u32 2147483647, %v2582
        %vm3313 = vcmp.le.f32.partialorder %v3312, 0.7853982
        %vm3314 = vcmp.lt.s32.totalorder %v2582, 0
        %v3315 = vand.u32 %v2582, 2139095040
        %v3316 = vshrl.u32 %v3315, 23
        %v3317 = vsub.s32 %v3316, 127
        %v3318 = vand.u32 2147483647, %v2582
        %v3319 = vand.u32 %v3318, 8388607
        %v3320 = vor.u32 %v3319, 8388608
        %v3321 = vsub.s32 0, %v3320
        %v3322 = vadd.s32 %v3317, 1
        %vm3323 = vcmp.gt.s32.totalorder %v3322, 0
        %v3324 = vsel %vm3323, %v3322, 0
        %v3325 = vshrl.u32 %v3324, 5
        %v3326 = vand.u32 %v3324, 31
        %v3327 = vsub.s32 32, %v3326
        %v3328 = vshrl.u32 683565275, %v3327
        %v3329 = vshll.u32 683565275, %v3326
        %v3330 = vshrl.u32 2475754826, %v3327
        %v3331 = vor.u32 %v3329, %v3330
        %v3332 = vshll.u32 2475754826, %v3326
        %v3333 = vshrl.u32 2131351028, %v3327
        %v3334 = vor.u32 %v3332, %v3333
        %v3335 = vshll.u32 2131351028, %v3326
        %v3336 = vshrl.u32 2102212464, %v3327
        %v3337 = vor.u32 %v3335, %v3336
        %v3338 = vshll.u32 2102212464, %v3326
        %v3339 = vshrl.u32 920167782, %v3327
        %v3340 = vor.u32 %v3338, %v3339
        %v3341 = vshll.u32 920167782, %v3326
        %v3342 = vshrl.u32 1326507024, %v3327
        %v3343 = vor.u32 %v3341, %v3342
        %vm3344 = vcmp.lt.s32.totalorder %v3325, 1
        %vm3345 = vcmp.lt.s32.totalorder %v3325, 2
        %vm3346 = vcmp.lt.s32.totalorder %v3325, 3
        %vm3347 = vcmp.lt.s32.totalorder %v3325, 4
        %v3348 = vsel %vm3344, %v3328, %v3331
        %v3349 = vsel %vm3347, %v3337, 2102212464
        %v3350 = vsel %vm3346, %v3334, %v3349
        %v3351 = vsel %vm3345, %v3348, %v3350
        %v3352 = vsel %vm3344, %v3331, %v3334
        %v3353 = vsel %vm3347, %v3340, 920167782
        %v3354 = vsel %vm3346, %v3337, %v3353
        %v3355 = vsel %vm3345, %v3352, %v3354
        %v3356 = vsel %vm3344, %v3334, %v3337
        %v3357 = vsel %vm3347, %v3343, 1326507024
        %v3358 = vsel %vm3346, %v3340, %v3357
        %v3359 = vsel %vm3345, %v3356, %v3358
        %v3360 = vshll.u32 %v3320, 8
        %v3361 = vmul.u32.u64.compose %v3360, %v3359
        %v3362 = vextract.low.u32 %v3361
        %v3363 = vextract.high.u32 %v3361
        %v3364 = vmul.u32.u64.compose %v3360, %v3355
        %v3365 = vextract.low.u32 %v3364
        %v3366 = vextract.high.u32 %v3364
        %v3367 = vmul.u32 %v3360, %v3351
        %v3368 = vadd.s32 %v3363, %v3365
        %vm3369 = vc.u32 %v3363, %v3365
        %v3370 = vadd.s32 %v3366, 1
        %v3371 = vsel %vm3369, %v3370, %v3366
        %v3372 = vadd.s32 %v3367, %v3371
        %v3373 = vadd.s32 %v3372, 536870912
        %v3374 = vshrl.u32 %v3373, 30
        %v3375 = vshll.u32 %v3374, 30
        %v3376 = vsub.s32 %v3372, %v3375
        %vm3377 = vcmp.lt.s32.totalorder %v3376, 0
        %v3378 = vsub.s32 0, %v3376
        %v3379 = vsel %vm3377, %v3378, %v3376
        %v3380 = vclz %v3379
        %v3381 = vsub.s32 %v3380, 2
        %vm3382 = vcmp.gt.s32.totalorder 0, %v3381
        %v3383 = vsel %vm3382, 0, %v3381
        %v3384 = vsub.s32 32, %v3383
        %v3385 = vshll.u32 %v3376, %v3383
        %v3386 = vshrl.u32 %v3368, %v3384
        %v3387 = vor.u32 %v3385, %v3386
        %v3388 = vsub.s32 4294967266, %v3383
        %v3389 = vadd.s32 %v3388, 127
        %v3390 = vshll.u32 %v3389, 23
        %v3391 = vor.u32 4788187, %v3390
        %v3392 = vand.u32 2147483647, %v3391
        %v3394 = vcvt.s32.f32 %v3387
        %v3395 = vmul.f32 %v3394, %v3392
        %v3396 = vxor.u32 %v3395, 2147483648
        %v3397 = vsel %vm3314, %v3396, %v3395
        %v3398 = vsub.s32 4, %v3374
        %v3399 = vsel %vm3314, %v3398, %v3374
        %v3400 = vsel %vm3313, %v2582, %v3397
        %v3401 = vsel %vm3313, 0, %v3399
        %v3402 = vcosq.f32.pop %v3400
        %v3403 = vsinq.f32.pop %v3400
        %vm3404 = vweird.f32 %v2582
        %v3405 = vadd.s32 %v3401, 3
        %v3406 = vand.u32 %v3405, 3
        %vm3407 = vcmp.lt.s32.totalorder %v3406, 2
        %vm3408 = vcmp.eq.s32.totalorder %v3406, 0
        %v3409 = vxor.u32 %v3403, 2147483648
        %v3410 = vsel %vm3408, %v3402, %v3409
        %vm3411 = vcmp.eq.s32.totalorder %v3406, 2
        %v3412 = vxor.u32 %v3402, 2147483648
        %v3413 = vsel %vm3411, %v3412, %v3403
        %v3414 = vsel %vm3407, %v3410, %v3413
        %v3415 = vsel %vm3404, nan, %v3414
        %v3416 = vld [vmem:[%s5] sm:$0xff]
        %v3417 = vld [vmem:[%s5 + $0x8] sm:$0xff]
        %v3418 = vld [vmem:[%s5 + $0x10] sm:$0xff]
        %v3419 = vld [vmem:[%s5 + $0x18] sm:$0xff]
        %v3420 = vld [vmem:[%s6] sm:$0xff]
        %v3421 = vld [vmem:[%s6 + $0x8] sm:$0xff]
        %v3422 = vld [vmem:[%s6 + $0x10] sm:$0xff]
        %v3423 = vld [vmem:[%s6 + $0x18] sm:$0xff]
        %3425 = vset.pattern.permute.xlu0 0
        %3426 = vperm.xlu0 %3425, %v3420
        %v3427 = vpop.permute.xlu0 %3426
        %3430 = vset.pattern.permute.xlu0 0
        %3431 = vperm.xlu0 %3430, %v3421
        %v3432 = vpop.permute.xlu0 %3431
        %3435 = vset.pattern.permute.xlu0 0
        %3436 = vperm.xlu0 %3435, %v3422
        %v3437 = vpop.permute.xlu0 %3436
        %3440 = vset.pattern.permute.xlu0 0
        %3441 = vperm.xlu0 %3440, %v3423
        %v3442 = vpop.permute.xlu0 %3441
        %v3445 = vsel %vm1881, %v3416, 0
        %v3448 = vsel %vm1881, %v3417, 0
        %v3451 = vsel %vm1881, %v3418, 0
        %v3454 = vsel %vm1881, %v3419, 0
        %3456 = vmatprep.subr.mxu0 0.0
        %3457 = vmatpush1.msra.mxu0 0.0
        %3458 = vmatprep.subr.mxu0 0.0
        %3459 = vmatpush1.msra.mxu0 0.0
        %3460 = vmatprep.subr.mxu0 0.0
        %3461 = vmatpush1.msra.mxu0 0.0
        %3462 = vmatprep.subr.mxu0 0.0
        %3463 = vmatpush1.msra.mxu0 0.0
        %3464 = vmatprep.subr.mxu0 0.0
        %3465 = vmatpush1.msra.mxu0 0.0
        %3466 = vmatprep.subr.mxu0 0.0
        %3467 = vmatpush1.msra.mxu0 0.0
        %3468 = vmatprep.subr.mxu0 0.0
        %3469 = vmatpush1.msra.mxu0 0.0
        %3470 = vmatprep.subr.mxu0 0.0
        %3471 = vmatpush1.msra.mxu0 0.0
        %3472 = vmatprep.subr.mxu0 0.0
        %3473 = vmatpush1.msra.mxu0 0.0
        %3474 = vmatprep.subr.mxu0 0.0
        %3475 = vmatpush1.msra.mxu0 0.0
        %3476 = vmatprep.subr.mxu0 0.0
        %3477 = vmatpush1.msra.mxu0 0.0
        %3478 = vmatprep.subr.mxu0 0.0
        %3479 = vmatpush1.msra.mxu0 0.0
        %v3480 = vand.u32 %v3415, 4294901760
        %3481 = vmatprep.subr.mxu0 %v3480
        %v3482 = vand.u32 %v3311, 4294901760
        %3483 = vmatpush1.msra.mxu0 %v3482
        %v3484 = vand.u32 %v3207, 4294901760
        %3485 = vmatprep.subr.mxu0 %v3484
        %v3486 = vand.u32 %v3103, 4294901760
        %3487 = vmatpush1.msra.mxu0 %v3486
        %v3488 = vand.u32 %v2999, 4294901760
        %3489 = vmatprep.subr.mxu0 %v3488
        %v3490 = vand.u32 %v2895, 4294901760
        %3491 = vmatpush1.msra.mxu0 %v3490
        %v3492 = vand.u32 %v2791, 4294901760
        %3493 = vmatprep.subr.mxu0 %v3492
        %v3494 = vand.u32 %v2687, 4294901760
        %3495 = vmatpush1.msra.mxu0 %v3494
        %3496 = vmatprep.subr.mxu0 0.0
        %3497 = vmatpush2.msra.mxu0 0.0
        %3498 = vmatprep.subr.mxu0 0.0
        %3499 = vmatpush2.msra.mxu0 0.0
        %3500 = vmatprep.subr.mxu0 0.0
        %3501 = vmatpush2.msra.mxu0 0.0
        %3502 = vmatprep.subr.mxu0 0.0
        %3503 = vmatpush2.msra.mxu0 0.0
        %3504 = vmatprep.subr.mxu0 0.0
        %3505 = vmatpush2.msra.mxu0 0.0
        %3506 = vmatprep.subr.mxu0 0.0
        %3507 = vmatpush2.msra.mxu0 0.0
        %3508 = vmatprep.subr.mxu0 0.0
        %3509 = vmatpush2.msra.mxu0 0.0
        %3510 = vmatprep.subr.mxu0 0.0
        %3511 = vmatpush2.msra.mxu0 0.0
        %3512 = vmatprep.subr.mxu0 0.0
        %3513 = vmatpush2.msra.mxu0 0.0
        %3514 = vmatprep.subr.mxu0 0.0
        %3515 = vmatpush2.msra.mxu0 0.0
        %3516 = vmatprep.subr.mxu0 0.0
        %3517 = vmatpush2.msra.mxu0 0.0
        %3518 = vmatprep.subr.mxu0 0.0
        %3519 = vmatpush2.msra.mxu0 0.0
        %3520 = vmatprep.subr.mxu0 0.0
        %3521 = vmatpush2.msra.mxu0 0.0
        %3522 = vmatprep.subr.mxu0 0.0
        %3523 = vmatpush2.msra.mxu0 0.0
        %3524 = vmatprep.subr.mxu0 0.0
        %3525 = vmatpush2.msra.mxu0 0.0
        %3526 = vmatprep.subr.mxu0 0.0
        %3527 = vmatpush2.msra.mxu0 0.0
        %3528 = vmatprep.mubr.f32.mxu0 0.0
        %v3529 = vand.u32 %v3445, 4294901760
        %v3530 = vsub.f32 %v3445, %v3529
        %v3531 = vand.u32 %v3530, 4294901760
        %v3532 = vsub.f32 %v3530, %v3531
        %v3533 = vand.u32 %v3532, 4294901760
        %3534 = vmatmul.mubr.f32.gmra.mxu0 %v3533
        %v3535 = vpop.f32.mrf.mxu0
        %v3536 = vadd.f32 %v3427, %v3535
        %v3537 = vpop.f32.mrf.mxu0
        %v3538 = vadd.f32 %v3427, %v3537
        %3539 = vmatprep.mubr.f32.mxu0 0.0
        %v3540 = vand.u32 %v3448, 4294901760
        %v3541 = vsub.f32 %v3448, %v3540
        %v3542 = vand.u32 %v3541, 4294901760
        %v3543 = vsub.f32 %v3541, %v3542
        %v3544 = vand.u32 %v3543, 4294901760
        %3545 = vmatmul.mubr.f32.gmra.mxu0 %v3544
        %v3546 = vpop.f32.mrf.mxu0
        %v3547 = vadd.f32 %v3432, %v3546
        %v3548 = vpop.f32.mrf.mxu0
        %v3549 = vadd.f32 %v3432, %v3548
        %3550 = vmatprep.mubr.f32.mxu0 0.0
        %v3551 = vand.u32 %v3451, 4294901760
        %v3552 = vsub.f32 %v3451, %v3551
        %v3553 = vand.u32 %v3552, 4294901760
        %v3554 = vsub.f32 %v3552, %v3553
        %v3555 = vand.u32 %v3554, 4294901760
        %3556 = vmatmul.mubr.f32.gmra.mxu0 %v3555
        %v3557 = vpop.f32.mrf.mxu0
        %v3558 = vadd.f32 %v3437, %v3557
        %v3559 = vpop.f32.mrf.mxu0
        %v3560 = vadd.f32 %v3437, %v3559
        %3561 = vmatprep.mubr.f32.mxu0 0.0
        %v3562 = vand.u32 %v3454, 4294901760
        %v3563 = vsub.f32 %v3454, %v3562
        %v3564 = vand.u32 %v3563, 4294901760
        %v3565 = vsub.f32 %v3563, %v3564
        %v3566 = vand.u32 %v3565, 4294901760
        %3567 = vmatmul.mubr.f32.gmra.mxu0 %v3566
        %v3568 = vpop.f32.mrf.mxu0
        %v3569 = vadd.f32 %v3442, %v3568
        %v3570 = vpop.f32.mrf.mxu0
        %v3571 = vadd.f32 %v3442, %v3570
        %3572 = vdwg.mxu0
        %3573 = vmatprep.subr.mxu0 0.0
        %3574 = vmatpush1.msra.mxu0 0.0
        %3575 = vmatprep.subr.mxu0 0.0
        %3576 = vmatpush1.msra.mxu0 0.0
        %3577 = vmatprep.subr.mxu0 0.0
        %3578 = vmatpush1.msra.mxu0 0.0
        %3579 = vmatprep.subr.mxu0 0.0
        %3580 = vmatpush1.msra.mxu0 0.0
        %3581 = vmatprep.subr.mxu0 0.0
        %3582 = vmatpush1.msra.mxu0 0.0
        %3583 = vmatprep.subr.mxu0 0.0
        %3584 = vmatpush1.msra.mxu0 0.0
        %3585 = vmatprep.subr.mxu0 0.0
        %3586 = vmatpush1.msra.mxu0 0.0
        %3587 = vmatprep.subr.mxu0 0.0
        %3588 = vmatpush1.msra.mxu0 0.0
        %3589 = vmatprep.subr.mxu0 0.0
        %3590 = vmatpush1.msra.mxu0 0.0
        %3591 = vmatprep.subr.mxu0 0.0
        %3592 = vmatpush1.msra.mxu0 0.0
        %3593 = vmatprep.subr.mxu0 0.0
        %3594 = vmatpush1.msra.mxu0 0.0
        %3595 = vmatprep.subr.mxu0 0.0
        %3596 = vmatpush1.msra.mxu0 0.0
        %v3597 = vand.u32 %v3415, 4294901760
        %v3598 = vsub.f32 %v3415, %v3597
        %v3599 = vand.u32 %v3598, 4294901760
        %v3600 = vsub.f32 %v3598, %v3599
        %v3601 = vand.u32 %v3600, 4294901760
        %3602 = vmatprep.subr.mxu0 %v3601
        %v3603 = vand.u32 %v3311, 4294901760
        %v3604 = vsub.f32 %v3311, %v3603
        %v3605 = vand.u32 %v3604, 4294901760
        %v3606 = vsub.f32 %v3604, %v3605
        %v3607 = vand.u32 %v3606, 4294901760
        %3608 = vmatpush1.msra.mxu0 %v3607
        %v3609 = vand.u32 %v3207, 4294901760
        %v3610 = vsub.f32 %v3207, %v3609
        %v3611 = vand.u32 %v3610, 4294901760
        %v3612 = vsub.f32 %v3610, %v3611
        %v3613 = vand.u32 %v3612, 4294901760
        %3614 = vmatprep.subr.mxu0 %v3613
        %v3615 = vand.u32 %v3103, 4294901760
        %v3616 = vsub.f32 %v3103, %v3615
        %v3617 = vand.u32 %v3616, 4294901760
        %v3618 = vsub.f32 %v3616, %v3617
        %v3619 = vand.u32 %v3618, 4294901760
        %3620 = vmatpush1.msra.mxu0 %v3619
        %v3621 = vand.u32 %v2999, 4294901760
        %v3622 = vsub.f32 %v2999, %v3621
        %v3623 = vand.u32 %v3622, 4294901760
        %v3624 = vsub.f32 %v3622, %v3623
        %v3625 = vand.u32 %v3624, 4294901760
        %3626 = vmatprep.subr.mxu0 %v3625
        %v3627 = vand.u32 %v2895, 4294901760
        %v3628 = vsub.f32 %v2895, %v3627
        %v3629 = vand.u32 %v3628, 4294901760
        %v3630 = vsub.f32 %v3628, %v3629
        %v3631 = vand.u32 %v3630, 4294901760
        %3632 = vmatpush1.msra.mxu0 %v3631
        %v3633 = vand.u32 %v2791, 4294901760
        %v3634 = vsub.f32 %v2791, %v3633
        %v3635 = vand.u32 %v3634, 4294901760
        %v3636 = vsub.f32 %v3634, %v3635
        %v3637 = vand.u32 %v3636, 4294901760
        %3638 = vmatprep.subr.mxu0 %v3637
        %v3639 = vand.u32 %v2687, 4294901760
        %v3640 = vsub.f32 %v2687, %v3639
        %v3641 = vand.u32 %v3640, 4294901760
        %v3642 = vsub.f32 %v3640, %v3641
        %v3643 = vand.u32 %v3642, 4294901760
        %3644 = vmatpush1.msra.mxu0 %v3643
        %3645 = vmatprep.subr.mxu0 0.0
        %3646 = vmatpush2.msra.mxu0 0.0
        %3647 = vmatprep.subr.mxu0 0.0
        %3648 = vmatpush2.msra.mxu0 0.0
        %3649 = vmatprep.subr.mxu0 0.0
        %3650 = vmatpush2.msra.mxu0 0.0
        %3651 = vmatprep.subr.mxu0 0.0
        %3652 = vmatpush2.msra.mxu0 0.0
        %3653 = vmatprep.subr.mxu0 0.0
        %3654 = vmatpush2.msra.mxu0 0.0
        %3655 = vmatprep.subr.mxu0 0.0
        %3656 = vmatpush2.msra.mxu0 0.0
        %3657 = vmatprep.subr.mxu0 0.0
        %3658 = vmatpush2.msra.mxu0 0.0
        %3659 = vmatprep.subr.mxu0 0.0
        %3660 = vmatpush2.msra.mxu0 0.0
        %3661 = vmatprep.subr.mxu0 0.0
        %3662 = vmatpush2.msra.mxu0 0.0
        %3663 = vmatprep.subr.mxu0 0.0
        %3664 = vmatpush2.msra.mxu0 0.0
        %3665 = vmatprep.subr.mxu0 0.0
        %3666 = vmatpush2.msra.mxu0 0.0
        %3667 = vmatprep.subr.mxu0 0.0
        %3668 = vmatpush2.msra.mxu0 0.0
        %3669 = vmatprep.subr.mxu0 0.0
        %3670 = vmatpush2.msra.mxu0 0.0
        %3671 = vmatprep.subr.mxu0 0.0
        %3672 = vmatpush2.msra.mxu0 0.0
        %3673 = vmatprep.subr.mxu0 0.0
        %3674 = vmatpush2.msra.mxu0 0.0
        %3675 = vmatprep.subr.mxu0 0.0
        %3676 = vmatpush2.msra.mxu0 0.0
        %3677 = vmatprep.mubr.f32.mxu0 0.0
        %v3678 = vand.u32 %v3445, 4294901760
        %3679 = vmatmul.mubr.f32.gmra.mxu0 %v3678
        %v3680 = vpop.f32.mrf.mxu0
        %v3681 = vadd.f32 %v3536, %v3680
        %v3682 = vpop.f32.mrf.mxu0
        %v3683 = vadd.f32 %v3538, %v3682
        %3684 = vmatprep.mubr.f32.mxu0 0.0
        %v3685 = vand.u32 %v3448, 4294901760
        %3686 = vmatmul.mubr.f32.gmra.mxu0 %v3685
        %v3687 = vpop.f32.mrf.mxu0
        %v3688 = vadd.f32 %v3547, %v3687
        %v3689 = vpop.f32.mrf.mxu0
        %v3690 = vadd.f32 %v3549, %v3689
        %3691 = vmatprep.mubr.f32.mxu0 0.0
        %v3692 = vand.u32 %v3451, 4294901760
        %3693 = vmatmul.mubr.f32.gmra.mxu0 %v3692
        %v3694 = vpop.f32.mrf.mxu0
        %v3695 = vadd.f32 %v3558, %v3694
        %v3696 = vpop.f32.mrf.mxu0
        %v3697 = vadd.f32 %v3560, %v3696
        %3698 = vmatprep.mubr.f32.mxu0 0.0
        %v3699 = vand.u32 %v3454, 4294901760
        %3700 = vmatmul.mubr.f32.gmra.mxu0 %v3699
        %v3701 = vpop.f32.mrf.mxu0
        %v3702 = vadd.f32 %v3569, %v3701
        %v3703 = vpop.f32.mrf.mxu0
        %v3704 = vadd.f32 %v3571, %v3703
        %3705 = vdwg.mxu0
        %3706 = vmatprep.subr.mxu0 0.0
        %3707 = vmatpush1.msra.mxu0 0.0
        %3708 = vmatprep.subr.mxu0 0.0
        %3709 = vmatpush1.msra.mxu0 0.0
        %3710 = vmatprep.subr.mxu0 0.0
        %3711 = vmatpush1.msra.mxu0 0.0
        %3712 = vmatprep.subr.mxu0 0.0
        %3713 = vmatpush1.msra.mxu0 0.0
        %3714 = vmatprep.subr.mxu0 0.0
        %3715 = vmatpush1.msra.mxu0 0.0
        %3716 = vmatprep.subr.mxu0 0.0
        %3717 = vmatpush1.msra.mxu0 0.0
        %3718 = vmatprep.subr.mxu0 0.0
        %3719 = vmatpush1.msra.mxu0 0.0
        %3720 = vmatprep.subr.mxu0 0.0
        %3721 = vmatpush1.msra.mxu0 0.0
        %3722 = vmatprep.subr.mxu0 0.0
        %3723 = vmatpush1.msra.mxu0 0.0
        %3724 = vmatprep.subr.mxu0 0.0
        %3725 = vmatpush1.msra.mxu0 0.0
        %3726 = vmatprep.subr.mxu0 0.0
        %3727 = vmatpush1.msra.mxu0 0.0
        %3728 = vmatprep.subr.mxu0 0.0
        %3729 = vmatpush1.msra.mxu0 0.0
        %v3730 = vand.u32 %v3415, 4294901760
        %v3731 = vsub.f32 %v3415, %v3730
        %3732 = vmatprep.subr.mxu0 %v3731
        %v3733 = vand.u32 %v3311, 4294901760
        %v3734 = vsub.f32 %v3311, %v3733
        %3735 = vmatpush1.msra.mxu0 %v3734
        %v3736 = vand.u32 %v3207, 4294901760
        %v3737 = vsub.f32 %v3207, %v3736
        %3738 = vmatprep.subr.mxu0 %v3737
        %v3739 = vand.u32 %v3103, 4294901760
        %v3740 = vsub.f32 %v3103, %v3739
        %3741 = vmatpush1.msra.mxu0 %v3740
        %v3742 = vand.u32 %v2999, 4294901760
        %v3743 = vsub.f32 %v2999, %v3742
        %3744 = vmatprep.subr.mxu0 %v3743
        %v3745 = vand.u32 %v2895, 4294901760
        %v3746 = vsub.f32 %v2895, %v3745
        %3747 = vmatpush1.msra.mxu0 %v3746
        %v3748 = vand.u32 %v2791, 4294901760
        %v3749 = vsub.f32 %v2791, %v3748
        %3750 = vmatprep.subr.mxu0 %v3749
        %v3751 = vand.u32 %v2687, 4294901760
        %v3752 = vsub.f32 %v2687, %v3751
        %3753 = vmatpush1.msra.mxu0 %v3752
        %3754 = vmatprep.subr.mxu0 0.0
        %3755 = vmatpush2.msra.mxu0 0.0
        %3756 = vmatprep.subr.mxu0 0.0
        %3757 = vmatpush2.msra.mxu0 0.0
        %3758 = vmatprep.subr.mxu0 0.0
        %3759 = vmatpush2.msra.mxu0 0.0
        %3760 = vmatprep.subr.mxu0 0.0
        %3761 = vmatpush2.msra.mxu0 0.0
        %3762 = vmatprep.subr.mxu0 0.0
        %3763 = vmatpush2.msra.mxu0 0.0
        %3764 = vmatprep.subr.mxu0 0.0
        %3765 = vmatpush2.msra.mxu0 0.0
        %3766 = vmatprep.subr.mxu0 0.0
        %3767 = vmatpush2.msra.mxu0 0.0
        %3768 = vmatprep.subr.mxu0 0.0
        %3769 = vmatpush2.msra.mxu0 0.0
        %3770 = vmatprep.subr.mxu0 0.0
        %3771 = vmatpush2.msra.mxu0 0.0
        %3772 = vmatprep.subr.mxu0 0.0
        %3773 = vmatpush2.msra.mxu0 0.0
        %3774 = vmatprep.subr.mxu0 0.0
        %3775 = vmatpush2.msra.mxu0 0.0
        %3776 = vmatprep.subr.mxu0 0.0
        %3777 = vmatpush2.msra.mxu0 0.0
        %3778 = vmatprep.subr.mxu0 0.0
        %3779 = vmatpush2.msra.mxu0 0.0
        %3780 = vmatprep.subr.mxu0 0.0
        %3781 = vmatpush2.msra.mxu0 0.0
        %3782 = vmatprep.subr.mxu0 0.0
        %3783 = vmatpush2.msra.mxu0 0.0
        %3784 = vmatprep.subr.mxu0 0.0
        %3785 = vmatpush2.msra.mxu0 0.0
        %3786 = vmatprep.mubr.f32.mxu0 0.0
        %v3787 = vand.u32 %v3445, 4294901760
        %v3788 = vsub.f32 %v3445, %v3787
        %3789 = vmatmul.mubr.f32.gmra.mxu0 %v3788
        %v3790 = vpop.f32.mrf.mxu0
        %v3791 = vadd.f32 %v3681, %v3790
        %v3792 = vpop.f32.mrf.mxu0
        %v3793 = vadd.f32 %v3683, %v3792
        %3794 = vmatprep.mubr.f32.mxu0 0.0
        %v3795 = vand.u32 %v3448, 4294901760
        %v3796 = vsub.f32 %v3448, %v3795
        %3797 = vmatmul.mubr.f32.gmra.mxu0 %v3796
        %v3798 = vpop.f32.mrf.mxu0
        %v3799 = vadd.f32 %v3688, %v3798
        %v3800 = vpop.f32.mrf.mxu0
        %v3801 = vadd.f32 %v3690, %v3800
        %3802 = vmatprep.mubr.f32.mxu0 0.0
        %v3803 = vand.u32 %v3451, 4294901760
        %v3804 = vsub.f32 %v3451, %v3803
        %3805 = vmatmul.mubr.f32.gmra.mxu0 %v3804
        %v3806 = vpop.f32.mrf.mxu0
        %v3807 = vadd.f32 %v3695, %v3806
        %v3808 = vpop.f32.mrf.mxu0
        %v3809 = vadd.f32 %v3697, %v3808
        %3810 = vmatprep.mubr.f32.mxu0 0.0
        %v3811 = vand.u32 %v3454, 4294901760
        %v3812 = vsub.f32 %v3454, %v3811
        %3813 = vmatmul.mubr.f32.gmra.mxu0 %v3812
        %v3814 = vpop.f32.mrf.mxu0
        %v3815 = vadd.f32 %v3702, %v3814
        %v3816 = vpop.f32.mrf.mxu0
        %v3817 = vadd.f32 %v3704, %v3816
        %3818 = vdwg.mxu0
        %3819 = vmatprep.subr.mxu0 0.0
        %3820 = vmatpush1.msra.mxu0 0.0
        %3821 = vmatprep.subr.mxu0 0.0
        %3822 = vmatpush1.msra.mxu0 0.0
        %3823 = vmatprep.subr.mxu0 0.0
        %3824 = vmatpush1.msra.mxu0 0.0
        %3825 = vmatprep.subr.mxu0 0.0
        %3826 = vmatpush1.msra.mxu0 0.0
        %3827 = vmatprep.subr.mxu0 0.0
        %3828 = vmatpush1.msra.mxu0 0.0
        %3829 = vmatprep.subr.mxu0 0.0
        %3830 = vmatpush1.msra.mxu0 0.0
        %3831 = vmatprep.subr.mxu0 0.0
        %3832 = vmatpush1.msra.mxu0 0.0
        %3833 = vmatprep.subr.mxu0 0.0
        %3834 = vmatpush1.msra.mxu0 0.0
        %3835 = vmatprep.subr.mxu0 0.0
        %3836 = vmatpush1.msra.mxu0 0.0
        %3837 = vmatprep.subr.mxu0 0.0
        %3838 = vmatpush1.msra.mxu0 0.0
        %3839 = vmatprep.subr.mxu0 0.0
        %3840 = vmatpush1.msra.mxu0 0.0
        %3841 = vmatprep.subr.mxu0 0.0
        %3842 = vmatpush1.msra.mxu0 0.0
        %v3843 = vand.u32 %v3415, 4294901760
        %3844 = vmatprep.subr.mxu0 %v3843
        %v3845 = vand.u32 %v3311, 4294901760
        %3846 = vmatpush1.msra.mxu0 %v3845
        %v3847 = vand.u32 %v3207, 4294901760
        %3848 = vmatprep.subr.mxu0 %v3847
        %v3849 = vand.u32 %v3103, 4294901760
        %3850 = vmatpush1.msra.mxu0 %v3849
        %v3851 = vand.u32 %v2999, 4294901760
        %3852 = vmatprep.subr.mxu0 %v3851
        %v3853 = vand.u32 %v2895, 4294901760
        %3854 = vmatpush1.msra.mxu0 %v3853
        %v3855 = vand.u32 %v2791, 4294901760
        %3856 = vmatprep.subr.mxu0 %v3855
        %v3857 = vand.u32 %v2687, 4294901760
        %3858 = vmatpush1.msra.mxu0 %v3857
        %3859 = vmatprep.subr.mxu0 0.0
        %3860 = vmatpush2.msra.mxu0 0.0
        %3861 = vmatprep.subr.mxu0 0.0
        %3862 = vmatpush2.msra.mxu0 0.0
        %3863 = vmatprep.subr.mxu0 0.0
        %3864 = vmatpush2.msra.mxu0 0.0
        %3865 = vmatprep.subr.mxu0 0.0
        %3866 = vmatpush2.msra.mxu0 0.0
        %3867 = vmatprep.subr.mxu0 0.0
        %3868 = vmatpush2.msra.mxu0 0.0
        %3869 = vmatprep.subr.mxu0 0.0
        %3870 = vmatpush2.msra.mxu0 0.0
        %3871 = vmatprep.subr.mxu0 0.0
        %3872 = vmatpush2.msra.mxu0 0.0
        %3873 = vmatprep.subr.mxu0 0.0
        %3874 = vmatpush2.msra.mxu0 0.0
        %3875 = vmatprep.subr.mxu0 0.0
        %3876 = vmatpush2.msra.mxu0 0.0
        %3877 = vmatprep.subr.mxu0 0.0
        %3878 = vmatpush2.msra.mxu0 0.0
        %3879 = vmatprep.subr.mxu0 0.0
        %3880 = vmatpush2.msra.mxu0 0.0
        %3881 = vmatprep.subr.mxu0 0.0
        %3882 = vmatpush2.msra.mxu0 0.0
        %3883 = vmatprep.subr.mxu0 0.0
        %3884 = vmatpush2.msra.mxu0 0.0
        %3885 = vmatprep.subr.mxu0 0.0
        %3886 = vmatpush2.msra.mxu0 0.0
        %3887 = vmatprep.subr.mxu0 0.0
        %3888 = vmatpush2.msra.mxu0 0.0
        %3889 = vmatprep.subr.mxu0 0.0
        %3890 = vmatpush2.msra.mxu0 0.0
        %3891 = vmatprep.mubr.f32.mxu0 0.0
        %v3892 = vand.u32 %v3445, 4294901760
        %v3893 = vsub.f32 %v3445, %v3892
        %v3894 = vand.u32 %v3893, 4294901760
        %3895 = vmatmul.mubr.f32.gmra.mxu0 %v3894
        %v3896 = vpop.f32.mrf.mxu0
        %v3897 = vadd.f32 %v3791, %v3896
        %v3898 = vpop.f32.mrf.mxu0
        %v3899 = vadd.f32 %v3793, %v3898
        %3900 = vmatprep.mubr.f32.mxu0 0.0
        %v3901 = vand.u32 %v3448, 4294901760
        %v3902 = vsub.f32 %v3448, %v3901
        %v3903 = vand.u32 %v3902, 4294901760
        %3904 = vmatmul.mubr.f32.gmra.mxu0 %v3903
        %v3905 = vpop.f32.mrf.mxu0
        %v3906 = vadd.f32 %v3799, %v3905
        %v3907 = vpop.f32.mrf.mxu0
        %v3908 = vadd.f32 %v3801, %v3907
        %3909 = vmatprep.mubr.f32.mxu0 0.0
        %v3910 = vand.u32 %v3451, 4294901760
        %v3911 = vsub.f32 %v3451, %v3910
        %v3912 = vand.u32 %v3911, 4294901760
        %3913 = vmatmul.mubr.f32.gmra.mxu0 %v3912
        %v3914 = vpop.f32.mrf.mxu0
        %v3915 = vadd.f32 %v3807, %v3914
        %v3916 = vpop.f32.mrf.mxu0
        %v3917 = vadd.f32 %v3809, %v3916
        %3918 = vmatprep.mubr.f32.mxu0 0.0
        %v3919 = vand.u32 %v3454, 4294901760
        %v3920 = vsub.f32 %v3454, %v3919
        %v3921 = vand.u32 %v3920, 4294901760
        %3922 = vmatmul.mubr.f32.gmra.mxu0 %v3921
        %v3923 = vpop.f32.mrf.mxu0
        %v3924 = vadd.f32 %v3815, %v3923
        %v3925 = vpop.f32.mrf.mxu0
        %v3926 = vadd.f32 %v3817, %v3925
        %3927 = vdwg.mxu0
        %3928 = vmatprep.subr.mxu0 0.0
        %3929 = vmatpush1.msra.mxu0 0.0
        %3930 = vmatprep.subr.mxu0 0.0
        %3931 = vmatpush1.msra.mxu0 0.0
        %3932 = vmatprep.subr.mxu0 0.0
        %3933 = vmatpush1.msra.mxu0 0.0
        %3934 = vmatprep.subr.mxu0 0.0
        %3935 = vmatpush1.msra.mxu0 0.0
        %3936 = vmatprep.subr.mxu0 0.0
        %3937 = vmatpush1.msra.mxu0 0.0
        %3938 = vmatprep.subr.mxu0 0.0
        %3939 = vmatpush1.msra.mxu0 0.0
        %3940 = vmatprep.subr.mxu0 0.0
        %3941 = vmatpush1.msra.mxu0 0.0
        %3942 = vmatprep.subr.mxu0 0.0
        %3943 = vmatpush1.msra.mxu0 0.0
        %3944 = vmatprep.subr.mxu0 0.0
        %3945 = vmatpush1.msra.mxu0 0.0
        %3946 = vmatprep.subr.mxu0 0.0
        %3947 = vmatpush1.msra.mxu0 0.0
        %3948 = vmatprep.subr.mxu0 0.0
        %3949 = vmatpush1.msra.mxu0 0.0
        %3950 = vmatprep.subr.mxu0 0.0
        %3951 = vmatpush1.msra.mxu0 0.0
        %v3952 = vand.u32 %v3415, 4294901760
        %v3953 = vsub.f32 %v3415, %v3952
        %v3954 = vand.u32 %v3953, 4294901760
        %3955 = vmatprep.subr.mxu0 %v3954
        %v3956 = vand.u32 %v3311, 4294901760
        %v3957 = vsub.f32 %v3311, %v3956
        %v3958 = vand.u32 %v3957, 4294901760
        %3959 = vmatpush1.msra.mxu0 %v3958
        %v3960 = vand.u32 %v3207, 4294901760
        %v3961 = vsub.f32 %v3207, %v3960
        %v3962 = vand.u32 %v3961, 4294901760
        %3963 = vmatprep.subr.mxu0 %v3962
        %v3964 = vand.u32 %v3103, 4294901760
        %v3965 = vsub.f32 %v3103, %v3964
        %v3966 = vand.u32 %v3965, 4294901760
        %3967 = vmatpush1.msra.mxu0 %v3966
        %v3968 = vand.u32 %v2999, 4294901760
        %v3969 = vsub.f32 %v2999, %v3968
        %v3970 = vand.u32 %v3969, 4294901760
        %3971 = vmatprep.subr.mxu0 %v3970
        %v3972 = vand.u32 %v2895, 4294901760
        %v3973 = vsub.f32 %v2895, %v3972
        %v3974 = vand.u32 %v3973, 4294901760
        %3975 = vmatpush1.msra.mxu0 %v3974
        %v3976 = vand.u32 %v2791, 4294901760
        %v3977 = vsub.f32 %v2791, %v3976
        %v3978 = vand.u32 %v3977, 4294901760
        %3979 = vmatprep.subr.mxu0 %v3978
        %v3980 = vand.u32 %v2687, 4294901760
        %v3981 = vsub.f32 %v2687, %v3980
        %v3982 = vand.u32 %v3981, 4294901760
        %3983 = vmatpush1.msra.mxu0 %v3982
        %3984 = vmatprep.subr.mxu0 0.0
        %3985 = vmatpush2.msra.mxu0 0.0
        %3986 = vmatprep.subr.mxu0 0.0
        %3987 = vmatpush2.msra.mxu0 0.0
        %3988 = vmatprep.subr.mxu0 0.0
        %3989 = vmatpush2.msra.mxu0 0.0
        %3990 = vmatprep.subr.mxu0 0.0
        %3991 = vmatpush2.msra.mxu0 0.0
        %3992 = vmatprep.subr.mxu0 0.0
        %3993 = vmatpush2.msra.mxu0 0.0
        %3994 = vmatprep.subr.mxu0 0.0
        %3995 = vmatpush2.msra.mxu0 0.0
        %3996 = vmatprep.subr.mxu0 0.0
        %3997 = vmatpush2.msra.mxu0 0.0
        %3998 = vmatprep.subr.mxu0 0.0
        %3999 = vmatpush2.msra.mxu0 0.0
        %4000 = vmatprep.subr.mxu0 0.0
        %4001 = vmatpush2.msra.mxu0 0.0
        %4002 = vmatprep.subr.mxu0 0.0
        %4003 = vmatpush2.msra.mxu0 0.0
        %4004 = vmatprep.subr.mxu0 0.0
        %4005 = vmatpush2.msra.mxu0 0.0
        %4006 = vmatprep.subr.mxu0 0.0
        %4007 = vmatpush2.msra.mxu0 0.0
        %4008 = vmatprep.subr.mxu0 0.0
        %4009 = vmatpush2.msra.mxu0 0.0
        %4010 = vmatprep.subr.mxu0 0.0
        %4011 = vmatpush2.msra.mxu0 0.0
        %4012 = vmatprep.subr.mxu0 0.0
        %4013 = vmatpush2.msra.mxu0 0.0
        %4014 = vmatprep.subr.mxu0 0.0
        %4015 = vmatpush2.msra.mxu0 0.0
        %4016 = vmatprep.mubr.f32.mxu0 0.0
        %v4017 = vand.u32 %v3445, 4294901760
        %4018 = vmatmul.mubr.f32.gmra.mxu0 %v4017
        %v4019 = vpop.f32.mrf.mxu0
        %v4020 = vadd.f32 %v3897, %v4019
        %v4021 = vpop.f32.mrf.mxu0
        %v4022 = vadd.f32 %v3899, %v4021
        %4023 = vmatprep.mubr.f32.mxu0 0.0
        %v4024 = vand.u32 %v3448, 4294901760
        %4025 = vmatmul.mubr.f32.gmra.mxu0 %v4024
        %v4026 = vpop.f32.mrf.mxu0
        %v4027 = vadd.f32 %v3906, %v4026
        %v4028 = vpop.f32.mrf.mxu0
        %v4029 = vadd.f32 %v3908, %v4028
        %4030 = vmatprep.mubr.f32.mxu0 0.0
        %v4031 = vand.u32 %v3451, 4294901760
        %4032 = vmatmul.mubr.f32.gmra.mxu0 %v4031
        %v4033 = vpop.f32.mrf.mxu0
        %v4034 = vadd.f32 %v3915, %v4033
        %v4035 = vpop.f32.mrf.mxu0
        %v4036 = vadd.f32 %v3917, %v4035
        %4037 = vmatprep.mubr.f32.mxu0 0.0
        %v4038 = vand.u32 %v3454, 4294901760
        %4039 = vmatmul.mubr.f32.gmra.mxu0 %v4038
        %v4040 = vpop.f32.mrf.mxu0
        %v4041 = vadd.f32 %v3924, %v4040
        %v4042 = vpop.f32.mrf.mxu0
        %v4043 = vadd.f32 %v3926, %v4042
        %4044 = vdwg.mxu0
        %4045 = vmatprep.subr.mxu0 0.0
        %4046 = vmatpush1.msra.mxu0 0.0
        %4047 = vmatprep.subr.mxu0 0.0
        %4048 = vmatpush1.msra.mxu0 0.0
        %4049 = vmatprep.subr.mxu0 0.0
        %4050 = vmatpush1.msra.mxu0 0.0
        %4051 = vmatprep.subr.mxu0 0.0
        %4052 = vmatpush1.msra.mxu0 0.0
        %4053 = vmatprep.subr.mxu0 0.0
        %4054 = vmatpush1.msra.mxu0 0.0
        %4055 = vmatprep.subr.mxu0 0.0
        %4056 = vmatpush1.msra.mxu0 0.0
        %4057 = vmatprep.subr.mxu0 0.0
        %4058 = vmatpush1.msra.mxu0 0.0
        %4059 = vmatprep.subr.mxu0 0.0
        %4060 = vmatpush1.msra.mxu0 0.0
        %4061 = vmatprep.subr.mxu0 0.0
        %4062 = vmatpush1.msra.mxu0 0.0
        %4063 = vmatprep.subr.mxu0 0.0
        %4064 = vmatpush1.msra.mxu0 0.0
        %4065 = vmatprep.subr.mxu0 0.0
        %4066 = vmatpush1.msra.mxu0 0.0
        %4067 = vmatprep.subr.mxu0 0.0
        %4068 = vmatpush1.msra.mxu0 0.0
        %v4069 = vand.u32 %v3415, 4294901760
        %4070 = vmatprep.subr.mxu0 %v4069
        %v4071 = vand.u32 %v3311, 4294901760
        %4072 = vmatpush1.msra.mxu0 %v4071
        %v4073 = vand.u32 %v3207, 4294901760
        %4074 = vmatprep.subr.mxu0 %v4073
        %v4075 = vand.u32 %v3103, 4294901760
        %4076 = vmatpush1.msra.mxu0 %v4075
        %v4077 = vand.u32 %v2999, 4294901760
        %4078 = vmatprep.subr.mxu0 %v4077
        %v4079 = vand.u32 %v2895, 4294901760
        %4080 = vmatpush1.msra.mxu0 %v4079
        %v4081 = vand.u32 %v2791, 4294901760
        %4082 = vmatprep.subr.mxu0 %v4081
        %v4083 = vand.u32 %v2687, 4294901760
        %4084 = vmatpush1.msra.mxu0 %v4083
        %4085 = vmatprep.subr.mxu0 0.0
        %4086 = vmatpush2.msra.mxu0 0.0
        %4087 = vmatprep.subr.mxu0 0.0
        %4088 = vmatpush2.msra.mxu0 0.0
        %4089 = vmatprep.subr.mxu0 0.0
        %4090 = vmatpush2.msra.mxu0 0.0
        %4091 = vmatprep.subr.mxu0 0.0
        %4092 = vmatpush2.msra.mxu0 0.0
        %4093 = vmatprep.subr.mxu0 0.0
        %4094 = vmatpush2.msra.mxu0 0.0
        %4095 = vmatprep.subr.mxu0 0.0
        %4096 = vmatpush2.msra.mxu0 0.0
        %4097 = vmatprep.subr.mxu0 0.0
        %4098 = vmatpush2.msra.mxu0 0.0
        %4099 = vmatprep.subr.mxu0 0.0
        %4100 = vmatpush2.msra.mxu0 0.0
        %4101 = vmatprep.subr.mxu0 0.0
        %4102 = vmatpush2.msra.mxu0 0.0
        %4103 = vmatprep.subr.mxu0 0.0
        %4104 = vmatpush2.msra.mxu0 0.0
        %4105 = vmatprep.subr.mxu0 0.0
        %4106 = vmatpush2.msra.mxu0 0.0
        %4107 = vmatprep.subr.mxu0 0.0
        %4108 = vmatpush2.msra.mxu0 0.0
        %4109 = vmatprep.subr.mxu0 0.0
        %4110 = vmatpush2.msra.mxu0 0.0
        %4111 = vmatprep.subr.mxu0 0.0
        %4112 = vmatpush2.msra.mxu0 0.0
        %4113 = vmatprep.subr.mxu0 0.0
        %4114 = vmatpush2.msra.mxu0 0.0
        %4115 = vmatprep.subr.mxu0 0.0
        %4116 = vmatpush2.msra.mxu0 0.0
        %4117 = vmatprep.mubr.f32.mxu0 0.0
        %v4118 = vand.u32 %v3445, 4294901760
        %4119 = vmatmul.mubr.f32.gmra.mxu0 %v4118
        %v4120 = vpop.f32.mrf.mxu0
        %v4121 = vadd.f32 %v4020, %v4120
        %v4122 = vpop.f32.mrf.mxu0
        %v4123 = vadd.f32 %v4022, %v4122
        %4124 = vmatprep.mubr.f32.mxu0 0.0
        %v4125 = vand.u32 %v3448, 4294901760
        %4126 = vmatmul.mubr.f32.gmra.mxu0 %v4125
        %v4127 = vpop.f32.mrf.mxu0
        %v4128 = vadd.f32 %v4027, %v4127
        %v4129 = vpop.f32.mrf.mxu0
        %v4130 = vadd.f32 %v4029, %v4129
        %4131 = vmatprep.mubr.f32.mxu0 0.0
        %v4132 = vand.u32 %v3451, 4294901760
        %4133 = vmatmul.mubr.f32.gmra.mxu0 %v4132
        %v4134 = vpop.f32.mrf.mxu0
        %v4135 = vadd.f32 %v4034, %v4134
        %v4136 = vpop.f32.mrf.mxu0
        %v4137 = vadd.f32 %v4036, %v4136
        %4138 = vmatprep.mubr.f32.mxu0 0.0
        %v4139 = vand.u32 %v3454, 4294901760
        %4140 = vmatmul.mubr.f32.gmra.mxu0 %v4139
        %v4141 = vpop.f32.mrf.mxu0
        %v4142 = vadd.f32 %v4041, %v4141
        %v4143 = vpop.f32.mrf.mxu0
        %v4144 = vadd.f32 %v4043, %v4143
        %4145 = vdwg.mxu0
        %v4146 = vand.u32 2147483647, %v4121
        %vm4147 = vcmp.le.f32.partialorder %v4146, 0.7853982
        %vm4148 = vcmp.lt.s32.totalorder %v4121, 0
        %v4149 = vand.u32 %v4121, 2139095040
        %v4150 = vshrl.u32 %v4149, 23
        %v4151 = vsub.s32 %v4150, 127
        %v4152 = vand.u32 2147483647, %v4121
        %v4153 = vand.u32 %v4152, 8388607
        %v4154 = vor.u32 %v4153, 8388608
        %v4155 = vsub.s32 0, %v4154
        %v4156 = vadd.s32 %v4151, 1
        %vm4157 = vcmp.gt.s32.totalorder %v4156, 0
        %v4158 = vsel %vm4157, %v4156, 0
        %v4159 = vshrl.u32 %v4158, 5
        %v4160 = vand.u32 %v4158, 31
        %v4161 = vsub.s32 32, %v4160
        %v4162 = vshrl.u32 683565275, %v4161
        %v4163 = vshll.u32 683565275, %v4160
        %v4164 = vshrl.u32 2475754826, %v4161
        %v4165 = vor.u32 %v4163, %v4164
        %v4166 = vshll.u32 2475754826, %v4160
        %v4167 = vshrl.u32 2131351028, %v4161
        %v4168 = vor.u32 %v4166, %v4167
        %v4169 = vshll.u32 2131351028, %v4160
        %v4170 = vshrl.u32 2102212464, %v4161
        %v4171 = vor.u32 %v4169, %v4170
        %v4172 = vshll.u32 2102212464, %v4160
        %v4173 = vshrl.u32 920167782, %v4161
        %v4174 = vor.u32 %v4172, %v4173
        %v4175 = vshll.u32 920167782, %v4160
        %v4176 = vshrl.u32 1326507024, %v4161
        %v4177 = vor.u32 %v4175, %v4176
        %vm4178 = vcmp.lt.s32.totalorder %v4159, 1
        %vm4179 = vcmp.lt.s32.totalorder %v4159, 2
        %vm4180 = vcmp.lt.s32.totalorder %v4159, 3
        %vm4181 = vcmp.lt.s32.totalorder %v4159, 4
        %v4182 = vsel %vm4178, %v4162, %v4165
        %v4183 = vsel %vm4181, %v4171, 2102212464
        %v4184 = vsel %vm4180, %v4168, %v4183
        %v4185 = vsel %vm4179, %v4182, %v4184
        %v4186 = vsel %vm4178, %v4165, %v4168
        %v4187 = vsel %vm4181, %v4174, 920167782
        %v4188 = vsel %vm4180, %v4171, %v4187
        %v4189 = vsel %vm4179, %v4186, %v4188
        %v4190 = vsel %vm4178, %v4168, %v4171
        %v4191 = vsel %vm4181, %v4177, 1326507024
        %v4192 = vsel %vm4180, %v4174, %v4191
        %v4193 = vsel %vm4179, %v4190, %v4192
        %v4194 = vshll.u32 %v4154, 8
        %v4195 = vmul.u32.u64.compose %v4194, %v4193
        %v4196 = vextract.low.u32 %v4195
        %v4197 = vextract.high.u32 %v4195
        %v4198 = vmul.u32.u64.compose %v4194, %v4189
        %v4199 = vextract.low.u32 %v4198
        %v4200 = vextract.high.u32 %v4198
        %v4201 = vmul.u32 %v4194, %v4185
        %v4202 = vadd.s32 %v4197, %v4199
        %vm4203 = vc.u32 %v4197, %v4199
        %v4204 = vadd.s32 %v4200, 1
        %v4205 = vsel %vm4203, %v4204, %v4200
        %v4206 = vadd.s32 %v4201, %v4205
        %v4207 = vadd.s32 %v4206, 536870912
        %v4208 = vshrl.u32 %v4207, 30
        %v4209 = vshll.u32 %v4208, 30
        %v4210 = vsub.s32 %v4206, %v4209
        %vm4211 = vcmp.lt.s32.totalorder %v4210, 0
        %v4212 = vsub.s32 0, %v4210
        %v4213 = vsel %vm4211, %v4212, %v4210
        %v4214 = vclz %v4213
        %v4215 = vsub.s32 %v4214, 2
        %vm4216 = vcmp.gt.s32.totalorder 0, %v4215
        %v4217 = vsel %vm4216, 0, %v4215
        %v4218 = vsub.s32 32, %v4217
        %v4219 = vshll.u32 %v4210, %v4217
        %v4220 = vshrl.u32 %v4202, %v4218
        %v4221 = vor.u32 %v4219, %v4220
        %v4222 = vsub.s32 4294967266, %v4217
        %v4223 = vadd.s32 %v4222, 127
        %v4224 = vshll.u32 %v4223, 23
        %v4225 = vor.u32 4788187, %v4224
        %v4226 = vand.u32 2147483647, %v4225
        %v4228 = vcvt.s32.f32 %v4221
        %v4229 = vmul.f32 %v4228, %v4226
        %v4230 = vxor.u32 %v4229, 2147483648
        %v4231 = vsel %vm4148, %v4230, %v4229
        %v4232 = vsub.s32 4, %v4208
        %v4233 = vsel %vm4148, %v4232, %v4208
        %v4234 = vsel %vm4147, %v4121, %v4231
        %v4235 = vsel %vm4147, 0, %v4233
        %v4236 = vcosq.f32.pop %v4234
        %v4237 = vsinq.f32.pop %v4234
        %vm4238 = vweird.f32 %v4121
        %v4239 = vadd.s32 %v4235, 3
        %v4240 = vand.u32 %v4239, 3
        %vm4241 = vcmp.lt.s32.totalorder %v4240, 2
        %vm4242 = vcmp.eq.s32.totalorder %v4240, 0
        %v4243 = vxor.u32 %v4237, 2147483648
        %v4244 = vsel %vm4242, %v4236, %v4243
        %vm4245 = vcmp.eq.s32.totalorder %v4240, 2
        %v4246 = vxor.u32 %v4236, 2147483648
        %v4247 = vsel %vm4245, %v4246, %v4237
        %v4248 = vsel %vm4241, %v4244, %v4247
        %v4249 = vsel %vm4238, nan, %v4248
        %v4250 = vand.u32 2147483647, %v4123
        %vm4251 = vcmp.le.f32.partialorder %v4250, 0.7853982
        %vm4252 = vcmp.lt.s32.totalorder %v4123, 0
        %v4253 = vand.u32 %v4123, 2139095040
        %v4254 = vshrl.u32 %v4253, 23
        %v4255 = vsub.s32 %v4254, 127
        %v4256 = vand.u32 2147483647, %v4123
        %v4257 = vand.u32 %v4256, 8388607
        %v4258 = vor.u32 %v4257, 8388608
        %v4259 = vsub.s32 0, %v4258
        %v4260 = vadd.s32 %v4255, 1
        %vm4261 = vcmp.gt.s32.totalorder %v4260, 0
        %v4262 = vsel %vm4261, %v4260, 0
        %v4263 = vshrl.u32 %v4262, 5
        %v4264 = vand.u32 %v4262, 31
        %v4265 = vsub.s32 32, %v4264
        %v4266 = vshrl.u32 683565275, %v4265
        %v4267 = vshll.u32 683565275, %v4264
        %v4268 = vshrl.u32 2475754826, %v4265
        %v4269 = vor.u32 %v4267, %v4268
        %v4270 = vshll.u32 2475754826, %v4264
        %v4271 = vshrl.u32 2131351028, %v4265
        %v4272 = vor.u32 %v4270, %v4271
        %v4273 = vshll.u32 2131351028, %v4264
        %v4274 = vshrl.u32 2102212464, %v4265
        %v4275 = vor.u32 %v4273, %v4274
        %v4276 = vshll.u32 2102212464, %v4264
        %v4277 = vshrl.u32 920167782, %v4265
        %v4278 = vor.u32 %v4276, %v4277
        %v4279 = vshll.u32 920167782, %v4264
        %v4280 = vshrl.u32 1326507024, %v4265
        %v4281 = vor.u32 %v4279, %v4280
        %vm4282 = vcmp.lt.s32.totalorder %v4263, 1
        %vm4283 = vcmp.lt.s32.totalorder %v4263, 2
        %vm4284 = vcmp.lt.s32.totalorder %v4263, 3
        %vm4285 = vcmp.lt.s32.totalorder %v4263, 4
        %v4286 = vsel %vm4282, %v4266, %v4269
        %v4287 = vsel %vm4285, %v4275, 2102212464
        %v4288 = vsel %vm4284, %v4272, %v4287
        %v4289 = vsel %vm4283, %v4286, %v4288
        %v4290 = vsel %vm4282, %v4269, %v4272
        %v4291 = vsel %vm4285, %v4278, 920167782
        %v4292 = vsel %vm4284, %v4275, %v4291
        %v4293 = vsel %vm4283, %v4290, %v4292
        %v4294 = vsel %vm4282, %v4272, %v4275
        %v4295 = vsel %vm4285, %v4281, 1326507024
        %v4296 = vsel %vm4284, %v4278, %v4295
        %v4297 = vsel %vm4283, %v4294, %v4296
        %v4298 = vshll.u32 %v4258, 8
        %v4299 = vmul.u32.u64.compose %v4298, %v4297
        %v4300 = vextract.low.u32 %v4299
        %v4301 = vextract.high.u32 %v4299
        %v4302 = vmul.u32.u64.compose %v4298, %v4293
        %v4303 = vextract.low.u32 %v4302
        %v4304 = vextract.high.u32 %v4302
        %v4305 = vmul.u32 %v4298, %v4289
        %v4306 = vadd.s32 %v4301, %v4303
        %vm4307 = vc.u32 %v4301, %v4303
        %v4308 = vadd.s32 %v4304, 1
        %v4309 = vsel %vm4307, %v4308, %v4304
        %v4310 = vadd.s32 %v4305, %v4309
        %v4311 = vadd.s32 %v4310, 536870912
        %v4312 = vshrl.u32 %v4311, 30
        %v4313 = vshll.u32 %v4312, 30
        %v4314 = vsub.s32 %v4310, %v4313
        %vm4315 = vcmp.lt.s32.totalorder %v4314, 0
        %v4316 = vsub.s32 0, %v4314
        %v4317 = vsel %vm4315, %v4316, %v4314
        %v4318 = vclz %v4317
        %v4319 = vsub.s32 %v4318, 2
        %vm4320 = vcmp.gt.s32.totalorder 0, %v4319
        %v4321 = vsel %vm4320, 0, %v4319
        %v4322 = vsub.s32 32, %v4321
        %v4323 = vshll.u32 %v4314, %v4321
        %v4324 = vshrl.u32 %v4306, %v4322
        %v4325 = vor.u32 %v4323, %v4324
        %v4326 = vsub.s32 4294967266, %v4321
        %v4327 = vadd.s32 %v4326, 127
        %v4328 = vshll.u32 %v4327, 23
        %v4329 = vor.u32 4788187, %v4328
        %v4330 = vand.u32 2147483647, %v4329
        %v4332 = vcvt.s32.f32 %v4325
        %v4333 = vmul.f32 %v4332, %v4330
        %v4334 = vxor.u32 %v4333, 2147483648
        %v4335 = vsel %vm4252, %v4334, %v4333
        %v4336 = vsub.s32 4, %v4312
        %v4337 = vsel %vm4252, %v4336, %v4312
        %v4338 = vsel %vm4251, %v4123, %v4335
        %v4339 = vsel %vm4251, 0, %v4337
        %v4340 = vcosq.f32.pop %v4338
        %v4341 = vsinq.f32.pop %v4338
        %vm4342 = vweird.f32 %v4123
        %v4343 = vadd.s32 %v4339, 3
        %v4344 = vand.u32 %v4343, 3
        %vm4345 = vcmp.lt.s32.totalorder %v4344, 2
        %vm4346 = vcmp.eq.s32.totalorder %v4344, 0
        %v4347 = vxor.u32 %v4341, 2147483648
        %v4348 = vsel %vm4346, %v4340, %v4347
        %vm4349 = vcmp.eq.s32.totalorder %v4344, 2
        %v4350 = vxor.u32 %v4340, 2147483648
        %v4351 = vsel %vm4349, %v4350, %v4341
        %v4352 = vsel %vm4345, %v4348, %v4351
        %v4353 = vsel %vm4342, nan, %v4352
        %v4354 = vand.u32 2147483647, %v4128
        %vm4355 = vcmp.le.f32.partialorder %v4354, 0.7853982
        %vm4356 = vcmp.lt.s32.totalorder %v4128, 0
        %v4357 = vand.u32 %v4128, 2139095040
        %v4358 = vshrl.u32 %v4357, 23
        %v4359 = vsub.s32 %v4358, 127
        %v4360 = vand.u32 2147483647, %v4128
        %v4361 = vand.u32 %v4360, 8388607
        %v4362 = vor.u32 %v4361, 8388608
        %v4363 = vsub.s32 0, %v4362
        %v4364 = vadd.s32 %v4359, 1
        %vm4365 = vcmp.gt.s32.totalorder %v4364, 0
        %v4366 = vsel %vm4365, %v4364, 0
        %v4367 = vshrl.u32 %v4366, 5
        %v4368 = vand.u32 %v4366, 31
        %v4369 = vsub.s32 32, %v4368
        %v4370 = vshrl.u32 683565275, %v4369
        %v4371 = vshll.u32 683565275, %v4368
        %v4372 = vshrl.u32 2475754826, %v4369
        %v4373 = vor.u32 %v4371, %v4372
        %v4374 = vshll.u32 2475754826, %v4368
        %v4375 = vshrl.u32 2131351028, %v4369
        %v4376 = vor.u32 %v4374, %v4375
        %v4377 = vshll.u32 2131351028, %v4368
        %v4378 = vshrl.u32 2102212464, %v4369
        %v4379 = vor.u32 %v4377, %v4378
        %v4380 = vshll.u32 2102212464, %v4368
        %v4381 = vshrl.u32 920167782, %v4369
        %v4382 = vor.u32 %v4380, %v4381
        %v4383 = vshll.u32 920167782, %v4368
        %v4384 = vshrl.u32 1326507024, %v4369
        %v4385 = vor.u32 %v4383, %v4384
        %vm4386 = vcmp.lt.s32.totalorder %v4367, 1
        %vm4387 = vcmp.lt.s32.totalorder %v4367, 2
        %vm4388 = vcmp.lt.s32.totalorder %v4367, 3
        %vm4389 = vcmp.lt.s32.totalorder %v4367, 4
        %v4390 = vsel %vm4386, %v4370, %v4373
        %v4391 = vsel %vm4389, %v4379, 2102212464
        %v4392 = vsel %vm4388, %v4376, %v4391
        %v4393 = vsel %vm4387, %v4390, %v4392
        %v4394 = vsel %vm4386, %v4373, %v4376
        %v4395 = vsel %vm4389, %v4382, 920167782
        %v4396 = vsel %vm4388, %v4379, %v4395
        %v4397 = vsel %vm4387, %v4394, %v4396
        %v4398 = vsel %vm4386, %v4376, %v4379
        %v4399 = vsel %vm4389, %v4385, 1326507024
        %v4400 = vsel %vm4388, %v4382, %v4399
        %v4401 = vsel %vm4387, %v4398, %v4400
        %v4402 = vshll.u32 %v4362, 8
        %v4403 = vmul.u32.u64.compose %v4402, %v4401
        %v4404 = vextract.low.u32 %v4403
        %v4405 = vextract.high.u32 %v4403
        %v4406 = vmul.u32.u64.compose %v4402, %v4397
        %v4407 = vextract.low.u32 %v4406
        %v4408 = vextract.high.u32 %v4406
        %v4409 = vmul.u32 %v4402, %v4393
        %v4410 = vadd.s32 %v4405, %v4407
        %vm4411 = vc.u32 %v4405, %v4407
        %v4412 = vadd.s32 %v4408, 1
        %v4413 = vsel %vm4411, %v4412, %v4408
        %v4414 = vadd.s32 %v4409, %v4413
        %v4415 = vadd.s32 %v4414, 536870912
        %v4416 = vshrl.u32 %v4415, 30
        %v4417 = vshll.u32 %v4416, 30
        %v4418 = vsub.s32 %v4414, %v4417
        %vm4419 = vcmp.lt.s32.totalorder %v4418, 0
        %v4420 = vsub.s32 0, %v4418
        %v4421 = vsel %vm4419, %v4420, %v4418
        %v4422 = vclz %v4421
        %v4423 = vsub.s32 %v4422, 2
        %vm4424 = vcmp.gt.s32.totalorder 0, %v4423
        %v4425 = vsel %vm4424, 0, %v4423
        %v4426 = vsub.s32 32, %v4425
        %v4427 = vshll.u32 %v4418, %v4425
        %v4428 = vshrl.u32 %v4410, %v4426
        %v4429 = vor.u32 %v4427, %v4428
        %v4430 = vsub.s32 4294967266, %v4425
        %v4431 = vadd.s32 %v4430, 127
        %v4432 = vshll.u32 %v4431, 23
        %v4433 = vor.u32 4788187, %v4432
        %v4434 = vand.u32 2147483647, %v4433
        %v4436 = vcvt.s32.f32 %v4429
        %v4437 = vmul.f32 %v4436, %v4434
        %v4438 = vxor.u32 %v4437, 2147483648
        %v4439 = vsel %vm4356, %v4438, %v4437
        %v4440 = vsub.s32 4, %v4416
        %v4441 = vsel %vm4356, %v4440, %v4416
        %v4442 = vsel %vm4355, %v4128, %v4439
        %v4443 = vsel %vm4355, 0, %v4441
        %v4444 = vcosq.f32.pop %v4442
        %v4445 = vsinq.f32.pop %v4442
        %vm4446 = vweird.f32 %v4128
        %v4447 = vadd.s32 %v4443, 3
        %v4448 = vand.u32 %v4447, 3
        %vm4449 = vcmp.lt.s32.totalorder %v4448, 2
        %vm4450 = vcmp.eq.s32.totalorder %v4448, 0
        %v4451 = vxor.u32 %v4445, 2147483648
        %v4452 = vsel %vm4450, %v4444, %v4451
        %vm4453 = vcmp.eq.s32.totalorder %v4448, 2
        %v4454 = vxor.u32 %v4444, 2147483648
        %v4455 = vsel %vm4453, %v4454, %v4445
        %v4456 = vsel %vm4449, %v4452, %v4455
        %v4457 = vsel %vm4446, nan, %v4456
        %v4458 = vand.u32 2147483647, %v4130
        %vm4459 = vcmp.le.f32.partialorder %v4458, 0.7853982
        %vm4460 = vcmp.lt.s32.totalorder %v4130, 0
        %v4461 = vand.u32 %v4130, 2139095040
        %v4462 = vshrl.u32 %v4461, 23
        %v4463 = vsub.s32 %v4462, 127
        %v4464 = vand.u32 2147483647, %v4130
        %v4465 = vand.u32 %v4464, 8388607
        %v4466 = vor.u32 %v4465, 8388608
        %v4467 = vsub.s32 0, %v4466
        %v4468 = vadd.s32 %v4463, 1
        %vm4469 = vcmp.gt.s32.totalorder %v4468, 0
        %v4470 = vsel %vm4469, %v4468, 0
        %v4471 = vshrl.u32 %v4470, 5
        %v4472 = vand.u32 %v4470, 31
        %v4473 = vsub.s32 32, %v4472
        %v4474 = vshrl.u32 683565275, %v4473
        %v4475 = vshll.u32 683565275, %v4472
        %v4476 = vshrl.u32 2475754826, %v4473
        %v4477 = vor.u32 %v4475, %v4476
        %v4478 = vshll.u32 2475754826, %v4472
        %v4479 = vshrl.u32 2131351028, %v4473
        %v4480 = vor.u32 %v4478, %v4479
        %v4481 = vshll.u32 2131351028, %v4472
        %v4482 = vshrl.u32 2102212464, %v4473
        %v4483 = vor.u32 %v4481, %v4482
        %v4484 = vshll.u32 2102212464, %v4472
        %v4485 = vshrl.u32 920167782, %v4473
        %v4486 = vor.u32 %v4484, %v4485
        %v4487 = vshll.u32 920167782, %v4472
        %v4488 = vshrl.u32 1326507024, %v4473
        %v4489 = vor.u32 %v4487, %v4488
        %vm4490 = vcmp.lt.s32.totalorder %v4471, 1
        %vm4491 = vcmp.lt.s32.totalorder %v4471, 2
        %vm4492 = vcmp.lt.s32.totalorder %v4471, 3
        %vm4493 = vcmp.lt.s32.totalorder %v4471, 4
        %v4494 = vsel %vm4490, %v4474, %v4477
        %v4495 = vsel %vm4493, %v4483, 2102212464
        %v4496 = vsel %vm4492, %v4480, %v4495
        %v4497 = vsel %vm4491, %v4494, %v4496
        %v4498 = vsel %vm4490, %v4477, %v4480
        %v4499 = vsel %vm4493, %v4486, 920167782
        %v4500 = vsel %vm4492, %v4483, %v4499
        %v4501 = vsel %vm4491, %v4498, %v4500
        %v4502 = vsel %vm4490, %v4480, %v4483
        %v4503 = vsel %vm4493, %v4489, 1326507024
        %v4504 = vsel %vm4492, %v4486, %v4503
        %v4505 = vsel %vm4491, %v4502, %v4504
        %v4506 = vshll.u32 %v4466, 8
        %v4507 = vmul.u32.u64.compose %v4506, %v4505
        %v4508 = vextract.low.u32 %v4507
        %v4509 = vextract.high.u32 %v4507
        %v4510 = vmul.u32.u64.compose %v4506, %v4501
        %v4511 = vextract.low.u32 %v4510
        %v4512 = vextract.high.u32 %v4510
        %v4513 = vmul.u32 %v4506, %v4497
        %v4514 = vadd.s32 %v4509, %v4511
        %vm4515 = vc.u32 %v4509, %v4511
        %v4516 = vadd.s32 %v4512, 1
        %v4517 = vsel %vm4515, %v4516, %v4512
        %v4518 = vadd.s32 %v4513, %v4517
        %v4519 = vadd.s32 %v4518, 536870912
        %v4520 = vshrl.u32 %v4519, 30
        %v4521 = vshll.u32 %v4520, 30
        %v4522 = vsub.s32 %v4518, %v4521
        %vm4523 = vcmp.lt.s32.totalorder %v4522, 0
        %v4524 = vsub.s32 0, %v4522
        %v4525 = vsel %vm4523, %v4524, %v4522
        %v4526 = vclz %v4525
        %v4527 = vsub.s32 %v4526, 2
        %vm4528 = vcmp.gt.s32.totalorder 0, %v4527
        %v4529 = vsel %vm4528, 0, %v4527
        %v4530 = vsub.s32 32, %v4529
        %v4531 = vshll.u32 %v4522, %v4529
        %v4532 = vshrl.u32 %v4514, %v4530
        %v4533 = vor.u32 %v4531, %v4532
        %v4534 = vsub.s32 4294967266, %v4529
        %v4535 = vadd.s32 %v4534, 127
        %v4536 = vshll.u32 %v4535, 23
        %v4537 = vor.u32 4788187, %v4536
        %v4538 = vand.u32 2147483647, %v4537
        %v4540 = vcvt.s32.f32 %v4533
        %v4541 = vmul.f32 %v4540, %v4538
        %v4542 = vxor.u32 %v4541, 2147483648
        %v4543 = vsel %vm4460, %v4542, %v4541
        %v4544 = vsub.s32 4, %v4520
        %v4545 = vsel %vm4460, %v4544, %v4520
        %v4546 = vsel %vm4459, %v4130, %v4543
        %v4547 = vsel %vm4459, 0, %v4545
        %v4548 = vcosq.f32.pop %v4546
        %v4549 = vsinq.f32.pop %v4546
        %vm4550 = vweird.f32 %v4130
        %v4551 = vadd.s32 %v4547, 3
        %v4552 = vand.u32 %v4551, 3
        %vm4553 = vcmp.lt.s32.totalorder %v4552, 2
        %vm4554 = vcmp.eq.s32.totalorder %v4552, 0
        %v4555 = vxor.u32 %v4549, 2147483648
        %v4556 = vsel %vm4554, %v4548, %v4555
        %vm4557 = vcmp.eq.s32.totalorder %v4552, 2
        %v4558 = vxor.u32 %v4548, 2147483648
        %v4559 = vsel %vm4557, %v4558, %v4549
        %v4560 = vsel %vm4553, %v4556, %v4559
        %v4561 = vsel %vm4550, nan, %v4560
        %v4562 = vand.u32 2147483647, %v4135
        %vm4563 = vcmp.le.f32.partialorder %v4562, 0.7853982
        %vm4564 = vcmp.lt.s32.totalorder %v4135, 0
        %v4565 = vand.u32 %v4135, 2139095040
        %v4566 = vshrl.u32 %v4565, 23
        %v4567 = vsub.s32 %v4566, 127
        %v4568 = vand.u32 2147483647, %v4135
        %v4569 = vand.u32 %v4568, 8388607
        %v4570 = vor.u32 %v4569, 8388608
        %v4571 = vsub.s32 0, %v4570
        %v4572 = vadd.s32 %v4567, 1
        %vm4573 = vcmp.gt.s32.totalorder %v4572, 0
        %v4574 = vsel %vm4573, %v4572, 0
        %v4575 = vshrl.u32 %v4574, 5
        %v4576 = vand.u32 %v4574, 31
        %v4577 = vsub.s32 32, %v4576
        %v4578 = vshrl.u32 683565275, %v4577
        %v4579 = vshll.u32 683565275, %v4576
        %v4580 = vshrl.u32 2475754826, %v4577
        %v4581 = vor.u32 %v4579, %v4580
        %v4582 = vshll.u32 2475754826, %v4576
        %v4583 = vshrl.u32 2131351028, %v4577
        %v4584 = vor.u32 %v4582, %v4583
        %v4585 = vshll.u32 2131351028, %v4576
        %v4586 = vshrl.u32 2102212464, %v4577
        %v4587 = vor.u32 %v4585, %v4586
        %v4588 = vshll.u32 2102212464, %v4576
        %v4589 = vshrl.u32 920167782, %v4577
        %v4590 = vor.u32 %v4588, %v4589
        %v4591 = vshll.u32 920167782, %v4576
        %v4592 = vshrl.u32 1326507024, %v4577
        %v4593 = vor.u32 %v4591, %v4592
        %vm4594 = vcmp.lt.s32.totalorder %v4575, 1
        %vm4595 = vcmp.lt.s32.totalorder %v4575, 2
        %vm4596 = vcmp.lt.s32.totalorder %v4575, 3
        %vm4597 = vcmp.lt.s32.totalorder %v4575, 4
        %v4598 = vsel %vm4594, %v4578, %v4581
        %v4599 = vsel %vm4597, %v4587, 2102212464
        %v4600 = vsel %vm4596, %v4584, %v4599
        %v4601 = vsel %vm4595, %v4598, %v4600
        %v4602 = vsel %vm4594, %v4581, %v4584
        %v4603 = vsel %vm4597, %v4590, 920167782
        %v4604 = vsel %vm4596, %v4587, %v4603
        %v4605 = vsel %vm4595, %v4602, %v4604
        %v4606 = vsel %vm4594, %v4584, %v4587
        %v4607 = vsel %vm4597, %v4593, 1326507024
        %v4608 = vsel %vm4596, %v4590, %v4607
        %v4609 = vsel %vm4595, %v4606, %v4608
        %v4610 = vshll.u32 %v4570, 8
        %v4611 = vmul.u32.u64.compose %v4610, %v4609
        %v4612 = vextract.low.u32 %v4611
        %v4613 = vextract.high.u32 %v4611
        %v4614 = vmul.u32.u64.compose %v4610, %v4605
        %v4615 = vextract.low.u32 %v4614
        %v4616 = vextract.high.u32 %v4614
        %v4617 = vmul.u32 %v4610, %v4601
        %v4618 = vadd.s32 %v4613, %v4615
        %vm4619 = vc.u32 %v4613, %v4615
        %v4620 = vadd.s32 %v4616, 1
        %v4621 = vsel %vm4619, %v4620, %v4616
        %v4622 = vadd.s32 %v4617, %v4621
        %v4623 = vadd.s32 %v4622, 536870912
        %v4624 = vshrl.u32 %v4623, 30
        %v4625 = vshll.u32 %v4624, 30
        %v4626 = vsub.s32 %v4622, %v4625
        %vm4627 = vcmp.lt.s32.totalorder %v4626, 0
        %v4628 = vsub.s32 0, %v4626
        %v4629 = vsel %vm4627, %v4628, %v4626
        %v4630 = vclz %v4629
        %v4631 = vsub.s32 %v4630, 2
        %vm4632 = vcmp.gt.s32.totalorder 0, %v4631
        %v4633 = vsel %vm4632, 0, %v4631
        %v4634 = vsub.s32 32, %v4633
        %v4635 = vshll.u32 %v4626, %v4633
        %v4636 = vshrl.u32 %v4618, %v4634
        %v4637 = vor.u32 %v4635, %v4636
        %v4638 = vsub.s32 4294967266, %v4633
        %v4639 = vadd.s32 %v4638, 127
        %v4640 = vshll.u32 %v4639, 23
        %v4641 = vor.u32 4788187, %v4640
        %v4642 = vand.u32 2147483647, %v4641
        %v4644 = vcvt.s32.f32 %v4637
        %v4645 = vmul.f32 %v4644, %v4642
        %v4646 = vxor.u32 %v4645, 2147483648
        %v4647 = vsel %vm4564, %v4646, %v4645
        %v4648 = vsub.s32 4, %v4624
        %v4649 = vsel %vm4564, %v4648, %v4624
        %v4650 = vsel %vm4563, %v4135, %v4647
        %v4651 = vsel %vm4563, 0, %v4649
        %v4652 = vcosq.f32.pop %v4650
        %v4653 = vsinq.f32.pop %v4650
        %vm4654 = vweird.f32 %v4135
        %v4655 = vadd.s32 %v4651, 3
        %v4656 = vand.u32 %v4655, 3
        %vm4657 = vcmp.lt.s32.totalorder %v4656, 2
        %vm4658 = vcmp.eq.s32.totalorder %v4656, 0
        %v4659 = vxor.u32 %v4653, 2147483648
        %v4660 = vsel %vm4658, %v4652, %v4659
        %vm4661 = vcmp.eq.s32.totalorder %v4656, 2
        %v4662 = vxor.u32 %v4652, 2147483648
        %v4663 = vsel %vm4661, %v4662, %v4653
        %v4664 = vsel %vm4657, %v4660, %v4663
        %v4665 = vsel %vm4654, nan, %v4664
        %v4666 = vand.u32 2147483647, %v4137
        %vm4667 = vcmp.le.f32.partialorder %v4666, 0.7853982
        %vm4668 = vcmp.lt.s32.totalorder %v4137, 0
        %v4669 = vand.u32 %v4137, 2139095040
        %v4670 = vshrl.u32 %v4669, 23
        %v4671 = vsub.s32 %v4670, 127
        %v4672 = vand.u32 2147483647, %v4137
        %v4673 = vand.u32 %v4672, 8388607
        %v4674 = vor.u32 %v4673, 8388608
        %v4675 = vsub.s32 0, %v4674
        %v4676 = vadd.s32 %v4671, 1
        %vm4677 = vcmp.gt.s32.totalorder %v4676, 0
        %v4678 = vsel %vm4677, %v4676, 0
        %v4679 = vshrl.u32 %v4678, 5
        %v4680 = vand.u32 %v4678, 31
        %v4681 = vsub.s32 32, %v4680
        %v4682 = vshrl.u32 683565275, %v4681
        %v4683 = vshll.u32 683565275, %v4680
        %v4684 = vshrl.u32 2475754826, %v4681
        %v4685 = vor.u32 %v4683, %v4684
        %v4686 = vshll.u32 2475754826, %v4680
        %v4687 = vshrl.u32 2131351028, %v4681
        %v4688 = vor.u32 %v4686, %v4687
        %v4689 = vshll.u32 2131351028, %v4680
        %v4690 = vshrl.u32 2102212464, %v4681
        %v4691 = vor.u32 %v4689, %v4690
        %v4692 = vshll.u32 2102212464, %v4680
        %v4693 = vshrl.u32 920167782, %v4681
        %v4694 = vor.u32 %v4692, %v4693
        %v4695 = vshll.u32 920167782, %v4680
        %v4696 = vshrl.u32 1326507024, %v4681
        %v4697 = vor.u32 %v4695, %v4696
        %vm4698 = vcmp.lt.s32.totalorder %v4679, 1
        %vm4699 = vcmp.lt.s32.totalorder %v4679, 2
        %vm4700 = vcmp.lt.s32.totalorder %v4679, 3
        %vm4701 = vcmp.lt.s32.totalorder %v4679, 4
        %v4702 = vsel %vm4698, %v4682, %v4685
        %v4703 = vsel %vm4701, %v4691, 2102212464
        %v4704 = vsel %vm4700, %v4688, %v4703
        %v4705 = vsel %vm4699, %v4702, %v4704
        %v4706 = vsel %vm4698, %v4685, %v4688
        %v4707 = vsel %vm4701, %v4694, 920167782
        %v4708 = vsel %vm4700, %v4691, %v4707
        %v4709 = vsel %vm4699, %v4706, %v4708
        %v4710 = vsel %vm4698, %v4688, %v4691
        %v4711 = vsel %vm4701, %v4697, 1326507024
        %v4712 = vsel %vm4700, %v4694, %v4711
        %v4713 = vsel %vm4699, %v4710, %v4712
        %v4714 = vshll.u32 %v4674, 8
        %v4715 = vmul.u32.u64.compose %v4714, %v4713
        %v4716 = vextract.low.u32 %v4715
        %v4717 = vextract.high.u32 %v4715
        %v4718 = vmul.u32.u64.compose %v4714, %v4709
        %v4719 = vextract.low.u32 %v4718
        %v4720 = vextract.high.u32 %v4718
        %v4721 = vmul.u32 %v4714, %v4705
        %v4722 = vadd.s32 %v4717, %v4719
        %vm4723 = vc.u32 %v4717, %v4719
        %v4724 = vadd.s32 %v4720, 1
        %v4725 = vsel %vm4723, %v4724, %v4720
        %v4726 = vadd.s32 %v4721, %v4725
        %v4727 = vadd.s32 %v4726, 536870912
        %v4728 = vshrl.u32 %v4727, 30
        %v4729 = vshll.u32 %v4728, 30
        %v4730 = vsub.s32 %v4726, %v4729
        %vm4731 = vcmp.lt.s32.totalorder %v4730, 0
        %v4732 = vsub.s32 0, %v4730
        %v4733 = vsel %vm4731, %v4732, %v4730
        %v4734 = vclz %v4733
        %v4735 = vsub.s32 %v4734, 2
        %vm4736 = vcmp.gt.s32.totalorder 0, %v4735
        %v4737 = vsel %vm4736, 0, %v4735
        %v4738 = vsub.s32 32, %v4737
        %v4739 = vshll.u32 %v4730, %v4737
        %v4740 = vshrl.u32 %v4722, %v4738
        %v4741 = vor.u32 %v4739, %v4740
        %v4742 = vsub.s32 4294967266, %v4737
        %v4743 = vadd.s32 %v4742, 127
        %v4744 = vshll.u32 %v4743, 23
        %v4745 = vor.u32 4788187, %v4744
        %v4746 = vand.u32 2147483647, %v4745
        %v4748 = vcvt.s32.f32 %v4741
        %v4749 = vmul.f32 %v4748, %v4746
        %v4750 = vxor.u32 %v4749, 2147483648
        %v4751 = vsel %vm4668, %v4750, %v4749
        %v4752 = vsub.s32 4, %v4728
        %v4753 = vsel %vm4668, %v4752, %v4728
        %v4754 = vsel %vm4667, %v4137, %v4751
        %v4755 = vsel %vm4667, 0, %v4753
        %v4756 = vcosq.f32.pop %v4754
        %v4757 = vsinq.f32.pop %v4754
        %vm4758 = vweird.f32 %v4137
        %v4759 = vadd.s32 %v4755, 3
        %v4760 = vand.u32 %v4759, 3
        %vm4761 = vcmp.lt.s32.totalorder %v4760, 2
        %vm4762 = vcmp.eq.s32.totalorder %v4760, 0
        %v4763 = vxor.u32 %v4757, 2147483648
        %v4764 = vsel %vm4762, %v4756, %v4763
        %vm4765 = vcmp.eq.s32.totalorder %v4760, 2
        %v4766 = vxor.u32 %v4756, 2147483648
        %v4767 = vsel %vm4765, %v4766, %v4757
        %v4768 = vsel %vm4761, %v4764, %v4767
        %v4769 = vsel %vm4758, nan, %v4768
        %v4770 = vand.u32 2147483647, %v4142
        %vm4771 = vcmp.le.f32.partialorder %v4770, 0.7853982
        %vm4772 = vcmp.lt.s32.totalorder %v4142, 0
        %v4773 = vand.u32 %v4142, 2139095040
        %v4774 = vshrl.u32 %v4773, 23
        %v4775 = vsub.s32 %v4774, 127
        %v4776 = vand.u32 2147483647, %v4142
        %v4777 = vand.u32 %v4776, 8388607
        %v4778 = vor.u32 %v4777, 8388608
        %v4779 = vsub.s32 0, %v4778
        %v4780 = vadd.s32 %v4775, 1
        %vm4781 = vcmp.gt.s32.totalorder %v4780, 0
        %v4782 = vsel %vm4781, %v4780, 0
        %v4783 = vshrl.u32 %v4782, 5
        %v4784 = vand.u32 %v4782, 31
        %v4785 = vsub.s32 32, %v4784
        %v4786 = vshrl.u32 683565275, %v4785
        %v4787 = vshll.u32 683565275, %v4784
        %v4788 = vshrl.u32 2475754826, %v4785
        %v4789 = vor.u32 %v4787, %v4788
        %v4790 = vshll.u32 2475754826, %v4784
        %v4791 = vshrl.u32 2131351028, %v4785
        %v4792 = vor.u32 %v4790, %v4791
        %v4793 = vshll.u32 2131351028, %v4784
        %v4794 = vshrl.u32 2102212464, %v4785
        %v4795 = vor.u32 %v4793, %v4794
        %v4796 = vshll.u32 2102212464, %v4784
        %v4797 = vshrl.u32 920167782, %v4785
        %v4798 = vor.u32 %v4796, %v4797
        %v4799 = vshll.u32 920167782, %v4784
        %v4800 = vshrl.u32 1326507024, %v4785
        %v4801 = vor.u32 %v4799, %v4800
        %vm4802 = vcmp.lt.s32.totalorder %v4783, 1
        %vm4803 = vcmp.lt.s32.totalorder %v4783, 2
        %vm4804 = vcmp.lt.s32.totalorder %v4783, 3
        %vm4805 = vcmp.lt.s32.totalorder %v4783, 4
        %v4806 = vsel %vm4802, %v4786, %v4789
        %v4807 = vsel %vm4805, %v4795, 2102212464
        %v4808 = vsel %vm4804, %v4792, %v4807
        %v4809 = vsel %vm4803, %v4806, %v4808
        %v4810 = vsel %vm4802, %v4789, %v4792
        %v4811 = vsel %vm4805, %v4798, 920167782
        %v4812 = vsel %vm4804, %v4795, %v4811
        %v4813 = vsel %vm4803, %v4810, %v4812
        %v4814 = vsel %vm4802, %v4792, %v4795
        %v4815 = vsel %vm4805, %v4801, 1326507024
        %v4816 = vsel %vm4804, %v4798, %v4815
        %v4817 = vsel %vm4803, %v4814, %v4816
        %v4818 = vshll.u32 %v4778, 8
        %v4819 = vmul.u32.u64.compose %v4818, %v4817
        %v4820 = vextract.low.u32 %v4819
        %v4821 = vextract.high.u32 %v4819
        %v4822 = vmul.u32.u64.compose %v4818, %v4813
        %v4823 = vextract.low.u32 %v4822
        %v4824 = vextract.high.u32 %v4822
        %v4825 = vmul.u32 %v4818, %v4809
        %v4826 = vadd.s32 %v4821, %v4823
        %vm4827 = vc.u32 %v4821, %v4823
        %v4828 = vadd.s32 %v4824, 1
        %v4829 = vsel %vm4827, %v4828, %v4824
        %v4830 = vadd.s32 %v4825, %v4829
        %v4831 = vadd.s32 %v4830, 536870912
        %v4832 = vshrl.u32 %v4831, 30
        %v4833 = vshll.u32 %v4832, 30
        %v4834 = vsub.s32 %v4830, %v4833
        %vm4835 = vcmp.lt.s32.totalorder %v4834, 0
        %v4836 = vsub.s32 0, %v4834
        %v4837 = vsel %vm4835, %v4836, %v4834
        %v4838 = vclz %v4837
        %v4839 = vsub.s32 %v4838, 2
        %vm4840 = vcmp.gt.s32.totalorder 0, %v4839
        %v4841 = vsel %vm4840, 0, %v4839
        %v4842 = vsub.s32 32, %v4841
        %v4843 = vshll.u32 %v4834, %v4841
        %v4844 = vshrl.u32 %v4826, %v4842
        %v4845 = vor.u32 %v4843, %v4844
        %v4846 = vsub.s32 4294967266, %v4841
        %v4847 = vadd.s32 %v4846, 127
        %v4848 = vshll.u32 %v4847, 23
        %v4849 = vor.u32 4788187, %v4848
        %v4850 = vand.u32 2147483647, %v4849
        %v4852 = vcvt.s32.f32 %v4845
        %v4853 = vmul.f32 %v4852, %v4850
        %v4854 = vxor.u32 %v4853, 2147483648
        %v4855 = vsel %vm4772, %v4854, %v4853
        %v4856 = vsub.s32 4, %v4832
        %v4857 = vsel %vm4772, %v4856, %v4832
        %v4858 = vsel %vm4771, %v4142, %v4855
        %v4859 = vsel %vm4771, 0, %v4857
        %v4860 = vcosq.f32.pop %v4858
        %v4861 = vsinq.f32.pop %v4858
        %vm4862 = vweird.f32 %v4142
        %v4863 = vadd.s32 %v4859, 3
        %v4864 = vand.u32 %v4863, 3
        %vm4865 = vcmp.lt.s32.totalorder %v4864, 2
        %vm4866 = vcmp.eq.s32.totalorder %v4864, 0
        %v4867 = vxor.u32 %v4861, 2147483648
        %v4868 = vsel %vm4866, %v4860, %v4867
        %vm4869 = vcmp.eq.s32.totalorder %v4864, 2
        %v4870 = vxor.u32 %v4860, 2147483648
        %v4871 = vsel %vm4869, %v4870, %v4861
        %v4872 = vsel %vm4865, %v4868, %v4871
        %v4873 = vsel %vm4862, nan, %v4872
        %v4874 = vand.u32 2147483647, %v4144
        %vm4875 = vcmp.le.f32.partialorder %v4874, 0.7853982
        %vm4876 = vcmp.lt.s32.totalorder %v4144, 0
        %v4877 = vand.u32 %v4144, 2139095040
        %v4878 = vshrl.u32 %v4877, 23
        %v4879 = vsub.s32 %v4878, 127
        %v4880 = vand.u32 2147483647, %v4144
        %v4881 = vand.u32 %v4880, 8388607
        %v4882 = vor.u32 %v4881, 8388608
        %v4883 = vsub.s32 0, %v4882
        %v4884 = vadd.s32 %v4879, 1
        %vm4885 = vcmp.gt.s32.totalorder %v4884, 0
        %v4886 = vsel %vm4885, %v4884, 0
        %v4887 = vshrl.u32 %v4886, 5
        %v4888 = vand.u32 %v4886, 31
        %v4889 = vsub.s32 32, %v4888
        %v4890 = vshrl.u32 683565275, %v4889
        %v4891 = vshll.u32 683565275, %v4888
        %v4892 = vshrl.u32 2475754826, %v4889
        %v4893 = vor.u32 %v4891, %v4892
        %v4894 = vshll.u32 2475754826, %v4888
        %v4895 = vshrl.u32 2131351028, %v4889
        %v4896 = vor.u32 %v4894, %v4895
        %v4897 = vshll.u32 2131351028, %v4888
        %v4898 = vshrl.u32 2102212464, %v4889
        %v4899 = vor.u32 %v4897, %v4898
        %v4900 = vshll.u32 2102212464, %v4888
        %v4901 = vshrl.u32 920167782, %v4889
        %v4902 = vor.u32 %v4900, %v4901
        %v4903 = vshll.u32 920167782, %v4888
        %v4904 = vshrl.u32 1326507024, %v4889
        %v4905 = vor.u32 %v4903, %v4904
        %vm4906 = vcmp.lt.s32.totalorder %v4887, 1
        %vm4907 = vcmp.lt.s32.totalorder %v4887, 2
        %vm4908 = vcmp.lt.s32.totalorder %v4887, 3
        %vm4909 = vcmp.lt.s32.totalorder %v4887, 4
        %v4910 = vsel %vm4906, %v4890, %v4893
        %v4911 = vsel %vm4909, %v4899, 2102212464
        %v4912 = vsel %vm4908, %v4896, %v4911
        %v4913 = vsel %vm4907, %v4910, %v4912
        %v4914 = vsel %vm4906, %v4893, %v4896
        %v4915 = vsel %vm4909, %v4902, 920167782
        %v4916 = vsel %vm4908, %v4899, %v4915
        %v4917 = vsel %vm4907, %v4914, %v4916
        %v4918 = vsel %vm4906, %v4896, %v4899
        %v4919 = vsel %vm4909, %v4905, 1326507024
        %v4920 = vsel %vm4908, %v4902, %v4919
        %v4921 = vsel %vm4907, %v4918, %v4920
        %v4922 = vshll.u32 %v4882, 8
        %v4923 = vmul.u32.u64.compose %v4922, %v4921
        %v4924 = vextract.low.u32 %v4923
        %v4925 = vextract.high.u32 %v4923
        %v4926 = vmul.u32.u64.compose %v4922, %v4917
        %v4927 = vextract.low.u32 %v4926
        %v4928 = vextract.high.u32 %v4926
        %v4929 = vmul.u32 %v4922, %v4913
        %v4930 = vadd.s32 %v4925, %v4927
        %vm4931 = vc.u32 %v4925, %v4927
        %v4932 = vadd.s32 %v4928, 1
        %v4933 = vsel %vm4931, %v4932, %v4928
        %v4934 = vadd.s32 %v4929, %v4933
        %v4935 = vadd.s32 %v4934, 536870912
        %v4936 = vshrl.u32 %v4935, 30
        %v4937 = vshll.u32 %v4936, 30
        %v4938 = vsub.s32 %v4934, %v4937
        %vm4939 = vcmp.lt.s32.totalorder %v4938, 0
        %v4940 = vsub.s32 0, %v4938
        %v4941 = vsel %vm4939, %v4940, %v4938
        %v4942 = vclz %v4941
        %v4943 = vsub.s32 %v4942, 2
        %vm4944 = vcmp.gt.s32.totalorder 0, %v4943
        %v4945 = vsel %vm4944, 0, %v4943
        %v4946 = vsub.s32 32, %v4945
        %v4947 = vshll.u32 %v4938, %v4945
        %v4948 = vshrl.u32 %v4930, %v4946
        %v4949 = vor.u32 %v4947, %v4948
        %v4950 = vsub.s32 4294967266, %v4945
        %v4951 = vadd.s32 %v4950, 127
        %v4952 = vshll.u32 %v4951, 23
        %v4953 = vor.u32 4788187, %v4952
        %v4954 = vand.u32 2147483647, %v4953
        %v4956 = vcvt.s32.f32 %v4949
        %v4957 = vmul.f32 %v4956, %v4954
        %v4958 = vxor.u32 %v4957, 2147483648
        %v4959 = vsel %vm4876, %v4958, %v4957
        %v4960 = vsub.s32 4, %v4936
        %v4961 = vsel %vm4876, %v4960, %v4936
        %v4962 = vsel %vm4875, %v4144, %v4959
        %v4963 = vsel %vm4875, 0, %v4961
        %v4964 = vcosq.f32.pop %v4962
        %v4965 = vsinq.f32.pop %v4962
        %vm4966 = vweird.f32 %v4144
        %v4967 = vadd.s32 %v4963, 3
        %v4968 = vand.u32 %v4967, 3
        %vm4969 = vcmp.lt.s32.totalorder %v4968, 2
        %vm4970 = vcmp.eq.s32.totalorder %v4968, 0
        %v4971 = vxor.u32 %v4965, 2147483648
        %v4972 = vsel %vm4970, %v4964, %v4971
        %vm4973 = vcmp.eq.s32.totalorder %v4968, 2
        %v4974 = vxor.u32 %v4964, 2147483648
        %v4975 = vsel %vm4973, %v4974, %v4965
        %v4976 = vsel %vm4969, %v4972, %v4975
        %v4977 = vsel %vm4966, nan, %v4976
        %v4978 = vld [vmem:[%s7] sm:$0x1]
        %v4979 = vld [vmem:[#allocation2] sm:$0x1]
        %4981 = vset.pattern.permute.xlu0 0
        %4982 = vperm.xlu0 %4981, %v4979
        %v4983 = vpop.permute.xlu0 %4982
        %v4985 = vlaneseq
        %v4986 = vshrl.u32 %v4985, 7
        %v4987 = vsub.s32 0, %v4986
        %v4988 = vrot.slane %v4983, %v4987
        %v4990 = vsel %vm1881, %v4978, 0
        %4992 = vmatprep.subr.mxu0 0.0
        %4993 = vmatpush1.msra.mxu0 0.0
        %4994 = vmatprep.subr.mxu0 0.0
        %4995 = vmatpush1.msra.mxu0 0.0
        %4996 = vmatprep.subr.mxu0 0.0
        %4997 = vmatpush1.msra.mxu0 0.0
        %4998 = vmatprep.subr.mxu0 0.0
        %4999 = vmatpush1.msra.mxu0 0.0
        %5000 = vmatprep.subr.mxu0 0.0
        %5001 = vmatpush1.msra.mxu0 0.0
        %5002 = vmatprep.subr.mxu0 0.0
        %5003 = vmatpush1.msra.mxu0 0.0
        %5004 = vmatprep.subr.mxu0 0.0
        %5005 = vmatpush1.msra.mxu0 0.0
        %5006 = vmatprep.subr.mxu0 0.0
        %5007 = vmatpush1.msra.mxu0 0.0
        %5008 = vmatprep.subr.mxu0 0.0
        %5009 = vmatpush1.msra.mxu0 0.0
        %5010 = vmatprep.subr.mxu0 0.0
        %5011 = vmatpush1.msra.mxu0 0.0
        %5012 = vmatprep.subr.mxu0 0.0
        %5013 = vmatpush1.msra.mxu0 0.0
        %5014 = vmatprep.subr.mxu0 0.0
        %5015 = vmatpush1.msra.mxu0 0.0
        %v5016 = vand.u32 %v4977, 4294901760
        %5017 = vmatprep.subr.mxu0 %v5016
        %v5018 = vand.u32 %v4873, 4294901760
        %5019 = vmatpush1.msra.mxu0 %v5018
        %v5020 = vand.u32 %v4769, 4294901760
        %5021 = vmatprep.subr.mxu0 %v5020
        %v5022 = vand.u32 %v4665, 4294901760
        %5023 = vmatpush1.msra.mxu0 %v5022
        %v5024 = vand.u32 %v4561, 4294901760
        %5025 = vmatprep.subr.mxu0 %v5024
        %v5026 = vand.u32 %v4457, 4294901760
        %5027 = vmatpush1.msra.mxu0 %v5026
        %v5028 = vand.u32 %v4353, 4294901760
        %5029 = vmatprep.subr.mxu0 %v5028
        %v5030 = vand.u32 %v4249, 4294901760
        %5031 = vmatpush1.msra.mxu0 %v5030
        %5032 = vmatprep.subr.mxu0 0.0
        %5033 = vmatpush2.msra.mxu0 0.0
        %5034 = vmatprep.subr.mxu0 0.0
        %5035 = vmatpush2.msra.mxu0 0.0
        %5036 = vmatprep.subr.mxu0 0.0
        %5037 = vmatpush2.msra.mxu0 0.0
        %5038 = vmatprep.subr.mxu0 0.0
        %5039 = vmatpush2.msra.mxu0 0.0
        %5040 = vmatprep.subr.mxu0 0.0
        %5041 = vmatpush2.msra.mxu0 0.0
        %5042 = vmatprep.subr.mxu0 0.0
        %5043 = vmatpush2.msra.mxu0 0.0
        %5044 = vmatprep.subr.mxu0 0.0
        %5045 = vmatpush2.msra.mxu0 0.0
        %5046 = vmatprep.subr.mxu0 0.0
        %5047 = vmatpush2.msra.mxu0 0.0
        %5048 = vmatprep.subr.mxu0 0.0
        %5049 = vmatpush2.msra.mxu0 0.0
        %5050 = vmatprep.subr.mxu0 0.0
        %5051 = vmatpush2.msra.mxu0 0.0
        %5052 = vmatprep.subr.mxu0 0.0
        %5053 = vmatpush2.msra.mxu0 0.0
        %5054 = vmatprep.subr.mxu0 0.0
        %5055 = vmatpush2.msra.mxu0 0.0
        %5056 = vmatprep.subr.mxu0 0.0
        %5057 = vmatpush2.msra.mxu0 0.0
        %5058 = vmatprep.subr.mxu0 0.0
        %5059 = vmatpush2.msra.mxu0 0.0
        %5060 = vmatprep.subr.mxu0 0.0
        %5061 = vmatpush2.msra.mxu0 0.0
        %5062 = vmatprep.subr.mxu0 0.0
        %5063 = vmatpush2.msra.mxu0 0.0
        %5064 = vmatprep.mubr.f32.mxu0 0.0
        %v5065 = vand.u32 %v4990, 4294901760
        %v5066 = vsub.f32 %v4990, %v5065
        %v5067 = vand.u32 %v5066, 4294901760
        %v5068 = vsub.f32 %v5066, %v5067
        %v5069 = vand.u32 %v5068, 4294901760
        %5070 = vmatmul.mubr.f32.gmra.mxu0 %v5069
        %v5071 = vpop.f32.mrf.mxu0
        %v5072 = vadd.f32 %v4988, %v5071
        %v5073 = vpop.f32.mrf.mxu0
        %v5074 = vadd.f32 %v4988, %v5073
        %5075 = vdwg.mxu0
        %5076 = vmatprep.subr.mxu0 0.0
        %5077 = vmatpush1.msra.mxu0 0.0
        %5078 = vmatprep.subr.mxu0 0.0
        %5079 = vmatpush1.msra.mxu0 0.0
        %5080 = vmatprep.subr.mxu0 0.0
        %5081 = vmatpush1.msra.mxu0 0.0
        %5082 = vmatprep.subr.mxu0 0.0
        %5083 = vmatpush1.msra.mxu0 0.0
        %5084 = vmatprep.subr.mxu0 0.0
        %5085 = vmatpush1.msra.mxu0 0.0
        %5086 = vmatprep.subr.mxu0 0.0
        %5087 = vmatpush1.msra.mxu0 0.0
        %5088 = vmatprep.subr.mxu0 0.0
        %5089 = vmatpush1.msra.mxu0 0.0
        %5090 = vmatprep.subr.mxu0 0.0
        %5091 = vmatpush1.msra.mxu0 0.0
        %5092 = vmatprep.subr.mxu0 0.0
        %5093 = vmatpush1.msra.mxu0 0.0
        %5094 = vmatprep.subr.mxu0 0.0
        %5095 = vmatpush1.msra.mxu0 0.0
        %5096 = vmatprep.subr.mxu0 0.0
        %5097 = vmatpush1.msra.mxu0 0.0
        %5098 = vmatprep.subr.mxu0 0.0
        %5099 = vmatpush1.msra.mxu0 0.0
        %v5100 = vand.u32 %v4977, 4294901760
        %v5101 = vsub.f32 %v4977, %v5100
        %v5102 = vand.u32 %v5101, 4294901760
        %v5103 = vsub.f32 %v5101, %v5102
        %v5104 = vand.u32 %v5103, 4294901760
        %5105 = vmatprep.subr.mxu0 %v5104
        %v5106 = vand.u32 %v4873, 4294901760
        %v5107 = vsub.f32 %v4873, %v5106
        %v5108 = vand.u32 %v5107, 4294901760
        %v5109 = vsub.f32 %v5107, %v5108
        %v5110 = vand.u32 %v5109, 4294901760
        %5111 = vmatpush1.msra.mxu0 %v5110
        %v5112 = vand.u32 %v4769, 4294901760
        %v5113 = vsub.f32 %v4769, %v5112
        %v5114 = vand.u32 %v5113, 4294901760
        %v5115 = vsub.f32 %v5113, %v5114
        %v5116 = vand.u32 %v5115, 4294901760
        %5117 = vmatprep.subr.mxu0 %v5116
        %v5118 = vand.u32 %v4665, 4294901760
        %v5119 = vsub.f32 %v4665, %v5118
        %v5120 = vand.u32 %v5119, 4294901760
        %v5121 = vsub.f32 %v5119, %v5120
        %v5122 = vand.u32 %v5121, 4294901760
        %5123 = vmatpush1.msra.mxu0 %v5122
        %v5124 = vand.u32 %v4561, 4294901760
        %v5125 = vsub.f32 %v4561, %v5124
        %v5126 = vand.u32 %v5125, 4294901760
        %v5127 = vsub.f32 %v5125, %v5126
        %v5128 = vand.u32 %v5127, 4294901760
        %5129 = vmatprep.subr.mxu0 %v5128
        %v5130 = vand.u32 %v4457, 4294901760
        %v5131 = vsub.f32 %v4457, %v5130
        %v5132 = vand.u32 %v5131, 4294901760
        %v5133 = vsub.f32 %v5131, %v5132
        %v5134 = vand.u32 %v5133, 4294901760
        %5135 = vmatpush1.msra.mxu0 %v5134
        %v5136 = vand.u32 %v4353, 4294901760
        %v5137 = vsub.f32 %v4353, %v5136
        %v5138 = vand.u32 %v5137, 4294901760
        %v5139 = vsub.f32 %v5137, %v5138
        %v5140 = vand.u32 %v5139, 4294901760
        %5141 = vmatprep.subr.mxu0 %v5140
        %v5142 = vand.u32 %v4249, 4294901760
        %v5143 = vsub.f32 %v4249, %v5142
        %v5144 = vand.u32 %v5143, 4294901760
        %v5145 = vsub.f32 %v5143, %v5144
        %v5146 = vand.u32 %v5145, 4294901760
        %5147 = vmatpush1.msra.mxu0 %v5146
        %5148 = vmatprep.subr.mxu0 0.0
        %5149 = vmatpush2.msra.mxu0 0.0
        %5150 = vmatprep.subr.mxu0 0.0
        %5151 = vmatpush2.msra.mxu0 0.0
        %5152 = vmatprep.subr.mxu0 0.0
        %5153 = vmatpush2.msra.mxu0 0.0
        %5154 = vmatprep.subr.mxu0 0.0
        %5155 = vmatpush2.msra.mxu0 0.0
        %5156 = vmatprep.subr.mxu0 0.0
        %5157 = vmatpush2.msra.mxu0 0.0
        %5158 = vmatprep.subr.mxu0 0.0
        %5159 = vmatpush2.msra.mxu0 0.0
        %5160 = vmatprep.subr.mxu0 0.0
        %5161 = vmatpush2.msra.mxu0 0.0
        %5162 = vmatprep.subr.mxu0 0.0
        %5163 = vmatpush2.msra.mxu0 0.0
        %5164 = vmatprep.subr.mxu0 0.0
        %5165 = vmatpush2.msra.mxu0 0.0
        %5166 = vmatprep.subr.mxu0 0.0
        %5167 = vmatpush2.msra.mxu0 0.0
        %5168 = vmatprep.subr.mxu0 0.0
        %5169 = vmatpush2.msra.mxu0 0.0
        %5170 = vmatprep.subr.mxu0 0.0
        %5171 = vmatpush2.msra.mxu0 0.0
        %5172 = vmatprep.subr.mxu0 0.0
        %5173 = vmatpush2.msra.mxu0 0.0
        %5174 = vmatprep.subr.mxu0 0.0
        %5175 = vmatpush2.msra.mxu0 0.0
        %5176 = vmatprep.subr.mxu0 0.0
        %5177 = vmatpush2.msra.mxu0 0.0
        %5178 = vmatprep.subr.mxu0 0.0
        %5179 = vmatpush2.msra.mxu0 0.0
        %5180 = vmatprep.mubr.f32.mxu0 0.0
        %v5181 = vand.u32 %v4990, 4294901760
        %5182 = vmatmul.mubr.f32.gmra.mxu0 %v5181
        %v5183 = vpop.f32.mrf.mxu0
        %v5184 = vadd.f32 %v5072, %v5183
        %v5185 = vpop.f32.mrf.mxu0
        %v5186 = vadd.f32 %v5074, %v5185
        %5187 = vdwg.mxu0
        %5188 = vmatprep.subr.mxu0 0.0
        %5189 = vmatpush1.msra.mxu0 0.0
        %5190 = vmatprep.subr.mxu0 0.0
        %5191 = vmatpush1.msra.mxu0 0.0
        %5192 = vmatprep.subr.mxu0 0.0
        %5193 = vmatpush1.msra.mxu0 0.0
        %5194 = vmatprep.subr.mxu0 0.0
        %5195 = vmatpush1.msra.mxu0 0.0
        %5196 = vmatprep.subr.mxu0 0.0
        %5197 = vmatpush1.msra.mxu0 0.0
        %5198 = vmatprep.subr.mxu0 0.0
        %5199 = vmatpush1.msra.mxu0 0.0
        %5200 = vmatprep.subr.mxu0 0.0
        %5201 = vmatpush1.msra.mxu0 0.0
        %5202 = vmatprep.subr.mxu0 0.0
        %5203 = vmatpush1.msra.mxu0 0.0
        %5204 = vmatprep.subr.mxu0 0.0
        %5205 = vmatpush1.msra.mxu0 0.0
        %5206 = vmatprep.subr.mxu0 0.0
        %5207 = vmatpush1.msra.mxu0 0.0
        %5208 = vmatprep.subr.mxu0 0.0
        %5209 = vmatpush1.msra.mxu0 0.0
        %5210 = vmatprep.subr.mxu0 0.0
        %5211 = vmatpush1.msra.mxu0 0.0
        %v5212 = vand.u32 %v4977, 4294901760
        %v5213 = vsub.f32 %v4977, %v5212
        %5214 = vmatprep.subr.mxu0 %v5213
        %v5215 = vand.u32 %v4873, 4294901760
        %v5216 = vsub.f32 %v4873, %v5215
        %5217 = vmatpush1.msra.mxu0 %v5216
        %v5218 = vand.u32 %v4769, 4294901760
        %v5219 = vsub.f32 %v4769, %v5218
        %5220 = vmatprep.subr.mxu0 %v5219
        %v5221 = vand.u32 %v4665, 4294901760
        %v5222 = vsub.f32 %v4665, %v5221
        %5223 = vmatpush1.msra.mxu0 %v5222
        %v5224 = vand.u32 %v4561, 4294901760
        %v5225 = vsub.f32 %v4561, %v5224
        %5226 = vmatprep.subr.mxu0 %v5225
        %v5227 = vand.u32 %v4457, 4294901760
        %v5228 = vsub.f32 %v4457, %v5227
        %5229 = vmatpush1.msra.mxu0 %v5228
        %v5230 = vand.u32 %v4353, 4294901760
        %v5231 = vsub.f32 %v4353, %v5230
        %5232 = vmatprep.subr.mxu0 %v5231
        %v5233 = vand.u32 %v4249, 4294901760
        %v5234 = vsub.f32 %v4249, %v5233
        %5235 = vmatpush1.msra.mxu0 %v5234
        %5236 = vmatprep.subr.mxu0 0.0
        %5237 = vmatpush2.msra.mxu0 0.0
        %5238 = vmatprep.subr.mxu0 0.0
        %5239 = vmatpush2.msra.mxu0 0.0
        %5240 = vmatprep.subr.mxu0 0.0
        %5241 = vmatpush2.msra.mxu0 0.0
        %5242 = vmatprep.subr.mxu0 0.0
        %5243 = vmatpush2.msra.mxu0 0.0
        %5244 = vmatprep.subr.mxu0 0.0
        %5245 = vmatpush2.msra.mxu0 0.0
        %5246 = vmatprep.subr.mxu0 0.0
        %5247 = vmatpush2.msra.mxu0 0.0
        %5248 = vmatprep.subr.mxu0 0.0
        %5249 = vmatpush2.msra.mxu0 0.0
        %5250 = vmatprep.subr.mxu0 0.0
        %5251 = vmatpush2.msra.mxu0 0.0
        %5252 = vmatprep.subr.mxu0 0.0
        %5253 = vmatpush2.msra.mxu0 0.0
        %5254 = vmatprep.subr.mxu0 0.0
        %5255 = vmatpush2.msra.mxu0 0.0
        %5256 = vmatprep.subr.mxu0 0.0
        %5257 = vmatpush2.msra.mxu0 0.0
        %5258 = vmatprep.subr.mxu0 0.0
        %5259 = vmatpush2.msra.mxu0 0.0
        %5260 = vmatprep.subr.mxu0 0.0
        %5261 = vmatpush2.msra.mxu0 0.0
        %5262 = vmatprep.subr.mxu0 0.0
        %5263 = vmatpush2.msra.mxu0 0.0
        %5264 = vmatprep.subr.mxu0 0.0
        %5265 = vmatpush2.msra.mxu0 0.0
        %5266 = vmatprep.subr.mxu0 0.0
        %5267 = vmatpush2.msra.mxu0 0.0
        %5268 = vmatprep.mubr.f32.mxu0 0.0
        %v5269 = vand.u32 %v4990, 4294901760
        %v5270 = vsub.f32 %v4990, %v5269
        %5271 = vmatmul.mubr.f32.gmra.mxu0 %v5270
        %v5272 = vpop.f32.mrf.mxu0
        %v5273 = vadd.f32 %v5184, %v5272
        %v5274 = vpop.f32.mrf.mxu0
        %v5275 = vadd.f32 %v5186, %v5274
        %5276 = vdwg.mxu0
        %5277 = vmatprep.subr.mxu0 0.0
        %5278 = vmatpush1.msra.mxu0 0.0
        %5279 = vmatprep.subr.mxu0 0.0
        %5280 = vmatpush1.msra.mxu0 0.0
        %5281 = vmatprep.subr.mxu0 0.0
        %5282 = vmatpush1.msra.mxu0 0.0
        %5283 = vmatprep.subr.mxu0 0.0
        %5284 = vmatpush1.msra.mxu0 0.0
        %5285 = vmatprep.subr.mxu0 0.0
        %5286 = vmatpush1.msra.mxu0 0.0
        %5287 = vmatprep.subr.mxu0 0.0
        %5288 = vmatpush1.msra.mxu0 0.0
        %5289 = vmatprep.subr.mxu0 0.0
        %5290 = vmatpush1.msra.mxu0 0.0
        %5291 = vmatprep.subr.mxu0 0.0
        %5292 = vmatpush1.msra.mxu0 0.0
        %5293 = vmatprep.subr.mxu0 0.0
        %5294 = vmatpush1.msra.mxu0 0.0
        %5295 = vmatprep.subr.mxu0 0.0
        %5296 = vmatpush1.msra.mxu0 0.0
        %5297 = vmatprep.subr.mxu0 0.0
        %5298 = vmatpush1.msra.mxu0 0.0
        %5299 = vmatprep.subr.mxu0 0.0
        %5300 = vmatpush1.msra.mxu0 0.0
        %v5301 = vand.u32 %v4977, 4294901760
        %5302 = vmatprep.subr.mxu0 %v5301
        %v5303 = vand.u32 %v4873, 4294901760
        %5304 = vmatpush1.msra.mxu0 %v5303
        %v5305 = vand.u32 %v4769, 4294901760
        %5306 = vmatprep.subr.mxu0 %v5305
        %v5307 = vand.u32 %v4665, 4294901760
        %5308 = vmatpush1.msra.mxu0 %v5307
        %v5309 = vand.u32 %v4561, 4294901760
        %5310 = vmatprep.subr.mxu0 %v5309
        %v5311 = vand.u32 %v4457, 4294901760
        %5312 = vmatpush1.msra.mxu0 %v5311
        %v5313 = vand.u32 %v4353, 4294901760
        %5314 = vmatprep.subr.mxu0 %v5313
        %v5315 = vand.u32 %v4249, 4294901760
        %5316 = vmatpush1.msra.mxu0 %v5315
        %5317 = vmatprep.subr.mxu0 0.0
        %5318 = vmatpush2.msra.mxu0 0.0
        %5319 = vmatprep.subr.mxu0 0.0
        %5320 = vmatpush2.msra.mxu0 0.0
        %5321 = vmatprep.subr.mxu0 0.0
        %5322 = vmatpush2.msra.mxu0 0.0
        %5323 = vmatprep.subr.mxu0 0.0
        %5324 = vmatpush2.msra.mxu0 0.0
        %5325 = vmatprep.subr.mxu0 0.0
        %5326 = vmatpush2.msra.mxu0 0.0
        %5327 = vmatprep.subr.mxu0 0.0
        %5328 = vmatpush2.msra.mxu0 0.0
        %5329 = vmatprep.subr.mxu0 0.0
        %5330 = vmatpush2.msra.mxu0 0.0
        %5331 = vmatprep.subr.mxu0 0.0
        %5332 = vmatpush2.msra.mxu0 0.0
        %5333 = vmatprep.subr.mxu0 0.0
        %5334 = vmatpush2.msra.mxu0 0.0
        %5335 = vmatprep.subr.mxu0 0.0
        %5336 = vmatpush2.msra.mxu0 0.0
        %5337 = vmatprep.subr.mxu0 0.0
        %5338 = vmatpush2.msra.mxu0 0.0
        %5339 = vmatprep.subr.mxu0 0.0
        %5340 = vmatpush2.msra.mxu0 0.0
        %5341 = vmatprep.subr.mxu0 0.0
        %5342 = vmatpush2.msra.mxu0 0.0
        %5343 = vmatprep.subr.mxu0 0.0
        %5344 = vmatpush2.msra.mxu0 0.0
        %5345 = vmatprep.subr.mxu0 0.0
        %5346 = vmatpush2.msra.mxu0 0.0
        %5347 = vmatprep.subr.mxu0 0.0
        %5348 = vmatpush2.msra.mxu0 0.0
        %5349 = vmatprep.mubr.f32.mxu0 0.0
        %v5350 = vand.u32 %v4990, 4294901760
        %v5351 = vsub.f32 %v4990, %v5350
        %v5352 = vand.u32 %v5351, 4294901760
        %5353 = vmatmul.mubr.f32.gmra.mxu0 %v5352
        %v5354 = vpop.f32.mrf.mxu0
        %v5355 = vadd.f32 %v5273, %v5354
        %v5356 = vpop.f32.mrf.mxu0
        %v5357 = vadd.f32 %v5275, %v5356
        %5358 = vdwg.mxu0
        %5359 = vmatprep.subr.mxu0 0.0
        %5360 = vmatpush1.msra.mxu0 0.0
        %5361 = vmatprep.subr.mxu0 0.0
        %5362 = vmatpush1.msra.mxu0 0.0
        %5363 = vmatprep.subr.mxu0 0.0
        %5364 = vmatpush1.msra.mxu0 0.0
        %5365 = vmatprep.subr.mxu0 0.0
        %5366 = vmatpush1.msra.mxu0 0.0
        %5367 = vmatprep.subr.mxu0 0.0
        %5368 = vmatpush1.msra.mxu0 0.0
        %5369 = vmatprep.subr.mxu0 0.0
        %5370 = vmatpush1.msra.mxu0 0.0
        %5371 = vmatprep.subr.mxu0 0.0
        %5372 = vmatpush1.msra.mxu0 0.0
        %5373 = vmatprep.subr.mxu0 0.0
        %5374 = vmatpush1.msra.mxu0 0.0
        %5375 = vmatprep.subr.mxu0 0.0
        %5376 = vmatpush1.msra.mxu0 0.0
        %5377 = vmatprep.subr.mxu0 0.0
        %5378 = vmatpush1.msra.mxu0 0.0
        %5379 = vmatprep.subr.mxu0 0.0
        %5380 = vmatpush1.msra.mxu0 0.0
        %5381 = vmatprep.subr.mxu0 0.0
        %5382 = vmatpush1.msra.mxu0 0.0
        %v5383 = vand.u32 %v4977, 4294901760
        %v5384 = vsub.f32 %v4977, %v5383
        %v5385 = vand.u32 %v5384, 4294901760
        %5386 = vmatprep.subr.mxu0 %v5385
        %v5387 = vand.u32 %v4873, 4294901760
        %v5388 = vsub.f32 %v4873, %v5387
        %v5389 = vand.u32 %v5388, 4294901760
        %5390 = vmatpush1.msra.mxu0 %v5389
        %v5391 = vand.u32 %v4769, 4294901760
        %v5392 = vsub.f32 %v4769, %v5391
        %v5393 = vand.u32 %v5392, 4294901760
        %5394 = vmatprep.subr.mxu0 %v5393
        %v5395 = vand.u32 %v4665, 4294901760
        %v5396 = vsub.f32 %v4665, %v5395
        %v5397 = vand.u32 %v5396, 4294901760
        %5398 = vmatpush1.msra.mxu0 %v5397
        %v5399 = vand.u32 %v4561, 4294901760
        %v5400 = vsub.f32 %v4561, %v5399
        %v5401 = vand.u32 %v5400, 4294901760
        %5402 = vmatprep.subr.mxu0 %v5401
        %v5403 = vand.u32 %v4457, 4294901760
        %v5404 = vsub.f32 %v4457, %v5403
        %v5405 = vand.u32 %v5404, 4294901760
        %5406 = vmatpush1.msra.mxu0 %v5405
        %v5407 = vand.u32 %v4353, 4294901760
        %v5408 = vsub.f32 %v4353, %v5407
        %v5409 = vand.u32 %v5408, 4294901760
        %5410 = vmatprep.subr.mxu0 %v5409
        %v5411 = vand.u32 %v4249, 4294901760
        %v5412 = vsub.f32 %v4249, %v5411
        %v5413 = vand.u32 %v5412, 4294901760
        %5414 = vmatpush1.msra.mxu0 %v5413
        %5415 = vmatprep.subr.mxu0 0.0
        %5416 = vmatpush2.msra.mxu0 0.0
        %5417 = vmatprep.subr.mxu0 0.0
        %5418 = vmatpush2.msra.mxu0 0.0
        %5419 = vmatprep.subr.mxu0 0.0
        %5420 = vmatpush2.msra.mxu0 0.0
        %5421 = vmatprep.subr.mxu0 0.0
        %5422 = vmatpush2.msra.mxu0 0.0
        %5423 = vmatprep.subr.mxu0 0.0
        %5424 = vmatpush2.msra.mxu0 0.0
        %5425 = vmatprep.subr.mxu0 0.0
        %5426 = vmatpush2.msra.mxu0 0.0
        %5427 = vmatprep.subr.mxu0 0.0
        %5428 = vmatpush2.msra.mxu0 0.0
        %5429 = vmatprep.subr.mxu0 0.0
        %5430 = vmatpush2.msra.mxu0 0.0
        %5431 = vmatprep.subr.mxu0 0.0
        %5432 = vmatpush2.msra.mxu0 0.0
        %5433 = vmatprep.subr.mxu0 0.0
        %5434 = vmatpush2.msra.mxu0 0.0
        %5435 = vmatprep.subr.mxu0 0.0
        %5436 = vmatpush2.msra.mxu0 0.0
        %5437 = vmatprep.subr.mxu0 0.0
        %5438 = vmatpush2.msra.mxu0 0.0
        %5439 = vmatprep.subr.mxu0 0.0
        %5440 = vmatpush2.msra.mxu0 0.0
        %5441 = vmatprep.subr.mxu0 0.0
        %5442 = vmatpush2.msra.mxu0 0.0
        %5443 = vmatprep.subr.mxu0 0.0
        %5444 = vmatpush2.msra.mxu0 0.0
        %5445 = vmatprep.subr.mxu0 0.0
        %5446 = vmatpush2.msra.mxu0 0.0
        %5447 = vmatprep.mubr.f32.mxu0 0.0
        %v5448 = vand.u32 %v4990, 4294901760
        %5449 = vmatmul.mubr.f32.gmra.mxu0 %v5448
        %v5450 = vpop.f32.mrf.mxu0
        %v5451 = vadd.f32 %v5355, %v5450
        %v5452 = vpop.f32.mrf.mxu0
        %v5453 = vadd.f32 %v5357, %v5452
        %5454 = vdwg.mxu0
        %5455 = vmatprep.subr.mxu0 0.0
        %5456 = vmatpush1.msra.mxu0 0.0
        %5457 = vmatprep.subr.mxu0 0.0
        %5458 = vmatpush1.msra.mxu0 0.0
        %5459 = vmatprep.subr.mxu0 0.0
        %5460 = vmatpush1.msra.mxu0 0.0
        %5461 = vmatprep.subr.mxu0 0.0
        %5462 = vmatpush1.msra.mxu0 0.0
        %5463 = vmatprep.subr.mxu0 0.0
        %5464 = vmatpush1.msra.mxu0 0.0
        %5465 = vmatprep.subr.mxu0 0.0
        %5466 = vmatpush1.msra.mxu0 0.0
        %5467 = vmatprep.subr.mxu0 0.0
        %5468 = vmatpush1.msra.mxu0 0.0
        %5469 = vmatprep.subr.mxu0 0.0
        %5470 = vmatpush1.msra.mxu0 0.0
        %5471 = vmatprep.subr.mxu0 0.0
        %5472 = vmatpush1.msra.mxu0 0.0
        %5473 = vmatprep.subr.mxu0 0.0
        %5474 = vmatpush1.msra.mxu0 0.0
        %5475 = vmatprep.subr.mxu0 0.0
        %5476 = vmatpush1.msra.mxu0 0.0
        %5477 = vmatprep.subr.mxu0 0.0
        %5478 = vmatpush1.msra.mxu0 0.0
        %v5479 = vand.u32 %v4977, 4294901760
        %5480 = vmatprep.subr.mxu0 %v5479
        %v5481 = vand.u32 %v4873, 4294901760
        %5482 = vmatpush1.msra.mxu0 %v5481
        %v5483 = vand.u32 %v4769, 4294901760
        %5484 = vmatprep.subr.mxu0 %v5483
        %v5485 = vand.u32 %v4665, 4294901760
        %5486 = vmatpush1.msra.mxu0 %v5485
        %v5487 = vand.u32 %v4561, 4294901760
        %5488 = vmatprep.subr.mxu0 %v5487
        %v5489 = vand.u32 %v4457, 4294901760
        %5490 = vmatpush1.msra.mxu0 %v5489
        %v5491 = vand.u32 %v4353, 4294901760
        %5492 = vmatprep.subr.mxu0 %v5491
        %v5493 = vand.u32 %v4249, 4294901760
        %5494 = vmatpush1.msra.mxu0 %v5493
        %5495 = vmatprep.subr.mxu0 0.0
        %5496 = vmatpush2.msra.mxu0 0.0
        %5497 = vmatprep.subr.mxu0 0.0
        %5498 = vmatpush2.msra.mxu0 0.0
        %5499 = vmatprep.subr.mxu0 0.0
        %5500 = vmatpush2.msra.mxu0 0.0
        %5501 = vmatprep.subr.mxu0 0.0
        %5502 = vmatpush2.msra.mxu0 0.0
        %5503 = vmatprep.subr.mxu0 0.0
        %5504 = vmatpush2.msra.mxu0 0.0
        %5505 = vmatprep.subr.mxu0 0.0
        %5506 = vmatpush2.msra.mxu0 0.0
        %5507 = vmatprep.subr.mxu0 0.0
        %5508 = vmatpush2.msra.mxu0 0.0
        %5509 = vmatprep.subr.mxu0 0.0
        %5510 = vmatpush2.msra.mxu0 0.0
        %5511 = vmatprep.subr.mxu0 0.0
        %5512 = vmatpush2.msra.mxu0 0.0
        %5513 = vmatprep.subr.mxu0 0.0
        %5514 = vmatpush2.msra.mxu0 0.0
        %5515 = vmatprep.subr.mxu0 0.0
        %5516 = vmatpush2.msra.mxu0 0.0
        %5517 = vmatprep.subr.mxu0 0.0
        %5518 = vmatpush2.msra.mxu0 0.0
        %5519 = vmatprep.subr.mxu0 0.0
        %5520 = vmatpush2.msra.mxu0 0.0
        %5521 = vmatprep.subr.mxu0 0.0
        %5522 = vmatpush2.msra.mxu0 0.0
        %5523 = vmatprep.subr.mxu0 0.0
        %5524 = vmatpush2.msra.mxu0 0.0
        %5525 = vmatprep.subr.mxu0 0.0
        %5526 = vmatpush2.msra.mxu0 0.0
        %5527 = vmatprep.mubr.f32.mxu0 0.0
        %v5528 = vand.u32 %v4990, 4294901760
        %5529 = vmatmul.mubr.f32.gmra.mxu0 %v5528
        %v5530 = vpop.f32.mrf.mxu0
        %v5531 = vadd.f32 %v5451, %v5530
        %v5532 = vpop.f32.mrf.mxu0
        %v5533 = vadd.f32 %v5453, %v5532
        %5534 = vdwg.mxu0
        %v5537 = vcombine.low %v5531, %v5533
        %v5539 = vunpack.c.l.s4 1966171168
        %v5540 = vunpack.c.0.s8 %v5539
        %v5541 = vlaneseq
        %v5542 = vshrl.u32 %v5541, 7
        %v5543 = vsub.s32 %v5540, %v5542
        %v5544 = vrot.slane %v5537, %v5543
        %v5546 = vunpack.c.l.s4 1966171168
        %v5547 = vunpack.c.0.s8 %v5546
        %v5548 = vlaneseq
        %v5549 = vshrl.u32 %v5548, 7
        %v5550 = vsub.s32 %v5547, %v5549
        %v5551 = vrot.slane %v5544, %v5550
        %v5553 = vlaneseq
        %vm5554 = vcmp.ge.s32.totalorder %v5553, 0
        %vm5555 = vcmp.lt.s32.totalorder %v5553, 256
        %vm5556 = vmand %vm5554, %vm5555
        %5557 = vst.msk [vmem:[%s340] sm:$0x3] %vm5556, %v5551
        %s5558 = sand.u32 %s227, 1
        %s5559 = scalar_lea.sflag [#allocation4], %s5558
        %s5560 = sand.u32 %s227, 1
        %s5561 = smul.addr %s5560, 2
        %s5562 = scalar_lea.vmem [#allocation3], %s5561
        // Predicated region
        $region57: #{tpu_custom_call.1} parent=55 // pred_check
          %p5563 = pneg %p237
        $region58: #{tpu_custom_call.1} parent=55 // pred_check_branch
          %5565 = sbr.rel (%p5563) target = $region60
        $region59: #{tpu_custom_call.1} parent=55 // pred_region
          %s5566 = smul.u32 2, %s25
          %s5567 = ssub.s32 3, %s5566
          %p5568 = scmp.lt.s32.totalorder %s5567, 2
          %s5569 = scalar_select %p5568, %s5567, 2
          %s5570 = smul.u32 16, %s5569
          %s5572 = ssub.s32 32, %s5570
          %5573 = vsyncadd %s5559, %s5572
          %p5574 = scmp.ne.s32.totalorder 0, %s5570
          %s5575 = smul.addr %s5566, 16
          %s5576 = scalar_lea.hbm %s9, %s5575
          %s5577 = sshll.u32 %s5569, 4
          %s5578 = sshll.u32 %s5562, 4
          %s5579 = int_to_ptr.vmem [resolvable:$true] %s5578
          %5581 = dma.vmem_to_hbm [thread:$0]  (%p5574), %s5579, %s5577, %s5576, %s5559
        $region60: #{tpu_custom_call.1} parent=55 // pred_fallthru
          _
      $region56: #{tpu_custom_call.1} parent=5 // pred_fallthru
        _
      %p5582 = scmp.le.s32.totalorder 2, %s20
      // Predicated region
      $region61: #{tpu_custom_call.1} parent=5 // pred_check
        %p5583 = pneg %p5582
      $region62: #{tpu_custom_call.1} parent=5 // pred_check_branch
        %5585 = sbr.rel (%p5583) target = $region64
      $region63: #{tpu_custom_call.1} parent=5 // pred_region
        %s5586 = ssub.s32 %s20, 2
        // Predicated region
        $region65: #{tpu_custom_call.1} parent=63 // pred_check
          %p5587 = pneg %p243
        $region66: #{tpu_custom_call.1} parent=63 // pred_check_branch
          %5589 = sbr.rel (%p5587) target = $region68
        $region67: #{tpu_custom_call.1} parent=63 // pred_region
          %s5590 = sand.u32 %s228, 1
          %s5591 = scalar_lea.sflag [#allocation4], %s5590
          %s5592 = sand.u32 %s228, 1
          %s5593 = smul.addr %s5592, 2
          %s5594 = scalar_lea.vmem [#allocation3], %s5593
          %5595 = dma.done %s5591, 32
        $region68: #{tpu_custom_call.1} parent=63 // pred_fallthru
          _
      $region64: #{tpu_custom_call.1} parent=5 // pred_fallthru
        _
    $region6: #{tpu_custom_call.1} parent=1 // loop_footer
      %s24 = sadd.s32 1, %s20
    $region7: #{tpu_custom_call.1} parent=1 // loop_footer_branch
      %19 = sbr.rel target = $region3
    $region8: #{tpu_custom_call.1} parent=1 // loop_exit
      _
    %5596 = vsyncpa [#allocation4], 1
    %s5597 = scalar_lea.sflag [#allocation4], 1
    %5598 = vsyncpa %s5597, 1

</llo_original>
